<compile_context>
chip_gen: v6e
topology: v6e:2x2x1
jax: 0.10.0
libtpu: 0.0.40
codegen_flags: <defaults>
</compile_context>

<pallas_src>
import math
import functools

import jax
import jax.numpy as jnp
from jax import lax
from jax.experimental import pallas as pl
from jax.experimental.pallas import tpu as pltpu


# ----------------------------------------------------------------------------
# small helpers
# ----------------------------------------------------------------------------

def _rup(x, m):
    return ((x + m - 1) // m) * m


def _batch_tiling(B, max_tile=256):
    b8 = _rup(B, 8)
    b_tile = min(b8, max_tile)
    b_pad = _rup(b8, b_tile)
    return b_tile, b_pad


def _pad_axis(a, axis, new_size):
    pad = [(0, 0)] * a.ndim
    pad[axis] = (0, new_size - a.shape[axis])
    return jnp.pad(a, pad)


def _pad_gate_cols(w, H, Hp, n_gates=4):
    """Pad each of the n_gates gate blocks (width H) along the last axis to Hp."""
    parts = [_pad_axis(w[..., g * H:(g + 1) * H], -1, Hp) for g in range(n_gates)]
    return jnp.concatenate(parts, axis=-1)


def _vmem_spec():
    return pl.BlockSpec(memory_space=pltpu.MemorySpace.VMEM)


# ----------------------------------------------------------------------------
# Pallas kernels
# ----------------------------------------------------------------------------

def bilstm_linear_kernel(x_ref, lens_ref,
                         wih_ref, whh_f_ref, whh_b_ref, bih_ref,
                         wout_ref, bout_ref,
                         out_ref, xproj_ref, *, T, Hp):
    """Length-masked biLSTM + fused output linear.

    x_ref:    [T, Bt, Ep]   time-major embedded sequence tile
    lens_ref: [Bt, 1] int32 valid lengths
    wih_ref:  [Ep, 8*Hp]    concat(fwd, bwd) input weights (bias folded via bih_ref)
    whh_*:    [Hp, 4*Hp]    recurrent weights (gate order i,f,g,o as PyTorch)
    bih_ref:  [1, 8*Hp]     concat(fwd, bwd) gate biases (b_ih + b_hh)
    wout_ref: [2*Hp, NHp]   fused post-LSTM linear (rows 0:Hp -> h_f, Hp:2Hp -> h_b)
    bout_ref: [1, NHp]
    out_ref:  [Bt, NHp]     = concat(h_f, h_b) @ Wout + bout
    xproj_ref:[T, Bt, 8*Hp] VMEM scratch (precomputed input projections)
    """
    B = x_ref.shape[1]

    # --- hoisted loads (once, outside the recurrence) ---
    whh_f = whh_f_ref[...]
    whh_b = whh_b_ref[...]
    lens = lens_ref[...]                                      # [B, 1] int32

    # --- one big MXU matmul for the whole sequence, both directions ---
    x2d = x_ref[...].reshape(T * B, x_ref.shape[2])
    xp = (jnp.dot(x2d, wih_ref[...], preferred_element_type=jnp.float32)
          + bih_ref[...])
    xproj_ref[...] = xp.reshape(T, B, 8 * Hp)

    def cell(h, c, gates, m):
        i = jax.nn.sigmoid(gates[:, 0 * Hp:1 * Hp])
        f = jax.nn.sigmoid(gates[:, 1 * Hp:2 * Hp])
        g = jnp.tanh(gates[:, 2 * Hp:3 * Hp])
        o = jax.nn.sigmoid(gates[:, 3 * Hp:4 * Hp])
        c_new = f * c + i * g
        h_new = o * jnp.tanh(c_new)
        # masked update: padded steps leave state untouched (== pack_padded semantics)
        h = m * h_new + (1.0 - m) * h
        c = m * c_new + (1.0 - m) * c
        return h, c

    def body(t, carry):
        h_f, c_f, h_b, c_b = carry
        tb = T - 1 - t
        xp_f = xproj_ref[t]                                   # [B, 8Hp]
        xp_b = xproj_ref[tb]
        m_f = (t < lens).astype(jnp.float32)                  # [B, 1]
        m_b = (tb < lens).astype(jnp.float32)
        g_f = xp_f[:, :4 * Hp] + jnp.dot(h_f, whh_f,
                                         preferred_element_type=jnp.float32)
        g_b = xp_b[:, 4 * Hp:] + jnp.dot(h_b, whh_b,
                                         preferred_element_type=jnp.float32)
        h_f, c_f = cell(h_f, c_f, g_f, m_f)
        h_b, c_b = cell(h_b, c_b, g_b, m_b)
        return h_f, c_f, h_b, c_b

    zeros = jnp.zeros((B, Hp), jnp.float32)
    h_f, _, h_b, _ = lax.fori_loop(0, T, body, (zeros, zeros, zeros, zeros),
                                   unroll=True)

    # fused epilogue: concat(h_f, h_b) @ Wout + b, as split dot (no concat/lane shuffle)
    out_ref[...] = (jnp.dot(h_f, wout_ref[:Hp, :], preferred_element_type=jnp.float32)
                    + jnp.dot(h_b, wout_ref[Hp:, :], preferred_element_type=jnp.float32)
                    + bout_ref[...])


def bow_fuse_loss_kernel(code_emb_ref, name_part_ref, anc_ref, neg_ref,
                         w_tok_ref, b_tok_ref, w_fuse_ref, b_fuse_ref,
                         out_ref, *, margin):
    """BOWEncoder + fuse3 + cosine margin-ranking loss, fused into one epilogue.

    code_emb_ref:  [B, Tc, Ep]   embedded code tokens
    name_part_ref: [B, NHp]      = w_name(name_repr) + b_name (from LSTM kernel)
    anc/neg_ref:   [B, NHp]      = w_desc(desc_repr) + b_desc
    out_ref:       [1, 1]        scalar loss
    """
    # BOWEncoder hot path: max-pool over the full sequence, then tanh
    # (matches F.max_pool1d over seq_len; no length masking, like DeepCS).
    tok = jnp.tanh(jnp.max(code_emb_ref[...], axis=1))        # [B, Ep]

    # code_repr = fuse3(tanh(w_name(name_repr) + w_tok(tok_repr)))
    h = jnp.tanh(name_part_ref[...]
                 + jnp.dot(tok, w_tok_ref[...], preferred_element_type=jnp.float32)
                 + b_tok_ref[...])
    code = (jnp.dot(h, w_fuse_ref[...], preferred_element_type=jnp.float32)
            + b_fuse_ref[...])

    anc = anc_ref[...]
    neg = neg_ref[...]

    # F.cosine_similarity semantics: dot / (max(|a|,eps) * max(|b|,eps)),
    # implemented with rsqrt (EUP slot) as rsqrt(max(ss, eps^2)).
    eps2 = 1e-16
    inv_nc = lax.rsqrt(jnp.maximum(jnp.sum(code * code, axis=1, keepdims=True), eps2))
    inv_na = lax.rsqrt(jnp.maximum(jnp.sum(anc * anc, axis=1, keepdims=True), eps2))
    inv_nn = lax.rsqrt(jnp.maximum(jnp.sum(neg * neg, axis=1, keepdims=True), eps2))
    anchor_sim = jnp.sum(code * anc, axis=1, keepdims=True) * inv_nc * inv_na
    neg_sim = jnp.sum(code * neg, axis=1, keepdims=True) * inv_nc * inv_nn

    loss = jnp.mean(jnp.maximum(margin - anchor_sim + neg_sim, 1e-6))
    out_ref[...] = jnp.reshape(loss, (1, 1))


# ----------------------------------------------------------------------------
# pallas_call wrappers
# ----------------------------------------------------------------------------

def run_bilstm_encoder(x_tbe, lens_b1, lstm_p, wout, bout, *, b_tile):
    """x_tbe [T, B_pad, Ep] f32, lens_b1 [B_pad, 1] i32 -> [B_pad, NHp] f32."""
    T, B_pad, Ep = x_tbe.shape
    Hp = lstm_p["whh_f"].shape[0]
    NHp = wout.shape[1]
    kernel = functools.partial(bilstm_linear_kernel, T=T, Hp=Hp)
    return pl.pallas_call(
        kernel,
        out_shape=jax.ShapeDtypeStruct((B_pad, NHp), jnp.float32),
        grid_spec=pltpu.PrefetchScalarGridSpec(
            num_scalar_prefetch=0,
            grid=(B_pad // b_tile,),
            in_specs=[
                pl.BlockSpec((T, b_tile, Ep), lambda b: (0, b, 0)),
                pl.BlockSpec((b_tile, 1), lambda b: (b, 0)),
                pl.BlockSpec((Ep, 8 * Hp), lambda b: (0, 0)),
                pl.BlockSpec((Hp, 4 * Hp), lambda b: (0, 0)),
                pl.BlockSpec((Hp, 4 * Hp), lambda b: (0, 0)),
                pl.BlockSpec((1, 8 * Hp), lambda b: (0, 0)),
                pl.BlockSpec((2 * Hp, NHp), lambda b: (0, 0)),
                pl.BlockSpec((1, NHp), lambda b: (0, 0)),
            ],
            out_specs=pl.BlockSpec((b_tile, NHp), lambda b: (b, 0)),
            scratch_shapes=[pltpu.VMEM((T, b_tile, 8 * Hp), jnp.float32)],
        ),
        compiler_params=pltpu.CompilerParams(
            dimension_semantics=("parallel",),
            vmem_limit_bytes=48 * 1024 * 1024,   # safe on v5e/v6e (128 MiB) & v7x (64 MiB)
        ),
    )(x_tbe, lens_b1, lstm_p["wih_cat"], lstm_p["whh_f"], lstm_p["whh_b"],
      lstm_p["b_cat"], wout, bout)


def run_epilogue(code_emb, name_part, anc, neg, w_tok, b_tok, w_fuse, b_fuse, margin):
    kernel = functools.partial(bow_fuse_loss_kernel, margin=float(margin))
    loss = pl.pallas_call(
        kernel,
        out_shape=jax.ShapeDtypeStruct((1, 1), jnp.float32),
        in_specs=[_vmem_spec()] * 8,
        out_specs=_vmem_spec(),
    )(code_emb, name_part, anc, neg, w_tok, b_tok, w_fuse, b_fuse)
    return loss[0, 0]


# ----------------------------------------------------------------------------
# Parameter init (PyTorch-like init, stored pre-padded to 128-lane multiples)
# ----------------------------------------------------------------------------

def init_lstm_padded(key, E, H, Ep, Hp):
    k = 1.0 / math.sqrt(H)
    ks = jax.random.split(key, 8)
    u = lambda kk, shape: jax.random.uniform(kk, shape, jnp.float32, -k, k)

    def direction(k0, k1, k2, k3):
        wih = _pad_axis(_pad_gate_cols(u(k0, (E, 4 * H)), H, Hp), 0, Ep)   # [Ep, 4Hp]
        whh = _pad_axis(_pad_gate_cols(u(k1, (H, 4 * H)), H, Hp), 0, Hp)   # [Hp, 4Hp]
        b = _pad_gate_cols(u(k2, (1, 4 * H)) + u(k3, (1, 4 * H)), H, Hp)   # [1, 4Hp]
        return wih, whh, b

    wih_f, whh_f, b_f = direction(*ks[0:4])
    wih_b, whh_b, b_b = direction(*ks[4:8])
    return dict(wih_cat=jnp.concatenate([wih_f, wih_b], axis=1),   # [Ep, 8Hp]
                whh_f=whh_f, whh_b=whh_b,
                b_cat=jnp.concatenate([b_f, b_b], axis=1))         # [1, 8Hp]


def init_out_linear_padded(key, H, Hp, NH, NHp, custom_uniform=None):
    """w_name / w_desc: [2H, NH] with rows [0:H]=h_f, [H:2H]=h_b, padded per block."""
    fan_in = 2 * H
    if custom_uniform is not None:               # init_weights(): U(-0.1, 0.1), bias 0
        w = jax.random.uniform(key, (fan_in, NH), jnp.float32,
                               -custom_uniform, custom_uniform)
        b = jnp.zeros((1, NH), jnp.float32)
    else:                                        # PyTorch default-ish
        k = 1.0 / math.sqrt(fan_in)
        k1, k2 = jax.random.split(key)
        w = jax.random.uniform(k1, (fan_in, NH), jnp.float32, -k, k)
        b = jax.random.uniform(k2, (1, NH), jnp.float32, -k, k)
    w_p = jnp.concatenate([_pad_axis(w[:H], 0, Hp), _pad_axis(w[H:], 0, Hp)], axis=0)
    return _pad_axis(w_p, 1, NHp), _pad_axis(b, 1, NHp)            # [2Hp, NHp], [1, NHp]


def init_linear_padded(key, fan_in, fan_in_p, fan_out, fan_out_p, custom_uniform=None):
    if custom_uniform is not None:
        w = jax.random.uniform(key, (fan_in, fan_out), jnp.float32,
                               -custom_uniform, custom_uniform)
        b = jnp.zeros((1, fan_out), jnp.float32)
    else:
        k = 1.0 / math.sqrt(fan_in)
        k1, k2 = jax.random.split(key)
        w = jax.random.uniform(k1, (fan_in, fan_out), jnp.float32, -k, k)
        b = jax.random.uniform(k2, (1, fan_out), jnp.float32, -k, k)
    return (_pad_axis(_pad_axis(w, 0, fan_in_p), 1, fan_out_p),
            _pad_axis(b, 1, fan_out_p))


def init_params(key, cfg):
    n_words, E, H, NH = (cfg["n_words"], cfg["emb_size"],
                         cfg["lstm_dims"], cfg["n_hidden"])
    Ep, Hp, NHp = _rup(E, 128), _rup(H, 128), _rup(NH, 128)
    ks = jax.random.split(key, 10)

    def emb(k):   # nn.Embedding default: N(0,1); padded lanes are zero
        return _pad_axis(jax.random.normal(k, (n_words, E), jnp.float32), 1, Ep)

    params = {
        "emb_name": emb(ks[0]),
        "emb_code": emb(ks[1]),
        "emb_desc": emb(ks[2]),
        "lstm_name": init_lstm_padded(ks[3], E, H, Ep, Hp),
        "lstm_desc": init_lstm_padded(ks[4], E, H, Ep, Hp),
        "dims": dict(Ep=Ep, Hp=Hp, NHp=NHp),
    }
    params["w_name"], params["b_name"] = init_out_linear_padded(ks[5], H, Hp, NH, NHp,
                                                                custom_uniform=0.1)
    params["w_tok"], params["b_tok"] = init_linear_padded(ks[6], E, Ep, NH, NHp)
    params["w_desc"], params["b_desc"] = init_out_linear_padded(ks[7], H, Hp, NH, NHp)
    params["w_fuse"], params["b_fuse"] = init_linear_padded(ks[8], NH, NHp, NH, NHp,
                                                            custom_uniform=0.1)
    # NOTE: w_code is defined in __init__ but never used in forward() -> omitted.
    return params


# ----------------------------------------------------------------------------
# Forward pass (tiny glue in JAX, hot paths in 3 Pallas calls)
# ----------------------------------------------------------------------------

def _embed_time_major(emb_table_p, tokens, lens, b_pad):
    """tokens [B,T] -> time-major [T, B_pad, Ep] embeddings + [B_pad,1] i32 lens.

    Gather is done directly on transposed token ids so the large embedded slab is
    produced time-major without a separate full-slab transpose.
    """
    B, _ = tokens.shape
    tok_p = jnp.pad(tokens, ((0, b_pad - B), (0, 0)))
    x = jnp.take(emb_table_p, tok_p.T, axis=0)                      # [T, B_pad, Ep]
    lens_p = jnp.pad(lens.astype(jnp.int32), (0, b_pad - B)).reshape(b_pad, 1)
    return x, lens_p
    # TODO(synk): could move the gather in-kernel via PrefetchScalarGridSpec +
    # pl.Element row indexing to avoid materializing the embedded slab in HBM.


def joint_embeder_forward(params, cfg, name, name_len, code, code_len,
                          desc_anchor, desc_anchor_len, desc_neg, desc_neg_len):
    B = name.shape[0]

    # --- code_encoding: name biLSTM with fused w_name linear ---
    bt, bp = _batch_tiling(B)
    x_n, l_n = _embed_time_major(params["emb_name"], name, name_len, bp)
    name_part = run_bilstm_encoder(x_n, l_n, params["lstm_name"],
                                   params["w_name"], params["b_name"],
                                   b_tile=bt)[:B]                    # [B, NHp]

    # --- desc_encoding: anchor + negative stacked into ONE biLSTM call (shared
    #     lstm_desc weights), with fused w_desc linear ---
    Td = max(desc_anchor.shape[1], desc_neg.shape[1])
    da = jnp.pad(desc_anchor, ((0, 0), (0, Td - desc_anchor.shape[1])))
    dn = jnp.pad(desc_neg, ((0, 0), (0, Td - desc_neg.shape[1])))
    desc_tok = jnp.concatenate([da, dn], axis=0)                     # [2B, Td]
    desc_len = jnp.concatenate([desc_anchor_len, desc_neg_len], axis=0)
    dbt, dbp = _batch_tiling(2 * B)
    x_d, l_d = _embed_time_major(params["emb_desc"], desc_tok, desc_len, dbp)
    desc_all = run_bilstm_encoder(x_d, l_d, params["lstm_desc"],
                                  params["w_desc"], params["b_desc"],
                                  b_tile=dbt)                        # [2B_pad, NHp]
    desc_anchor_repr = desc_all[:B]
    desc_neg_repr = desc_all[B:2 * B]

    # --- BOW + fuse3 + cosine margin ranking loss, one fused epilogue kernel ---
    code_emb = jnp.take(params["emb_code"], code, axis=0)            # [B, Tc, Ep]
    return run_epilogue(code_emb, name_part, desc_anchor_repr, desc_neg_repr,
                        params["w_tok"], params["b_tok"],
                        params["w_fuse"], params["b_fuse"], cfg["margin"])


# ----------------------------------------------------------------------------

if __name__ == "__main__":
    cfg = dict(n_words=100, emb_size=32, lstm_dims=16, n_hidden=32, margin=0.6)
    B, T_name, T_code, T_desc = 2, 6, 8, 8

    key = jax.random.PRNGKey(0)
    params = init_params(key, cfg)

    kd = jax.random.split(jax.random.PRNGKey(1), 4)
    name = jax.random.randint(kd[0], (B, T_name), 1, cfg["n_words"], jnp.int32)
    code = jax.random.randint(kd[1], (B, T_code), 1, cfg["n_words"], jnp.int32)
    desc_anchor = jax.random.randint(kd[2], (B, T_desc), 1, cfg["n_words"], jnp.int32)
    desc_neg = jax.random.randint(kd[3], (B, T_desc), 1, cfg["n_words"], jnp.int32)
    name_len = jnp.array([6, 4], jnp.int32)
    code_len = jnp.array([8, 5], jnp.int32)
    desc_anchor_len = jnp.array([7, 8], jnp.int32)
    desc_neg_len = jnp.array([8, 6], jnp.int32)

    loss = joint_embeder_forward(params, cfg, name, name_len, code, code_len,
                                 desc_anchor, desc_anchor_len,
                                 desc_neg, desc_neg_len)
    jax.block_until_ready(loss)
    assert loss.shape == () and bool(jnp.isfinite(loss))
    print("KERNEL_OK")
</pallas_src>

<mosaic_0001>
module attributes {stable_mosaic.version = 11 : i64} {
  func.func @bilstm_linear_kernel(%arg0: i32, %arg1: memref<6x8x128xf32, #tpu.memory_space<vmem>>, %arg2: memref<8x1xi32, #tpu.memory_space<vmem>>, %arg3: memref<128x1024xf32, #tpu.memory_space<vmem>>, %arg4: memref<128x512xf32, #tpu.memory_space<vmem>>, %arg5: memref<128x512xf32, #tpu.memory_space<vmem>>, %arg6: memref<1x1024xf32, #tpu.memory_space<vmem>>, %arg7: memref<256x128xf32, #tpu.memory_space<vmem>>, %arg8: memref<1x128xf32, #tpu.memory_space<vmem>>, %arg9: memref<8x128xf32, #tpu.memory_space<vmem>>, %arg10: memref<6x8x1024xf32, #tpu.memory_space<vmem>>) attributes {dimension_semantics = [#tpu.dimension_semantics<parallel>], iteration_bounds = array<i64: 1>, scalar_prefetch = 0 : i64, scratch_operands = 1 : i64, tpu.core_type = #tpu.core_type<tc>, window_params = [{transform_indices = @transform_0, window_bounds = array<i64: 6, 8, 128>}, {transform_indices = @transform_1, window_bounds = array<i64: 8, 1>}, {pipeline_mode = #tpu.pipeline_mode<synchronous>, transform_indices = @transform_2, window_bounds = array<i64: 128, 1024>}, {pipeline_mode = #tpu.pipeline_mode<synchronous>, transform_indices = @transform_3, window_bounds = array<i64: 128, 512>}, {pipeline_mode = #tpu.pipeline_mode<synchronous>, transform_indices = @transform_4, window_bounds = array<i64: 128, 512>}, {pipeline_mode = #tpu.pipeline_mode<synchronous>, transform_indices = @transform_5, window_bounds = array<i64: 1, 1024>}, {pipeline_mode = #tpu.pipeline_mode<synchronous>, transform_indices = @transform_6, window_bounds = array<i64: 256, 128>}, {pipeline_mode = #tpu.pipeline_mode<synchronous>, transform_indices = @transform_7, window_bounds = array<i64: 1, 128>}, {transform_indices = @transform_8, window_bounds = array<i64: 8, 128>}]} {
    %c0 = arith.constant 0 : index
    %c0_0 = arith.constant 0 : index
    %0 = vector.load %arg4[%c0, %c0_0] : memref<128x512xf32, #tpu.memory_space<vmem>>, vector<128x512xf32>
    %c0_1 = arith.constant 0 : index
    %c0_2 = arith.constant 0 : index
    %1 = vector.load %arg5[%c0_1, %c0_2] : memref<128x512xf32, #tpu.memory_space<vmem>>, vector<128x512xf32>
    %c0_3 = arith.constant 0 : index
    %c0_4 = arith.constant 0 : index
    %2 = vector.load %arg2[%c0_3, %c0_4] : memref<8x1xi32, #tpu.memory_space<vmem>>, vector<8x1xi32>
    %c0_5 = arith.constant 0 : index
    %c0_6 = arith.constant 0 : index
    %c0_7 = arith.constant 0 : index
    %3 = vector.load %arg1[%c0_5, %c0_6, %c0_7] : memref<6x8x128xf32, #tpu.memory_space<vmem>>, vector<6x8x128xf32>
    %4 = vector.shape_cast %3 : vector<6x8x128xf32> to vector<48x128xf32>
    %c0_8 = arith.constant 0 : index
    %c0_9 = arith.constant 0 : index
    %5 = vector.load %arg3[%c0_8, %c0_9] : memref<128x1024xf32, #tpu.memory_space<vmem>>, vector<128x1024xf32>
    %cst = arith.constant dense<0.000000e+00> : vector<48x1024xf32>
    %6 = tpu.matmul %4, %5, %cst {dimension_numbers = #tpu.dot_dimension_numbers<[1], [0], [0], [1], [0, 0, 1, 1], [], []>} : vector<48x128xf32>, vector<128x1024xf32>, vector<48x1024xf32> -> vector<48x1024xf32>
    %c0_10 = arith.constant 0 : index
    %c0_11 = arith.constant 0 : index
    %7 = vector.load %arg6[%c0_10, %c0_11] : memref<1x1024xf32, #tpu.memory_space<vmem>>, vector<1x1024xf32>
    %8 = vector.broadcast %7 : vector<1x1024xf32> to vector<48x1024xf32>
    %9 = arith.addf %6, %8 : vector<48x1024xf32>
    %10 = vector.shape_cast %9 : vector<48x1024xf32> to vector<6x8x1024xf32>
    %c0_12 = arith.constant 0 : index
    %c0_13 = arith.constant 0 : index
    %c0_14 = arith.constant 0 : index
    %11 = vector.load %arg10[%c0_12, %c0_13, %c0_14] : memref<6x8x1024xf32, #tpu.memory_space<vmem>>, vector<6x8x1024xf32>
    tpu.vector_store %arg10[%c0_12, %c0_13, %c0_14], %10 {strides = array<i32>} : memref<6x8x1024xf32, #tpu.memory_space<vmem>>, vector<6x8x1024xf32>,
    %cst_15 = arith.constant 0.000000e+00 : f32
    %12 = vector.broadcast %cst_15 : f32 to vector<8x128xf32>
    %c0_i32 = arith.constant 0 : i32
    %c5_i32 = arith.constant 5 : i32
    %13 = arith.subi %c5_i32, %c0_i32 : i32
    %14 = arith.index_cast %c0_i32 : i32 to index
    %c0_16 = arith.constant 0 : index
    %c0_17 = arith.constant 0 : index
    %15 = vector.load %arg10[%14, %c0_16, %c0_17] : memref<6x8x1024xf32, #tpu.memory_space<vmem>>, vector<1x8x1024xf32>
    %16 = vector.shape_cast %15 : vector<1x8x1024xf32> to vector<8x1024xf32>
    %17 = arith.index_cast %13 : i32 to index
    %c0_18 = arith.constant 0 : index
    %c0_19 = arith.constant 0 : index
    %18 = vector.load %arg10[%17, %c0_18, %c0_19] : memref<6x8x1024xf32, #tpu.memory_space<vmem>>, vector<1x8x1024xf32>
    %19 = vector.shape_cast %18 : vector<1x8x1024xf32> to vector<8x1024xf32>
    %20 = vector.broadcast %c0_i32 : i32 to vector<8x1xi32>
    %21 = arith.cmpi slt, %20, %2 : vector<8x1xi32>
    %22 = arith.extui %21 : vector<8x1xi1> to vector<8x1xi32>
    %23 = arith.sitofp %22 : vector<8x1xi32> to vector<8x1xf32>
    %24 = vector.broadcast %13 : i32 to vector<8x1xi32>
    %25 = arith.cmpi slt, %24, %2 : vector<8x1xi32>
    %26 = arith.extui %25 : vector<8x1xi1> to vector<8x1xi32>
    %27 = arith.sitofp %26 : vector<8x1xi32> to vector<8x1xf32>
    %28 = vector.extract_strided_slice %16 {offsets = [0, 0], sizes = [8, 512], strides = [1, 1]} : vector<8x1024xf32> to vector<8x512xf32>
    %cst_20 = arith.constant dense<0.000000e+00> : vector<8x512xf32>
    %29 = tpu.matmul %12, %0, %cst_20 {dimension_numbers = #tpu.dot_dimension_numbers<[1], [0], [0], [1], [0, 0, 1, 1], [], []>} : vector<8x128xf32>, vector<128x512xf32>, vector<8x512xf32> -> vector<8x512xf32>
    %30 = arith.addf %28, %29 : vector<8x512xf32>
    %31 = vector.extract_strided_slice %19 {offsets = [0, 512], sizes = [8, 512], strides = [1, 1]} : vector<8x1024xf32> to vector<8x512xf32>
    %cst_21 = arith.constant dense<0.000000e+00> : vector<8x512xf32>
    %32 = tpu.matmul %12, %1, %cst_21 {dimension_numbers = #tpu.dot_dimension_numbers<[1], [0], [0], [1], [0, 0, 1, 1], [], []>} : vector<8x128xf32>, vector<128x512xf32>, vector<8x512xf32> -> vector<8x512xf32>
    %33 = arith.addf %31, %32 : vector<8x512xf32>
    %34 = vector.extract_strided_slice %30 {offsets = [0, 0], sizes = [8, 128], strides = [1, 1]} : vector<8x512xf32> to vector<8x128xf32>
    %35 = arith.negf %34 : vector<8x128xf32>
    %36 = math.exp %35 : vector<8x128xf32>
    %cst_22 = arith.constant 1.000000e+00 : f32
    %37 = vector.broadcast %cst_22 : f32 to vector<8x128xf32>
    %38 = arith.addf %37, %36 : vector<8x128xf32>
    %39 = arith.divf %37, %38 : vector<8x128xf32>
    %40 = vector.extract_strided_slice %30 {offsets = [0, 128], sizes = [8, 128], strides = [1, 1]} : vector<8x512xf32> to vector<8x128xf32>
    %41 = arith.negf %40 : vector<8x128xf32>
    %42 = math.exp %41 : vector<8x128xf32>
    %cst_23 = arith.constant 1.000000e+00 : f32
    %43 = vector.broadcast %cst_23 : f32 to vector<8x128xf32>
    %44 = arith.addf %43, %42 : vector<8x128xf32>
    %45 = arith.divf %43, %44 : vector<8x128xf32>
    %46 = vector.extract_strided_slice %30 {offsets = [0, 256], sizes = [8, 128], strides = [1, 1]} : vector<8x512xf32> to vector<8x128xf32>
    %47 = math.tanh %46 : vector<8x128xf32>
    %48 = vector.extract_strided_slice %30 {offsets = [0, 384], sizes = [8, 128], strides = [1, 1]} : vector<8x512xf32> to vector<8x128xf32>
    %49 = arith.negf %48 : vector<8x128xf32>
    %50 = math.exp %49 : vector<8x128xf32>
    %cst_24 = arith.constant 1.000000e+00 : f32
    %51 = vector.broadcast %cst_24 : f32 to vector<8x128xf32>
    %52 = arith.addf %51, %50 : vector<8x128xf32>
    %53 = arith.divf %51, %52 : vector<8x128xf32>
    %54 = arith.mulf %45, %12 : vector<8x128xf32>
    %55 = arith.mulf %39, %47 : vector<8x128xf32>
    %56 = arith.addf %54, %55 : vector<8x128xf32>
    %57 = math.tanh %56 : vector<8x128xf32>
    %58 = arith.mulf %53, %57 : vector<8x128xf32>
    %59 = vector.broadcast %23 : vector<8x1xf32> to vector<8x128xf32>
    %60 = arith.mulf %59, %58 : vector<8x128xf32>
    %cst_25 = arith.constant 1.000000e+00 : f32
    %61 = vector.broadcast %cst_25 : f32 to vector<8x1xf32>
    %62 = arith.subf %61, %23 : vector<8x1xf32>
    %63 = vector.broadcast %62 : vector<8x1xf32> to vector<8x128xf32>
    %64 = arith.mulf %63, %12 : vector<8x128xf32>
    %65 = arith.addf %60, %64 : vector<8x128xf32>
    %66 = vector.broadcast %23 : vector<8x1xf32> to vector<8x128xf32>
    %67 = arith.mulf %66, %56 : vector<8x128xf32>
    %cst_26 = arith.constant 1.000000e+00 : f32
    %68 = vector.broadcast %cst_26 : f32 to vector<8x1xf32>
    %69 = arith.subf %68, %23 : vector<8x1xf32>
    %70 = vector.broadcast %69 : vector<8x1xf32> to vector<8x128xf32>
    %71 = arith.mulf %70, %12 : vector<8x128xf32>
    %72 = arith.addf %67, %71 : vector<8x128xf32>
    %73 = vector.extract_strided_slice %33 {offsets = [0, 0], sizes = [8, 128], strides = [1, 1]} : vector<8x512xf32> to vector<8x128xf32>
    %74 = arith.negf %73 : vector<8x128xf32>
    %75 = math.exp %74 : vector<8x128xf32>
    %cst_27 = arith.constant 1.000000e+00 : f32
    %76 = vector.broadcast %cst_27 : f32 to vector<8x128xf32>
    %77 = arith.addf %76, %75 : vector<8x128xf32>
    %78 = arith.divf %76, %77 : vector<8x128xf32>
    %79 = vector.extract_strided_slice %33 {offsets = [0, 128], sizes = [8, 128], strides = [1, 1]} : vector<8x512xf32> to vector<8x128xf32>
    %80 = arith.negf %79 : vector<8x128xf32>
    %81 = math.exp %80 : vector<8x128xf32>
    %cst_28 = arith.constant 1.000000e+00 : f32
    %82 = vector.broadcast %cst_28 : f32 to vector<8x128xf32>
    %83 = arith.addf %82, %81 : vector<8x128xf32>
    %84 = arith.divf %82, %83 : vector<8x128xf32>
    %85 = vector.extract_strided_slice %33 {offsets = [0, 256], sizes = [8, 128], strides = [1, 1]} : vector<8x512xf32> to vector<8x128xf32>
    %86 = math.tanh %85 : vector<8x128xf32>
    %87 = vector.extract_strided_slice %33 {offsets = [0, 384], sizes = [8, 128], strides = [1, 1]} : vector<8x512xf32> to vector<8x128xf32>
    %88 = arith.negf %87 : vector<8x128xf32>
    %89 = math.exp %88 : vector<8x128xf32>
    %cst_29 = arith.constant 1.000000e+00 : f32
    %90 = vector.broadcast %cst_29 : f32 to vector<8x128xf32>
    %91 = arith.addf %90, %89 : vector<8x128xf32>
    %92 = arith.divf %90, %91 : vector<8x128xf32>
    %93 = arith.mulf %84, %12 : vector<8x128xf32>
    %94 = arith.mulf %78, %86 : vector<8x128xf32>
    %95 = arith.addf %93, %94 : vector<8x128xf32>
    %96 = math.tanh %95 : vector<8x128xf32>
    %97 = arith.mulf %92, %96 : vector<8x128xf32>
    %98 = vector.broadcast %27 : vector<8x1xf32> to vector<8x128xf32>
    %99 = arith.mulf %98, %97 : vector<8x128xf32>
    %cst_30 = arith.constant 1.000000e+00 : f32
    %100 = vector.broadcast %cst_30 : f32 to vector<8x1xf32>
    %101 = arith.subf %100, %27 : vector<8x1xf32>
    %102 = vector.broadcast %101 : vector<8x1xf32> to vector<8x128xf32>
    %103 = arith.mulf %102, %12 : vector<8x128xf32>
    %104 = arith.addf %99, %103 : vector<8x128xf32>
    %105 = vector.broadcast %27 : vector<8x1xf32> to vector<8x128xf32>
    %106 = arith.mulf %105, %95 : vector<8x128xf32>
    %cst_31 = arith.constant 1.000000e+00 : f32
    %107 = vector.broadcast %cst_31 : f32 to vector<8x1xf32>
    %108 = arith.subf %107, %27 : vector<8x1xf32>
    %109 = vector.broadcast %108 : vector<8x1xf32> to vector<8x128xf32>
    %110 = arith.mulf %109, %12 : vector<8x128xf32>
    %111 = arith.addf %106, %110 : vector<8x128xf32>
    %c1_i32 = arith.constant 1 : i32
    %c5_i32_32 = arith.constant 5 : i32
    %112 = arith.subi %c5_i32_32, %c1_i32 : i32
    %113 = arith.index_cast %c1_i32 : i32 to index
    %c0_33 = arith.constant 0 : index
    %c0_34 = arith.constant 0 : index
    %114 = vector.load %arg10[%113, %c0_33, %c0_34] : memref<6x8x1024xf32, #tpu.memory_space<vmem>>, vector<1x8x1024xf32>
    %115 = vector.shape_cast %114 : vector<1x8x1024xf32> to vector<8x1024xf32>
    %116 = arith.index_cast %112 : i32 to index
    %c0_35 = arith.constant 0 : index
    %c0_36 = arith.constant 0 : index
    %117 = vector.load %arg10[%116, %c0_35, %c0_36] : memref<6x8x1024xf32, #tpu.memory_space<vmem>>, vector<1x8x1024xf32>
    %118 = vector.shape_cast %117 : vector<1x8x1024xf32> to vector<8x1024xf32>
    %119 = vector.broadcast %c1_i32 : i32 to vector<8x1xi32>
    %120 = arith.cmpi slt, %119, %2 : vector<8x1xi32>
    %121 = arith.extui %120 : vector<8x1xi1> to vector<8x1xi32>
    %122 = arith.sitofp %121 : vector<8x1xi32> to vector<8x1xf32>
    %123 = vector.broadcast %112 : i32 to vector<8x1xi32>
    %124 = arith.cmpi slt, %123, %2 : vector<8x1xi32>
    %125 = arith.extui %124 : vector<8x1xi1> to vector<8x1xi32>
    %126 = arith.sitofp %125 : vector<8x1xi32> to vector<8x1xf32>
    %127 = vector.extract_strided_slice %115 {offsets = [0, 0], sizes = [8, 512], strides = [1, 1]} : vector<8x1024xf32> to vector<8x512xf32>
    %cst_37 = arith.constant dense<0.000000e+00> : vector<8x512xf32>
    %128 = tpu.matmul %65, %0, %cst_37 {dimension_numbers = #tpu.dot_dimension_numbers<[1], [0], [0], [1], [0, 0, 1, 1], [], []>} : vector<8x128xf32>, vector<128x512xf32>, vector<8x512xf32> -> vector<8x512xf32>
    %129 = arith.addf %127, %128 : vector<8x512xf32>
    %130 = vector.extract_strided_slice %118 {offsets = [0, 512], sizes = [8, 512], strides = [1, 1]} : vector<8x1024xf32> to vector<8x512xf32>
    %cst_38 = arith.constant dense<0.000000e+00> : vector<8x512xf32>
    %131 = tpu.matmul %104, %1, %cst_38 {dimension_numbers = #tpu.dot_dimension_numbers<[1], [0], [0], [1], [0, 0, 1, 1], [], []>} : vector<8x128xf32>, vector<128x512xf32>, vector<8x512xf32> -> vector<8x512xf32>
    %132 = arith.addf %130, %131 : vector<8x512xf32>
    %133 = vector.extract_strided_slice %129 {offsets = [0, 0], sizes = [8, 128], strides = [1, 1]} : vector<8x512xf32> to vector<8x128xf32>
    %134 = arith.negf %133 : vector<8x128xf32>
    %135 = math.exp %134 : vector<8x128xf32>
    %cst_39 = arith.constant 1.000000e+00 : f32
    %136 = vector.broadcast %cst_39 : f32 to vector<8x128xf32>
    %137 = arith.addf %136, %135 : vector<8x128xf32>
    %138 = arith.divf %136, %137 : vector<8x128xf32>
    %139 = vector.extract_strided_slice %129 {offsets = [0, 128], sizes = [8, 128], strides = [1, 1]} : vector<8x512xf32> to vector<8x128xf32>
    %140 = arith.negf %139 : vector<8x128xf32>
    %141 = math.exp %140 : vector<8x128xf32>
    %cst_40 = arith.constant 1.000000e+00 : f32
    %142 = vector.broadcast %cst_40 : f32 to vector<8x128xf32>
    %143 = arith.addf %142, %141 : vector<8x128xf32>
    %144 = arith.divf %142, %143 : vector<8x128xf32>
    %145 = vector.extract_strided_slice %129 {offsets = [0, 256], sizes = [8, 128], strides = [1, 1]} : vector<8x512xf32> to vector<8x128xf32>
    %146 = math.tanh %145 : vector<8x128xf32>
    %147 = vector.extract_strided_slice %129 {offsets = [0, 384], sizes = [8, 128], strides = [1, 1]} : vector<8x512xf32> to vector<8x128xf32>
    %148 = arith.negf %147 : vector<8x128xf32>
    %149 = math.exp %148 : vector<8x128xf32>
    %cst_41 = arith.constant 1.000000e+00 : f32
    %150 = vector.broadcast %cst_41 : f32 to vector<8x128xf32>
    %151 = arith.addf %150, %149 : vector<8x128xf32>
    %152 = arith.divf %150, %151 : vector<8x128xf32>
    %153 = arith.mulf %144, %72 : vector<8x128xf32>
    %154 = arith.mulf %138, %146 : vector<8x128xf32>
    %155 = arith.addf %153, %154 : vector<8x128xf32>
    %156 = math.tanh %155 : vector<8x128xf32>
    %157 = arith.mulf %152, %156 : vector<8x128xf32>
    %158 = vector.broadcast %122 : vector<8x1xf32> to vector<8x128xf32>
    %159 = arith.mulf %158, %157 : vector<8x128xf32>
    %cst_42 = arith.constant 1.000000e+00 : f32
    %160 = vector.broadcast %cst_42 : f32 to vector<8x1xf32>
    %161 = arith.subf %160, %122 : vector<8x1xf32>
    %162 = vector.broadcast %161 : vector<8x1xf32> to vector<8x128xf32>
    %163 = arith.mulf %162, %65 : vector<8x128xf32>
    %164 = arith.addf %159, %163 : vector<8x128xf32>
    %165 = vector.broadcast %122 : vector<8x1xf32> to vector<8x128xf32>
    %166 = arith.mulf %165, %155 : vector<8x128xf32>
    %cst_43 = arith.constant 1.000000e+00 : f32
    %167 = vector.broadcast %cst_43 : f32 to vector<8x1xf32>
    %168 = arith.subf %167, %122 : vector<8x1xf32>
    %169 = vector.broadcast %168 : vector<8x1xf32> to vector<8x128xf32>
    %170 = arith.mulf %169, %72 : vector<8x128xf32>
    %171 = arith.addf %166, %170 : vector<8x128xf32>
    %172 = vector.extract_strided_slice %132 {offsets = [0, 0], sizes = [8, 128], strides = [1, 1]} : vector<8x512xf32> to vector<8x128xf32>
    %173 = arith.negf %172 : vector<8x128xf32>
    %174 = math.exp %173 : vector<8x128xf32>
    %cst_44 = arith.constant 1.000000e+00 : f32
    %175 = vector.broadcast %cst_44 : f32 to vector<8x128xf32>
    %176 = arith.addf %175, %174 : vector<8x128xf32>
    %177 = arith.divf %175, %176 : vector<8x128xf32>
    %178 = vector.extract_strided_slice %132 {offsets = [0, 128], sizes = [8, 128], strides = [1, 1]} : vector<8x512xf32> to vector<8x128xf32>
    %179 = arith.negf %178 : vector<8x128xf32>
    %180 = math.exp %179 : vector<8x128xf32>
    %cst_45 = arith.constant 1.000000e+00 : f32
    %181 = vector.broadcast %cst_45 : f32 to vector<8x128xf32>
    %182 = arith.addf %181, %180 : vector<8x128xf32>
    %183 = arith.divf %181, %182 : vector<8x128xf32>
    %184 = vector.extract_strided_slice %132 {offsets = [0, 256], sizes = [8, 128], strides = [1, 1]} : vector<8x512xf32> to vector<8x128xf32>
    %185 = math.tanh %184 : vector<8x128xf32>
    %186 = vector.extract_strided_slice %132 {offsets = [0, 384], sizes = [8, 128], strides = [1, 1]} : vector<8x512xf32> to vector<8x128xf32>
    %187 = arith.negf %186 : vector<8x128xf32>
    %188 = math.exp %187 : vector<8x128xf32>
    %cst_46 = arith.constant 1.000000e+00 : f32
    %189 = vector.broadcast %cst_46 : f32 to vector<8x128xf32>
    %190 = arith.addf %189, %188 : vector<8x128xf32>
    %191 = arith.divf %189, %190 : vector<8x128xf32>
    %192 = arith.mulf %183, %111 : vector<8x128xf32>
    %193 = arith.mulf %177, %185 : vector<8x128xf32>
    %194 = arith.addf %192, %193 : vector<8x128xf32>
    %195 = math.tanh %194 : vector<8x128xf32>
    %196 = arith.mulf %191, %195 : vector<8x128xf32>
    %197 = vector.broadcast %126 : vector<8x1xf32> to vector<8x128xf32>
    %198 = arith.mulf %197, %196 : vector<8x128xf32>
    %cst_47 = arith.constant 1.000000e+00 : f32
    %199 = vector.broadcast %cst_47 : f32 to vector<8x1xf32>
    %200 = arith.subf %199, %126 : vector<8x1xf32>
    %201 = vector.broadcast %200 : vector<8x1xf32> to vector<8x128xf32>
    %202 = arith.mulf %201, %104 : vector<8x128xf32>
    %203 = arith.addf %198, %202 : vector<8x128xf32>
    %204 = vector.broadcast %126 : vector<8x1xf32> to vector<8x128xf32>
    %205 = arith.mulf %204, %194 : vector<8x128xf32>
    %cst_48 = arith.constant 1.000000e+00 : f32
    %206 = vector.broadcast %cst_48 : f32 to vector<8x1xf32>
    %207 = arith.subf %206, %126 : vector<8x1xf32>
    %208 = vector.broadcast %207 : vector<8x1xf32> to vector<8x128xf32>
    %209 = arith.mulf %208, %111 : vector<8x128xf32>
    %210 = arith.addf %205, %209 : vector<8x128xf32>
    %c2_i32 = arith.constant 2 : i32
    %c5_i32_49 = arith.constant 5 : i32
    %211 = arith.subi %c5_i32_49, %c2_i32 : i32
    %212 = arith.index_cast %c2_i32 : i32 to index
    %c0_50 = arith.constant 0 : index
    %c0_51 = arith.constant 0 : index
    %213 = vector.load %arg10[%212, %c0_50, %c0_51] : memref<6x8x1024xf32, #tpu.memory_space<vmem>>, vector<1x8x1024xf32>
    %214 = vector.shape_cast %213 : vector<1x8x1024xf32> to vector<8x1024xf32>
    %215 = arith.index_cast %211 : i32 to index
    %c0_52 = arith.constant 0 : index
    %c0_53 = arith.constant 0 : index
    %216 = vector.load %arg10[%215, %c0_52, %c0_53] : memref<6x8x1024xf32, #tpu.memory_space<vmem>>, vector<1x8x1024xf32>
    %217 = vector.shape_cast %216 : vector<1x8x1024xf32> to vector<8x1024xf32>
    %218 = vector.broadcast %c2_i32 : i32 to vector<8x1xi32>
    %219 = arith.cmpi slt, %218, %2 : vector<8x1xi32>
    %220 = arith.extui %219 : vector<8x1xi1> to vector<8x1xi32>
    %221 = arith.sitofp %220 : vector<8x1xi32> to vector<8x1xf32>
    %222 = vector.broadcast %211 : i32 to vector<8x1xi32>
    %223 = arith.cmpi slt, %222, %2 : vector<8x1xi32>
    %224 = arith.extui %223 : vector<8x1xi1> to vector<8x1xi32>
    %225 = arith.sitofp %224 : vector<8x1xi32> to vector<8x1xf32>
    %226 = vector.extract_strided_slice %214 {offsets = [0, 0], sizes = [8, 512], strides = [1, 1]} : vector<8x1024xf32> to vector<8x512xf32>
    %cst_54 = arith.constant dense<0.000000e+00> : vector<8x512xf32>
    %227 = tpu.matmul %164, %0, %cst_54 {dimension_numbers = #tpu.dot_dimension_numbers<[1], [0], [0], [1], [0, 0, 1, 1], [], []>} : vector<8x128xf32>, vector<128x512xf32>, vector<8x512xf32> -> vector<8x512xf32>
    %228 = arith.addf %226, %227 : vector<8x512xf32>
    %229 = vector.extract_strided_slice %217 {offsets = [0, 512], sizes = [8, 512], strides = [1, 1]} : vector<8x1024xf32> to vector<8x512xf32>
    %cst_55 = arith.constant dense<0.000000e+00> : vector<8x512xf32>
    %230 = tpu.matmul %203, %1, %cst_55 {dimension_numbers = #tpu.dot_dimension_numbers<[1], [0], [0], [1], [0, 0, 1, 1], [], []>} : vector<8x128xf32>, vector<128x512xf32>, vector<8x512xf32> -> vector<8x512xf32>
    %231 = arith.addf %229, %230 : vector<8x512xf32>
    %232 = vector.extract_strided_slice %228 {offsets = [0, 0], sizes = [8, 128], strides = [1, 1]} : vector<8x512xf32> to vector<8x128xf32>
    %233 = arith.negf %232 : vector<8x128xf32>
    %234 = math.exp %233 : vector<8x128xf32>
    %cst_56 = arith.constant 1.000000e+00 : f32
    %235 = vector.broadcast %cst_56 : f32 to vector<8x128xf32>
    %236 = arith.addf %235, %234 : vector<8x128xf32>
    %237 = arith.divf %235, %236 : vector<8x128xf32>
    %238 = vector.extract_strided_slice %228 {offsets = [0, 128], sizes = [8, 128], strides = [1, 1]} : vector<8x512xf32> to vector<8x128xf32>
    %239 = arith.negf %238 : vector<8x128xf32>
    %240 = math.exp %239 : vector<8x128xf32>
    %cst_57 = arith.constant 1.000000e+00 : f32
    %241 = vector.broadcast %cst_57 : f32 to vector<8x128xf32>
    %242 = arith.addf %241, %240 : vector<8x128xf32>
    %243 = arith.divf %241, %242 : vector<8x128xf32>
    %244 = vector.extract_strided_slice %228 {offsets = [0, 256], sizes = [8, 128], strides = [1, 1]} : vector<8x512xf32> to vector<8x128xf32>
    %245 = math.tanh %244 : vector<8x128xf32>
    %246 = vector.extract_strided_slice %228 {offsets = [0, 384], sizes = [8, 128], strides = [1, 1]} : vector<8x512xf32> to vector<8x128xf32>
    %247 = arith.negf %246 : vector<8x128xf32>
    %248 = math.exp %247 : vector<8x128xf32>
    %cst_58 = arith.constant 1.000000e+00 : f32
    %249 = vector.broadcast %cst_58 : f32 to vector<8x128xf32>
    %250 = arith.addf %249, %248 : vector<8x128xf32>
    %251 = arith.divf %249, %250 : vector<8x128xf32>
    %252 = arith.mulf %243, %171 : vector<8x128xf32>
    %253 = arith.mulf %237, %245 : vector<8x128xf32>
    %254 = arith.addf %252, %253 : vector<8x128xf32>
    %255 = math.tanh %254 : vector<8x128xf32>
    %256 = arith.mulf %251, %255 : vector<8x128xf32>
    %257 = vector.broadcast %221 : vector<8x1xf32> to vector<8x128xf32>
    %258 = arith.mulf %257, %256 : vector<8x128xf32>
    %cst_59 = arith.constant 1.000000e+00 : f32
    %259 = vector.broadcast %cst_59 : f32 to vector<8x1xf32>
    %260 = arith.subf %259, %221 : vector<8x1xf32>
    %261 = vector.broadcast %260 : vector<8x1xf32> to vector<8x128xf32>
    %262 = arith.mulf %261, %164 : vector<8x128xf32>
    %263 = arith.addf %258, %262 : vector<8x128xf32>
    %264 = vector.broadcast %221 : vector<8x1xf32> to vector<8x128xf32>
    %265 = arith.mulf %264, %254 : vector<8x128xf32>
    %cst_60 = arith.constant 1.000000e+00 : f32
    %266 = vector.broadcast %cst_60 : f32 to vector<8x1xf32>
    %267 = arith.subf %266, %221 : vector<8x1xf32>
    %268 = vector.broadcast %267 : vector<8x1xf32> to vector<8x128xf32>
    %269 = arith.mulf %268, %171 : vector<8x128xf32>
    %270 = arith.addf %265, %269 : vector<8x128xf32>
    %271 = vector.extract_strided_slice %231 {offsets = [0, 0], sizes = [8, 128], strides = [1, 1]} : vector<8x512xf32> to vector<8x128xf32>
    %272 = arith.negf %271 : vector<8x128xf32>
    %273 = math.exp %272 : vector<8x128xf32>
    %cst_61 = arith.constant 1.000000e+00 : f32
    %274 = vector.broadcast %cst_61 : f32 to vector<8x128xf32>
    %275 = arith.addf %274, %273 : vector<8x128xf32>
    %276 = arith.divf %274, %275 : vector<8x128xf32>
    %277 = vector.extract_strided_slice %231 {offsets = [0, 128], sizes = [8, 128], strides = [1, 1]} : vector<8x512xf32> to vector<8x128xf32>
    %278 = arith.negf %277 : vector<8x128xf32>
    %279 = math.exp %278 : vector<8x128xf32>
    %cst_62 = arith.constant 1.000000e+00 : f32
    %280 = vector.broadcast %cst_62 : f32 to vector<8x128xf32>
    %281 = arith.addf %280, %279 : vector<8x128xf32>
    %282 = arith.divf %280, %281 : vector<8x128xf32>
    %283 = vector.extract_strided_slice %231 {offsets = [0, 256], sizes = [8, 128], strides = [1, 1]} : vector<8x512xf32> to vector<8x128xf32>
    %284 = math.tanh %283 : vector<8x128xf32>
    %285 = vector.extract_strided_slice %231 {offsets = [0, 384], sizes = [8, 128], strides = [1, 1]} : vector<8x512xf32> to vector<8x128xf32>
    %286 = arith.negf %285 : vector<8x128xf32>
    %287 = math.exp %286 : vector<8x128xf32>
    %cst_63 = arith.constant 1.000000e+00 : f32
    %288 = vector.broadcast %cst_63 : f32 to vector<8x128xf32>
    %289 = arith.addf %288, %287 : vector<8x128xf32>
    %290 = arith.divf %288, %289 : vector<8x128xf32>
    %291 = arith.mulf %282, %210 : vector<8x128xf32>
    %292 = arith.mulf %276, %284 : vector<8x128xf32>
    %293 = arith.addf %291, %292 : vector<8x128xf32>
    %294 = math.tanh %293 : vector<8x128xf32>
    %295 = arith.mulf %290, %294 : vector<8x128xf32>
    %296 = vector.broadcast %225 : vector<8x1xf32> to vector<8x128xf32>
    %297 = arith.mulf %296, %295 : vector<8x128xf32>
    %cst_64 = arith.constant 1.000000e+00 : f32
    %298 = vector.broadcast %cst_64 : f32 to vector<8x1xf32>
    %299 = arith.subf %298, %225 : vector<8x1xf32>
    %300 = vector.broadcast %299 : vector<8x1xf32> to vector<8x128xf32>
    %301 = arith.mulf %300, %203 : vector<8x128xf32>
    %302 = arith.addf %297, %301 : vector<8x128xf32>
    %303 = vector.broadcast %225 : vector<8x1xf32> to vector<8x128xf32>
    %304 = arith.mulf %303, %293 : vector<8x128xf32>
    %cst_65 = arith.constant 1.000000e+00 : f32
    %305 = vector.broadcast %cst_65 : f32 to vector<8x1xf32>
    %306 = arith.subf %305, %225 : vector<8x1xf32>
    %307 = vector.broadcast %306 : vector<8x1xf32> to vector<8x128xf32>
    %308 = arith.mulf %307, %210 : vector<8x128xf32>
    %309 = arith.addf %304, %308 : vector<8x128xf32>
    %c3_i32 = arith.constant 3 : i32
    %c5_i32_66 = arith.constant 5 : i32
    %310 = arith.subi %c5_i32_66, %c3_i32 : i32
    %311 = arith.index_cast %c3_i32 : i32 to index
    %c0_67 = arith.constant 0 : index
    %c0_68 = arith.constant 0 : index
    %312 = vector.load %arg10[%311, %c0_67, %c0_68] : memref<6x8x1024xf32, #tpu.memory_space<vmem>>, vector<1x8x1024xf32>
    %313 = vector.shape_cast %312 : vector<1x8x1024xf32> to vector<8x1024xf32>
    %314 = arith.index_cast %310 : i32 to index
    %c0_69 = arith.constant 0 : index
    %c0_70 = arith.constant 0 : index
    %315 = vector.load %arg10[%314, %c0_69, %c0_70] : memref<6x8x1024xf32, #tpu.memory_space<vmem>>, vector<1x8x1024xf32>
    %316 = vector.shape_cast %315 : vector<1x8x1024xf32> to vector<8x1024xf32>
    %317 = vector.broadcast %c3_i32 : i32 to vector<8x1xi32>
    %318 = arith.cmpi slt, %317, %2 : vector<8x1xi32>
    %319 = arith.extui %318 : vector<8x1xi1> to vector<8x1xi32>
    %320 = arith.sitofp %319 : vector<8x1xi32> to vector<8x1xf32>
    %321 = vector.broadcast %310 : i32 to vector<8x1xi32>
    %322 = arith.cmpi slt, %321, %2 : vector<8x1xi32>
    %323 = arith.extui %322 : vector<8x1xi1> to vector<8x1xi32>
    %324 = arith.sitofp %323 : vector<8x1xi32> to vector<8x1xf32>
    %325 = vector.extract_strided_slice %313 {offsets = [0, 0], sizes = [8, 512], strides = [1, 1]} : vector<8x1024xf32> to vector<8x512xf32>
    %cst_71 = arith.constant dense<0.000000e+00> : vector<8x512xf32>
    %326 = tpu.matmul %263, %0, %cst_71 {dimension_numbers = #tpu.dot_dimension_numbers<[1], [0], [0], [1], [0, 0, 1, 1], [], []>} : vector<8x128xf32>, vector<128x512xf32>, vector<8x512xf32> -> vector<8x512xf32>
    %327 = arith.addf %325, %326 : vector<8x512xf32>
    %328 = vector.extract_strided_slice %316 {offsets = [0, 512], sizes = [8, 512], strides = [1, 1]} : vector<8x1024xf32> to vector<8x512xf32>
    %cst_72 = arith.constant dense<0.000000e+00> : vector<8x512xf32>
    %329 = tpu.matmul %302, %1, %cst_72 {dimension_numbers = #tpu.dot_dimension_numbers<[1], [0], [0], [1], [0, 0, 1, 1], [], []>} : vector<8x128xf32>, vector<128x512xf32>, vector<8x512xf32> -> vector<8x512xf32>
    %330 = arith.addf %328, %329 : vector<8x512xf32>
    %331 = vector.extract_strided_slice %327 {offsets = [0, 0], sizes = [8, 128], strides = [1, 1]} : vector<8x512xf32> to vector<8x128xf32>
    %332 = arith.negf %331 : vector<8x128xf32>
    %333 = math.exp %332 : vector<8x128xf32>
    %cst_73 = arith.constant 1.000000e+00 : f32
    %334 = vector.broadcast %cst_73 : f32 to vector<8x128xf32>
    %335 = arith.addf %334, %333 : vector<8x128xf32>
    %336 = arith.divf %334, %335 : vector<8x128xf32>
    %337 = vector.extract_strided_slice %327 {offsets = [0, 128], sizes = [8, 128], strides = [1, 1]} : vector<8x512xf32> to vector<8x128xf32>
    %338 = arith.negf %337 : vector<8x128xf32>
    %339 = math.exp %338 : vector<8x128xf32>
    %cst_74 = arith.constant 1.000000e+00 : f32
    %340 = vector.broadcast %cst_74 : f32 to vector<8x128xf32>
    %341 = arith.addf %340, %339 : vector<8x128xf32>
    %342 = arith.divf %340, %341 : vector<8x128xf32>
    %343 = vector.extract_strided_slice %327 {offsets = [0, 256], sizes = [8, 128], strides = [1, 1]} : vector<8x512xf32> to vector<8x128xf32>
    %344 = math.tanh %343 : vector<8x128xf32>
    %345 = vector.extract_strided_slice %327 {offsets = [0, 384], sizes = [8, 128], strides = [1, 1]} : vector<8x512xf32> to vector<8x128xf32>
    %346 = arith.negf %345 : vector<8x128xf32>
    %347 = math.exp %346 : vector<8x128xf32>
    %cst_75 = arith.constant 1.000000e+00 : f32
    %348 = vector.broadcast %cst_75 : f32 to vector<8x128xf32>
    %349 = arith.addf %348, %347 : vector<8x128xf32>
    %350 = arith.divf %348, %349 : vector<8x128xf32>
    %351 = arith.mulf %342, %270 : vector<8x128xf32>
    %352 = arith.mulf %336, %344 : vector<8x128xf32>
    %353 = arith.addf %351, %352 : vector<8x128xf32>
    %354 = math.tanh %353 : vector<8x128xf32>
    %355 = arith.mulf %350, %354 : vector<8x128xf32>
    %356 = vector.broadcast %320 : vector<8x1xf32> to vector<8x128xf32>
    %357 = arith.mulf %356, %355 : vector<8x128xf32>
    %cst_76 = arith.constant 1.000000e+00 : f32
    %358 = vector.broadcast %cst_76 : f32 to vector<8x1xf32>
    %359 = arith.subf %358, %320 : vector<8x1xf32>
    %360 = vector.broadcast %359 : vector<8x1xf32> to vector<8x128xf32>
    %361 = arith.mulf %360, %263 : vector<8x128xf32>
    %362 = arith.addf %357, %361 : vector<8x128xf32>
    %363 = vector.broadcast %320 : vector<8x1xf32> to vector<8x128xf32>
    %364 = arith.mulf %363, %353 : vector<8x128xf32>
    %cst_77 = arith.constant 1.000000e+00 : f32
    %365 = vector.broadcast %cst_77 : f32 to vector<8x1xf32>
    %366 = arith.subf %365, %320 : vector<8x1xf32>
    %367 = vector.broadcast %366 : vector<8x1xf32> to vector<8x128xf32>
    %368 = arith.mulf %367, %270 : vector<8x128xf32>
    %369 = arith.addf %364, %368 : vector<8x128xf32>
    %370 = vector.extract_strided_slice %330 {offsets = [0, 0], sizes = [8, 128], strides = [1, 1]} : vector<8x512xf32> to vector<8x128xf32>
    %371 = arith.negf %370 : vector<8x128xf32>
    %372 = math.exp %371 : vector<8x128xf32>
    %cst_78 = arith.constant 1.000000e+00 : f32
    %373 = vector.broadcast %cst_78 : f32 to vector<8x128xf32>
    %374 = arith.addf %373, %372 : vector<8x128xf32>
    %375 = arith.divf %373, %374 : vector<8x128xf32>
    %376 = vector.extract_strided_slice %330 {offsets = [0, 128], sizes = [8, 128], strides = [1, 1]} : vector<8x512xf32> to vector<8x128xf32>
    %377 = arith.negf %376 : vector<8x128xf32>
    %378 = math.exp %377 : vector<8x128xf32>
    %cst_79 = arith.constant 1.000000e+00 : f32
    %379 = vector.broadcast %cst_79 : f32 to vector<8x128xf32>
    %380 = arith.addf %379, %378 : vector<8x128xf32>
    %381 = arith.divf %379, %380 : vector<8x128xf32>
    %382 = vector.extract_strided_slice %330 {offsets = [0, 256], sizes = [8, 128], strides = [1, 1]} : vector<8x512xf32> to vector<8x128xf32>
    %383 = math.tanh %382 : vector<8x128xf32>
    %384 = vector.extract_strided_slice %330 {offsets = [0, 384], sizes = [8, 128], strides = [1, 1]} : vector<8x512xf32> to vector<8x128xf32>
    %385 = arith.negf %384 : vector<8x128xf32>
    %386 = math.exp %385 : vector<8x128xf32>
    %cst_80 = arith.constant 1.000000e+00 : f32
    %387 = vector.broadcast %cst_80 : f32 to vector<8x128xf32>
    %388 = arith.addf %387, %386 : vector<8x128xf32>
    %389 = arith.divf %387, %388 : vector<8x128xf32>
    %390 = arith.mulf %381, %309 : vector<8x128xf32>
    %391 = arith.mulf %375, %383 : vector<8x128xf32>
    %392 = arith.addf %390, %391 : vector<8x128xf32>
    %393 = math.tanh %392 : vector<8x128xf32>
    %394 = arith.mulf %389, %393 : vector<8x128xf32>
    %395 = vector.broadcast %324 : vector<8x1xf32> to vector<8x128xf32>
    %396 = arith.mulf %395, %394 : vector<8x128xf32>
    %cst_81 = arith.constant 1.000000e+00 : f32
    %397 = vector.broadcast %cst_81 : f32 to vector<8x1xf32>
    %398 = arith.subf %397, %324 : vector<8x1xf32>
    %399 = vector.broadcast %398 : vector<8x1xf32> to vector<8x128xf32>
    %400 = arith.mulf %399, %302 : vector<8x128xf32>
    %401 = arith.addf %396, %400 : vector<8x128xf32>
    %402 = vector.broadcast %324 : vector<8x1xf32> to vector<8x128xf32>
    %403 = arith.mulf %402, %392 : vector<8x128xf32>
    %cst_82 = arith.constant 1.000000e+00 : f32
    %404 = vector.broadcast %cst_82 : f32 to vector<8x1xf32>
    %405 = arith.subf %404, %324 : vector<8x1xf32>
    %406 = vector.broadcast %405 : vector<8x1xf32> to vector<8x128xf32>
    %407 = arith.mulf %406, %309 : vector<8x128xf32>
    %408 = arith.addf %403, %407 : vector<8x128xf32>
    %c4_i32 = arith.constant 4 : i32
    %c5_i32_83 = arith.constant 5 : i32
    %409 = arith.subi %c5_i32_83, %c4_i32 : i32
    %410 = arith.index_cast %c4_i32 : i32 to index
    %c0_84 = arith.constant 0 : index
    %c0_85 = arith.constant 0 : index
    %411 = vector.load %arg10[%410, %c0_84, %c0_85] : memref<6x8x1024xf32, #tpu.memory_space<vmem>>, vector<1x8x1024xf32>
    %412 = vector.shape_cast %411 : vector<1x8x1024xf32> to vector<8x1024xf32>
    %413 = arith.index_cast %409 : i32 to index
    %c0_86 = arith.constant 0 : index
    %c0_87 = arith.constant 0 : index
    %414 = vector.load %arg10[%413, %c0_86, %c0_87] : memref<6x8x1024xf32, #tpu.memory_space<vmem>>, vector<1x8x1024xf32>
    %415 = vector.shape_cast %414 : vector<1x8x1024xf32> to vector<8x1024xf32>
    %416 = vector.broadcast %c4_i32 : i32 to vector<8x1xi32>
    %417 = arith.cmpi slt, %416, %2 : vector<8x1xi32>
    %418 = arith.extui %417 : vector<8x1xi1> to vector<8x1xi32>
    %419 = arith.sitofp %418 : vector<8x1xi32> to vector<8x1xf32>
    %420 = vector.broadcast %409 : i32 to vector<8x1xi32>
    %421 = arith.cmpi slt, %420, %2 : vector<8x1xi32>
    %422 = arith.extui %421 : vector<8x1xi1> to vector<8x1xi32>
    %423 = arith.sitofp %422 : vector<8x1xi32> to vector<8x1xf32>
    %424 = vector.extract_strided_slice %412 {offsets = [0, 0], sizes = [8, 512], strides = [1, 1]} : vector<8x1024xf32> to vector<8x512xf32>
    %cst_88 = arith.constant dense<0.000000e+00> : vector<8x512xf32>
    %425 = tpu.matmul %362, %0, %cst_88 {dimension_numbers = #tpu.dot_dimension_numbers<[1], [0], [0], [1], [0, 0, 1, 1], [], []>} : vector<8x128xf32>, vector<128x512xf32>, vector<8x512xf32> -> vector<8x512xf32>
    %426 = arith.addf %424, %425 : vector<8x512xf32>
    %427 = vector.extract_strided_slice %415 {offsets = [0, 512], sizes = [8, 512], strides = [1, 1]} : vector<8x1024xf32> to vector<8x512xf32>
    %cst_89 = arith.constant dense<0.000000e+00> : vector<8x512xf32>
    %428 = tpu.matmul %401, %1, %cst_89 {dimension_numbers = #tpu.dot_dimension_numbers<[1], [0], [0], [1], [0, 0, 1, 1], [], []>} : vector<8x128xf32>, vector<128x512xf32>, vector<8x512xf32> -> vector<8x512xf32>
    %429 = arith.addf %427, %428 : vector<8x512xf32>
    %430 = vector.extract_strided_slice %426 {offsets = [0, 0], sizes = [8, 128], strides = [1, 1]} : vector<8x512xf32> to vector<8x128xf32>
    %431 = arith.negf %430 : vector<8x128xf32>
    %432 = math.exp %431 : vector<8x128xf32>
    %cst_90 = arith.constant 1.000000e+00 : f32
    %433 = vector.broadcast %cst_90 : f32 to vector<8x128xf32>
    %434 = arith.addf %433, %432 : vector<8x128xf32>
    %435 = arith.divf %433, %434 : vector<8x128xf32>
    %436 = vector.extract_strided_slice %426 {offsets = [0, 128], sizes = [8, 128], strides = [1, 1]} : vector<8x512xf32> to vector<8x128xf32>
    %437 = arith.negf %436 : vector<8x128xf32>
    %438 = math.exp %437 : vector<8x128xf32>
    %cst_91 = arith.constant 1.000000e+00 : f32
    %439 = vector.broadcast %cst_91 : f32 to vector<8x128xf32>
    %440 = arith.addf %439, %438 : vector<8x128xf32>
    %441 = arith.divf %439, %440 : vector<8x128xf32>
    %442 = vector.extract_strided_slice %426 {offsets = [0, 256], sizes = [8, 128], strides = [1, 1]} : vector<8x512xf32> to vector<8x128xf32>
    %443 = math.tanh %442 : vector<8x128xf32>
    %444 = vector.extract_strided_slice %426 {offsets = [0, 384], sizes = [8, 128], strides = [1, 1]} : vector<8x512xf32> to vector<8x128xf32>
    %445 = arith.negf %444 : vector<8x128xf32>
    %446 = math.exp %445 : vector<8x128xf32>
    %cst_92 = arith.constant 1.000000e+00 : f32
    %447 = vector.broadcast %cst_92 : f32 to vector<8x128xf32>
    %448 = arith.addf %447, %446 : vector<8x128xf32>
    %449 = arith.divf %447, %448 : vector<8x128xf32>
    %450 = arith.mulf %441, %369 : vector<8x128xf32>
    %451 = arith.mulf %435, %443 : vector<8x128xf32>
    %452 = arith.addf %450, %451 : vector<8x128xf32>
    %453 = math.tanh %452 : vector<8x128xf32>
    %454 = arith.mulf %449, %453 : vector<8x128xf32>
    %455 = vector.broadcast %419 : vector<8x1xf32> to vector<8x128xf32>
    %456 = arith.mulf %455, %454 : vector<8x128xf32>
    %cst_93 = arith.constant 1.000000e+00 : f32
    %457 = vector.broadcast %cst_93 : f32 to vector<8x1xf32>
    %458 = arith.subf %457, %419 : vector<8x1xf32>
    %459 = vector.broadcast %458 : vector<8x1xf32> to vector<8x128xf32>
    %460 = arith.mulf %459, %362 : vector<8x128xf32>
    %461 = arith.addf %456, %460 : vector<8x128xf32>
    %462 = vector.broadcast %419 : vector<8x1xf32> to vector<8x128xf32>
    %463 = arith.mulf %462, %452 : vector<8x128xf32>
    %cst_94 = arith.constant 1.000000e+00 : f32
    %464 = vector.broadcast %cst_94 : f32 to vector<8x1xf32>
    %465 = arith.subf %464, %419 : vector<8x1xf32>
    %466 = vector.broadcast %465 : vector<8x1xf32> to vector<8x128xf32>
    %467 = arith.mulf %466, %369 : vector<8x128xf32>
    %468 = arith.addf %463, %467 : vector<8x128xf32>
    %469 = vector.extract_strided_slice %429 {offsets = [0, 0], sizes = [8, 128], strides = [1, 1]} : vector<8x512xf32> to vector<8x128xf32>
    %470 = arith.negf %469 : vector<8x128xf32>
    %471 = math.exp %470 : vector<8x128xf32>
    %cst_95 = arith.constant 1.000000e+00 : f32
    %472 = vector.broadcast %cst_95 : f32 to vector<8x128xf32>
    %473 = arith.addf %472, %471 : vector<8x128xf32>
    %474 = arith.divf %472, %473 : vector<8x128xf32>
    %475 = vector.extract_strided_slice %429 {offsets = [0, 128], sizes = [8, 128], strides = [1, 1]} : vector<8x512xf32> to vector<8x128xf32>
    %476 = arith.negf %475 : vector<8x128xf32>
    %477 = math.exp %476 : vector<8x128xf32>
    %cst_96 = arith.constant 1.000000e+00 : f32
    %478 = vector.broadcast %cst_96 : f32 to vector<8x128xf32>
    %479 = arith.addf %478, %477 : vector<8x128xf32>
    %480 = arith.divf %478, %479 : vector<8x128xf32>
    %481 = vector.extract_strided_slice %429 {offsets = [0, 256], sizes = [8, 128], strides = [1, 1]} : vector<8x512xf32> to vector<8x128xf32>
    %482 = math.tanh %481 : vector<8x128xf32>
    %483 = vector.extract_strided_slice %429 {offsets = [0, 384], sizes = [8, 128], strides = [1, 1]} : vector<8x512xf32> to vector<8x128xf32>
    %484 = arith.negf %483 : vector<8x128xf32>
    %485 = math.exp %484 : vector<8x128xf32>
    %cst_97 = arith.constant 1.000000e+00 : f32
    %486 = vector.broadcast %cst_97 : f32 to vector<8x128xf32>
    %487 = arith.addf %486, %485 : vector<8x128xf32>
    %488 = arith.divf %486, %487 : vector<8x128xf32>
    %489 = arith.mulf %480, %408 : vector<8x128xf32>
    %490 = arith.mulf %474, %482 : vector<8x128xf32>
    %491 = arith.addf %489, %490 : vector<8x128xf32>
    %492 = math.tanh %491 : vector<8x128xf32>
    %493 = arith.mulf %488, %492 : vector<8x128xf32>
    %494 = vector.broadcast %423 : vector<8x1xf32> to vector<8x128xf32>
    %495 = arith.mulf %494, %493 : vector<8x128xf32>
    %cst_98 = arith.constant 1.000000e+00 : f32
    %496 = vector.broadcast %cst_98 : f32 to vector<8x1xf32>
    %497 = arith.subf %496, %423 : vector<8x1xf32>
    %498 = vector.broadcast %497 : vector<8x1xf32> to vector<8x128xf32>
    %499 = arith.mulf %498, %401 : vector<8x128xf32>
    %500 = arith.addf %495, %499 : vector<8x128xf32>
    %501 = vector.broadcast %423 : vector<8x1xf32> to vector<8x128xf32>
    %502 = arith.mulf %501, %491 : vector<8x128xf32>
    %cst_99 = arith.constant 1.000000e+00 : f32
    %503 = vector.broadcast %cst_99 : f32 to vector<8x1xf32>
    %504 = arith.subf %503, %423 : vector<8x1xf32>
    %505 = vector.broadcast %504 : vector<8x1xf32> to vector<8x128xf32>
    %506 = arith.mulf %505, %408 : vector<8x128xf32>
    %507 = arith.addf %502, %506 : vector<8x128xf32>
    %c5_i32_100 = arith.constant 5 : i32
    %c5_i32_101 = arith.constant 5 : i32
    %508 = arith.subi %c5_i32_101, %c5_i32_100 : i32
    %509 = arith.index_cast %c5_i32_100 : i32 to index
    %c0_102 = arith.constant 0 : index
    %c0_103 = arith.constant 0 : index
    %510 = vector.load %arg10[%509, %c0_102, %c0_103] : memref<6x8x1024xf32, #tpu.memory_space<vmem>>, vector<1x8x1024xf32>
    %511 = vector.shape_cast %510 : vector<1x8x1024xf32> to vector<8x1024xf32>
    %512 = arith.index_cast %508 : i32 to index
    %c0_104 = arith.constant 0 : index
    %c0_105 = arith.constant 0 : index
    %513 = vector.load %arg10[%512, %c0_104, %c0_105] : memref<6x8x1024xf32, #tpu.memory_space<vmem>>, vector<1x8x1024xf32>
    %514 = vector.shape_cast %513 : vector<1x8x1024xf32> to vector<8x1024xf32>
    %515 = vector.broadcast %c5_i32_100 : i32 to vector<8x1xi32>
    %516 = arith.cmpi slt, %515, %2 : vector<8x1xi32>
    %517 = arith.extui %516 : vector<8x1xi1> to vector<8x1xi32>
    %518 = arith.sitofp %517 : vector<8x1xi32> to vector<8x1xf32>
    %519 = vector.broadcast %508 : i32 to vector<8x1xi32>
    %520 = arith.cmpi slt, %519, %2 : vector<8x1xi32>
    %521 = arith.extui %520 : vector<8x1xi1> to vector<8x1xi32>
    %522 = arith.sitofp %521 : vector<8x1xi32> to vector<8x1xf32>
    %523 = vector.extract_strided_slice %511 {offsets = [0, 0], sizes = [8, 512], strides = [1, 1]} : vector<8x1024xf32> to vector<8x512xf32>
    %cst_106 = arith.constant dense<0.000000e+00> : vector<8x512xf32>
    %524 = tpu.matmul %461, %0, %cst_106 {dimension_numbers = #tpu.dot_dimension_numbers<[1], [0], [0], [1], [0, 0, 1, 1], [], []>} : vector<8x128xf32>, vector<128x512xf32>, vector<8x512xf32> -> vector<8x512xf32>
    %525 = arith.addf %523, %524 : vector<8x512xf32>
    %526 = vector.extract_strided_slice %514 {offsets = [0, 512], sizes = [8, 512], strides = [1, 1]} : vector<8x1024xf32> to vector<8x512xf32>
    %cst_107 = arith.constant dense<0.000000e+00> : vector<8x512xf32>
    %527 = tpu.matmul %500, %1, %cst_107 {dimension_numbers = #tpu.dot_dimension_numbers<[1], [0], [0], [1], [0, 0, 1, 1], [], []>} : vector<8x128xf32>, vector<128x512xf32>, vector<8x512xf32> -> vector<8x512xf32>
    %528 = arith.addf %526, %527 : vector<8x512xf32>
    %529 = vector.extract_strided_slice %525 {offsets = [0, 0], sizes = [8, 128], strides = [1, 1]} : vector<8x512xf32> to vector<8x128xf32>
    %530 = arith.negf %529 : vector<8x128xf32>
    %531 = math.exp %530 : vector<8x128xf32>
    %cst_108 = arith.constant 1.000000e+00 : f32
    %532 = vector.broadcast %cst_108 : f32 to vector<8x128xf32>
    %533 = arith.addf %532, %531 : vector<8x128xf32>
    %534 = arith.divf %532, %533 : vector<8x128xf32>
    %535 = vector.extract_strided_slice %525 {offsets = [0, 128], sizes = [8, 128], strides = [1, 1]} : vector<8x512xf32> to vector<8x128xf32>
    %536 = arith.negf %535 : vector<8x128xf32>
    %537 = math.exp %536 : vector<8x128xf32>
    %cst_109 = arith.constant 1.000000e+00 : f32
    %538 = vector.broadcast %cst_109 : f32 to vector<8x128xf32>
    %539 = arith.addf %538, %537 : vector<8x128xf32>
    %540 = arith.divf %538, %539 : vector<8x128xf32>
    %541 = vector.extract_strided_slice %525 {offsets = [0, 256], sizes = [8, 128], strides = [1, 1]} : vector<8x512xf32> to vector<8x128xf32>
    %542 = math.tanh %541 : vector<8x128xf32>
    %543 = vector.extract_strided_slice %525 {offsets = [0, 384], sizes = [8, 128], strides = [1, 1]} : vector<8x512xf32> to vector<8x128xf32>
    %544 = arith.negf %543 : vector<8x128xf32>
    %545 = math.exp %544 : vector<8x128xf32>
    %cst_110 = arith.constant 1.000000e+00 : f32
    %546 = vector.broadcast %cst_110 : f32 to vector<8x128xf32>
    %547 = arith.addf %546, %545 : vector<8x128xf32>
    %548 = arith.divf %546, %547 : vector<8x128xf32>
    %549 = arith.mulf %540, %468 : vector<8x128xf32>
    %550 = arith.mulf %534, %542 : vector<8x128xf32>
    %551 = arith.addf %549, %550 : vector<8x128xf32>
    %552 = math.tanh %551 : vector<8x128xf32>
    %553 = arith.mulf %548, %552 : vector<8x128xf32>
    %554 = vector.broadcast %518 : vector<8x1xf32> to vector<8x128xf32>
    %555 = arith.mulf %554, %553 : vector<8x128xf32>
    %cst_111 = arith.constant 1.000000e+00 : f32
    %556 = vector.broadcast %cst_111 : f32 to vector<8x1xf32>
    %557 = arith.subf %556, %518 : vector<8x1xf32>
    %558 = vector.broadcast %557 : vector<8x1xf32> to vector<8x128xf32>
    %559 = arith.mulf %558, %461 : vector<8x128xf32>
    %560 = arith.addf %555, %559 : vector<8x128xf32>
    %561 = vector.broadcast %518 : vector<8x1xf32> to vector<8x128xf32>
    %562 = arith.mulf %561, %551 : vector<8x128xf32>
    %cst_112 = arith.constant 1.000000e+00 : f32
    %563 = vector.broadcast %cst_112 : f32 to vector<8x1xf32>
    %564 = arith.subf %563, %518 : vector<8x1xf32>
    %565 = vector.broadcast %564 : vector<8x1xf32> to vector<8x128xf32>
    %566 = arith.mulf %565, %468 : vector<8x128xf32>
    %567 = arith.addf %562, %566 : vector<8x128xf32>
    %568 = vector.extract_strided_slice %528 {offsets = [0, 0], sizes = [8, 128], strides = [1, 1]} : vector<8x512xf32> to vector<8x128xf32>
    %569 = arith.negf %568 : vector<8x128xf32>
    %570 = math.exp %569 : vector<8x128xf32>
    %cst_113 = arith.constant 1.000000e+00 : f32
    %571 = vector.broadcast %cst_113 : f32 to vector<8x128xf32>
    %572 = arith.addf %571, %570 : vector<8x128xf32>
    %573 = arith.divf %571, %572 : vector<8x128xf32>
    %574 = vector.extract_strided_slice %528 {offsets = [0, 128], sizes = [8, 128], strides = [1, 1]} : vector<8x512xf32> to vector<8x128xf32>
    %575 = arith.negf %574 : vector<8x128xf32>
    %576 = math.exp %575 : vector<8x128xf32>
    %cst_114 = arith.constant 1.000000e+00 : f32
    %577 = vector.broadcast %cst_114 : f32 to vector<8x128xf32>
    %578 = arith.addf %577, %576 : vector<8x128xf32>
    %579 = arith.divf %577, %578 : vector<8x128xf32>
    %580 = vector.extract_strided_slice %528 {offsets = [0, 256], sizes = [8, 128], strides = [1, 1]} : vector<8x512xf32> to vector<8x128xf32>
    %581 = math.tanh %580 : vector<8x128xf32>
    %582 = vector.extract_strided_slice %528 {offsets = [0, 384], sizes = [8, 128], strides = [1, 1]} : vector<8x512xf32> to vector<8x128xf32>
    %583 = arith.negf %582 : vector<8x128xf32>
    %584 = math.exp %583 : vector<8x128xf32>
    %cst_115 = arith.constant 1.000000e+00 : f32
    %585 = vector.broadcast %cst_115 : f32 to vector<8x128xf32>
    %586 = arith.addf %585, %584 : vector<8x128xf32>
    %587 = arith.divf %585, %586 : vector<8x128xf32>
    %588 = arith.mulf %579, %507 : vector<8x128xf32>
    %589 = arith.mulf %573, %581 : vector<8x128xf32>
    %590 = arith.addf %588, %589 : vector<8x128xf32>
    %591 = math.tanh %590 : vector<8x128xf32>
    %592 = arith.mulf %587, %591 : vector<8x128xf32>
    %593 = vector.broadcast %522 : vector<8x1xf32> to vector<8x128xf32>
    %594 = arith.mulf %593, %592 : vector<8x128xf32>
    %cst_116 = arith.constant 1.000000e+00 : f32
    %595 = vector.broadcast %cst_116 : f32 to vector<8x1xf32>
    %596 = arith.subf %595, %522 : vector<8x1xf32>
    %597 = vector.broadcast %596 : vector<8x1xf32> to vector<8x128xf32>
    %598 = arith.mulf %597, %500 : vector<8x128xf32>
    %599 = arith.addf %594, %598 : vector<8x128xf32>
    %600 = vector.broadcast %522 : vector<8x1xf32> to vector<8x128xf32>
    %601 = arith.mulf %600, %590 : vector<8x128xf32>
    %cst_117 = arith.constant 1.000000e+00 : f32
    %602 = vector.broadcast %cst_117 : f32 to vector<8x1xf32>
    %603 = arith.subf %602, %522 : vector<8x1xf32>
    %604 = vector.broadcast %603 : vector<8x1xf32> to vector<8x128xf32>
    %605 = arith.mulf %604, %507 : vector<8x128xf32>
    %606 = arith.addf %601, %605 : vector<8x128xf32>
    %c6_i32 = arith.constant 6 : i32
    %c0_118 = arith.constant 0 : index
    %c0_119 = arith.constant 0 : index
    %607 = vector.load %arg7[%c0_118, %c0_119] : memref<256x128xf32, #tpu.memory_space<vmem>>, vector<128x128xf32>
    %cst_120 = arith.constant dense<0.000000e+00> : vector<8x128xf32>
    %608 = tpu.matmul %560, %607, %cst_120 {dimension_numbers = #tpu.dot_dimension_numbers<[1], [0], [0], [1], [0, 0, 1, 1], [], []>} : vector<8x128xf32>, vector<128x128xf32>, vector<8x128xf32> -> vector<8x128xf32>
    %c128 = arith.constant 128 : index
    %c0_121 = arith.constant 0 : index
    %609 = vector.load %arg7[%c128, %c0_121] : memref<256x128xf32, #tpu.memory_space<vmem>>, vector<128x128xf32>
    %cst_122 = arith.constant dense<0.000000e+00> : vector<8x128xf32>
    %610 = tpu.matmul %599, %609, %cst_122 {dimension_numbers = #tpu.dot_dimension_numbers<[1], [0], [0], [1], [0, 0, 1, 1], [], []>} : vector<8x128xf32>, vector<128x128xf32>, vector<8x128xf32> -> vector<8x128xf32>
    %611 = arith.addf %608, %610 : vector<8x128xf32>
    %c0_123 = arith.constant 0 : index
    %c0_124 = arith.constant 0 : index
    %612 = vector.load %arg8[%c0_123, %c0_124] : memref<1x128xf32, #tpu.memory_space<vmem>>, vector<1x128xf32>
    %613 = vector.broadcast %612 : vector<1x128xf32> to vector<8x128xf32>
    %614 = arith.addf %611, %613 : vector<8x128xf32>
    %c0_125 = arith.constant 0 : index
    %c0_126 = arith.constant 0 : index
    %615 = vector.load %arg9[%c0_125, %c0_126] : memref<8x128xf32, #tpu.memory_space<vmem>>, vector<8x128xf32>
    tpu.vector_store %arg9[%c0_125, %c0_126], %614 {strides = array<i32>} : memref<8x128xf32, #tpu.memory_space<vmem>>, vector<8x128xf32>,
    return
  }
  func.func @transform_0(%arg0: i32) -> (i32, i32, i32) {
    %c0_i32 = arith.constant 0 : i32
    %c0_i32_0 = arith.constant 0 : i32
    %c0_i32_1 = arith.constant 0 : i32
    return %c0_i32, %arg0, %c0_i32_0 : i32, i32, i32
  }
  func.func @transform_1(%arg0: i32) -> (i32, i32) {
    %c0_i32 = arith.constant 0 : i32
    %c0_i32_0 = arith.constant 0 : i32
    return %arg0, %c0_i32 : i32, i32
  }
  func.func @transform_2(%arg0: i32) -> (i32, i32) {
    %c0_i32 = arith.constant 0 : i32
    %c0_i32_0 = arith.constant 0 : i32
    %c0_i32_1 = arith.constant 0 : i32
    return %c0_i32, %c0_i32_0 : i32, i32
  }
  func.func @transform_3(%arg0: i32) -> (i32, i32) {
    %c0_i32 = arith.constant 0 : i32
    %c0_i32_0 = arith.constant 0 : i32
    %c0_i32_1 = arith.constant 0 : i32
    return %c0_i32, %c0_i32_0 : i32, i32
  }
  func.func @transform_4(%arg0: i32) -> (i32, i32) {
    %c0_i32 = arith.constant 0 : i32
    %c0_i32_0 = arith.constant 0 : i32
    %c0_i32_1 = arith.constant 0 : i32
    return %c0_i32, %c0_i32_0 : i32, i32
  }
  func.func @transform_5(%arg0: i32) -> (i32, i32) {
    %c0_i32 = arith.constant 0 : i32
    %c0_i32_0 = arith.constant 0 : i32
    %c0_i32_1 = arith.constant 0 : i32
    return %c0_i32, %c0_i32_0 : i32, i32
  }
  func.func @transform_6(%arg0: i32) -> (i32, i32) {
    %c0_i32 = arith.constant 0 : i32
    %c0_i32_0 = arith.constant 0 : i32
    %c0_i32_1 = arith.constant 0 : i32
    return %c0_i32, %c0_i32_0 : i32, i32
  }
  func.func @transform_7(%arg0: i32) -> (i32, i32) {
    %c0_i32 = arith.constant 0 : i32
    %c0_i32_0 = arith.constant 0 : i32
    %c0_i32_1 = arith.constant 0 : i32
    return %c0_i32, %c0_i32_0 : i32, i32
  }
  func.func @transform_8(%arg0: i32) -> (i32, i32) {
    %c0_i32 = arith.constant 0 : i32
    %c0_i32_0 = arith.constant 0 : i32
    return %arg0, %c0_i32 : i32, i32
  }
}

</mosaic_0001>

<llo_original>
// kernel: tpu_custom_call.1
$region0: #{tpu_custom_call.1}
  #allocation0 [shape = 'u32[]', space=smem, size = 0x4, offset = 0x4, fixed_abs, tag = 'smem constant byte address 0x4 - core index']
  #allocation1 [shape = 'u32[144,128]{1,0:T(1,128)}', space=vmem, size = 0x12000, scoped, tag = 'internal scratch']
  #allocation2 [shape = 'f32[6,8,1024]{2,1,0:T(8,128)}', space=vmem, size = 0x30000, scoped, tag = 'scratch operand']
  %s0 = inlined_call_operand.hbm [shape: f32[6,8,128], index: 0, kind: input, shape index: {}]
  %s1 = inlined_call_operand.vmem [shape: s32[8,1], index: 1, kind: input, shape index: {}]
  %s2 = inlined_call_operand.hbm [shape: f32[128,1024], index: 2, kind: input, shape index: {}]
  %s3 = inlined_call_operand.hbm [shape: f32[128,512], index: 3, kind: input, shape index: {}]
  %s4 = inlined_call_operand.hbm [shape: f32[128,512], index: 4, kind: input, shape index: {}]
  %s5 = inlined_call_operand.vmem [shape: f32[1,1024], index: 5, kind: input, shape index: {}]
  %s6 = inlined_call_operand.hbm [shape: f32[256,128], index: 6, kind: input, shape index: {}]
  %s7 = inlined_call_operand.vmem [shape: f32[1,128], index: 7, kind: input, shape index: {}]
  %s8 = inlined_call_operand.hbm [shape: f32[8,128], index: 8, kind: output, shape index: {}]
  %s9 = sld [smem:[#allocation0]]
  $region62: #{tpu_custom_call.1} parent=0
    _
  %s11 = ssub.s32 1, %s9
  %s12 = scalar_select 0, %s11, %s9
  $region1: #{tpu_custom_call.1} parent=0
    #allocation3 [shape = 'u8[24576]{0}', space=vmem, size = 0x6000, scoped, tag = 'input window, operand 0, single buffered']
    #allocation4 [shape = 's32[1]{0}', space=sflag, size = 0x4, scoped, tag = 'scoped memory for tpu_custom_call.1']
    #allocation5 [shape = 's32[1]{0}', space=sflag, size = 0x4, scoped, tag = 'scoped memory for tpu_custom_call.1']
    #allocation6 [shape = 'u8[524288]{0}', space=vmem, size = 0x80000, scoped, tag = 'input window, operand 2, single buffered']
    #allocation7 [shape = 's32[1]{0}', space=sflag, size = 0x4, scoped, tag = 'scoped memory for tpu_custom_call.1']
    #allocation8 [shape = 'u8[262144]{0}', space=vmem, size = 0x40000, scoped, tag = 'input window, operand 3, single buffered']
    #allocation9 [shape = 'u8[262144]{0}', space=vmem, size = 0x40000, scoped, tag = 'input window, operand 4, single buffered']
    #allocation10 [shape = 's32[1]{0}', space=sflag, size = 0x4, scoped, tag = 'scoped memory for tpu_custom_call.1']
    #allocation11 [shape = 'u8[131072]{0}', space=vmem, size = 0x20000, scoped, tag = 'input window, operand 6, single buffered']
    #allocation12 [shape = 'u8[4096]{0}', space=vmem, size = 0x1000, scoped, tag = 'output window, operand 0, single buffered']
    %13 = vsyncpa [#allocation4], 0
    %14 = vsyncpa [#allocation7], 0
    %15 = vsyncpa [#allocation10], 0
    %16 = vsyncpa [#allocation5], 0
    // Predicated region
    $region2: #{tpu_custom_call.1} parent=1 // pred_check
      _
    $region3: #{tpu_custom_call.1} parent=1 // pred_check_branch
      %18 = sbr.rel (0) target = $region5
    $region4: #{tpu_custom_call.1} parent=1 // pred_region
      %s20 = ssub.s32 768, 768
      %21 = vsyncadd [#allocation4], %s20
      %s22 = sshll.u32 [#allocation3], 4
      %s23 = int_to_ptr.vmem [resolvable:$true] %s22
      %28 = dma.hbm_to_vmem [thread:$0]  %s0, 768, %s23, [#allocation4], 128, 128, 8
    $region5: #{tpu_custom_call.1} parent=1 // pred_fallthru
      _
    // Predicated region
    $region6: #{tpu_custom_call.1} parent=1 // pred_check
      _
    $region7: #{tpu_custom_call.1} parent=1 // pred_check_branch
      %30 = sbr.rel (0) target = $region9
    $region8: #{tpu_custom_call.1} parent=1 // pred_region
      _
    $region9: #{tpu_custom_call.1} parent=1 // pred_fallthru
      _
    // Predicated region
    $region10: #{tpu_custom_call.1} parent=1 // pred_check
      _
    $region11: #{tpu_custom_call.1} parent=1 // pred_check_branch
      %32 = sbr.rel (0) target = $region13
    $region12: #{tpu_custom_call.1} parent=1 // pred_region
      %s34 = ssub.s32 16384, 16384
      %35 = vsyncadd [#allocation7], %s34
      %s36 = sshll.u32 [#allocation6], 4
      %s37 = int_to_ptr.vmem [resolvable:$true] %s36
      %42 = dma.hbm_to_vmem [thread:$0]  %s2, 16384, %s37, [#allocation7], 1024, 1024, 64
    $region13: #{tpu_custom_call.1} parent=1 // pred_fallthru
      _
    // Predicated region
    $region14: #{tpu_custom_call.1} parent=1 // pred_check
      _
    $region15: #{tpu_custom_call.1} parent=1 // pred_check_branch
      %44 = sbr.rel (0) target = $region17
    $region16: #{tpu_custom_call.1} parent=1 // pred_region
      %s46 = ssub.s32 8192, 8192
      %47 = vsyncadd [#allocation7], %s46
      %s48 = sshll.u32 [#allocation8], 4
      %s49 = int_to_ptr.vmem [resolvable:$true] %s48
      %54 = dma.hbm_to_vmem [thread:$0]  %s3, 8192, %s49, [#allocation7], 512, 512, 32
    $region17: #{tpu_custom_call.1} parent=1 // pred_fallthru
      _
    // Predicated region
    $region18: #{tpu_custom_call.1} parent=1 // pred_check
      _
    $region19: #{tpu_custom_call.1} parent=1 // pred_check_branch
      %56 = sbr.rel (0) target = $region21
    $region20: #{tpu_custom_call.1} parent=1 // pred_region
      %s58 = ssub.s32 8192, 8192
      %59 = vsyncadd [#allocation10], %s58
      %s60 = sshll.u32 [#allocation9], 4
      %s61 = int_to_ptr.vmem [resolvable:$true] %s60
      %66 = dma.hbm_to_vmem [thread:$0]  %s4, 8192, %s61, [#allocation10], 512, 512, 32
    $region21: #{tpu_custom_call.1} parent=1 // pred_fallthru
      _
    // Predicated region
    $region22: #{tpu_custom_call.1} parent=1 // pred_check
      _
    $region23: #{tpu_custom_call.1} parent=1 // pred_check_branch
      %68 = sbr.rel (0) target = $region25
    $region24: #{tpu_custom_call.1} parent=1 // pred_region
      _
    $region25: #{tpu_custom_call.1} parent=1 // pred_fallthru
      _
    // Predicated region
    $region26: #{tpu_custom_call.1} parent=1 // pred_check
      _
    $region27: #{tpu_custom_call.1} parent=1 // pred_check_branch
      %70 = sbr.rel (0) target = $region29
    $region28: #{tpu_custom_call.1} parent=1 // pred_region
      %s72 = ssub.s32 4096, 4096
      %73 = vsyncadd [#allocation10], %s72
      %s74 = sshll.u32 [#allocation11], 4
      %s75 = int_to_ptr.vmem [resolvable:$true] %s74
      %80 = dma.hbm_to_vmem [thread:$0]  %s6, 4096, %s75, [#allocation10], 128, 128, 8
    $region29: #{tpu_custom_call.1} parent=1 // pred_fallthru
      _
    // Predicated region
    $region30: #{tpu_custom_call.1} parent=1 // pred_check
      _
    $region31: #{tpu_custom_call.1} parent=1 // pred_check_branch
      %82 = sbr.rel (0) target = $region33
    $region32: #{tpu_custom_call.1} parent=1 // pred_region
      _
    $region33: #{tpu_custom_call.1} parent=1 // pred_fallthru
      _
    // Predicated region
    $region34: #{tpu_custom_call.1} parent=1 // pred_check
      _
    $region35: #{tpu_custom_call.1} parent=1 // pred_check_branch
      %84 = sbr.rel (0) target = $region37
    $region36: #{tpu_custom_call.1} parent=1 // pred_region
      %85 = dma.done [#allocation4], 768
    $region37: #{tpu_custom_call.1} parent=1 // pred_fallthru
      _
    // Predicated region
    $region38: #{tpu_custom_call.1} parent=1 // pred_check
      _
    $region39: #{tpu_custom_call.1} parent=1 // pred_check_branch
      %87 = sbr.rel (0) target = $region41
    $region40: #{tpu_custom_call.1} parent=1 // pred_region
      %88 = dma.done [#allocation7], 16384
    $region41: #{tpu_custom_call.1} parent=1 // pred_fallthru
      _
    // Predicated region
    $region42: #{tpu_custom_call.1} parent=1 // pred_check
      _
    $region43: #{tpu_custom_call.1} parent=1 // pred_check_branch
      %90 = sbr.rel (0) target = $region45
    $region44: #{tpu_custom_call.1} parent=1 // pred_region
      %91 = dma.done [#allocation7], 8192
    $region45: #{tpu_custom_call.1} parent=1 // pred_fallthru
      _
    // Predicated region
    $region46: #{tpu_custom_call.1} parent=1 // pred_check
      _
    $region47: #{tpu_custom_call.1} parent=1 // pred_check_branch
      %93 = sbr.rel (0) target = $region49
    $region48: #{tpu_custom_call.1} parent=1 // pred_region
      %94 = dma.done [#allocation10], 8192
    $region49: #{tpu_custom_call.1} parent=1 // pred_fallthru
      _
    // Predicated region
    $region50: #{tpu_custom_call.1} parent=1 // pred_check
      _
    $region51: #{tpu_custom_call.1} parent=1 // pred_check_branch
      %96 = sbr.rel (0) target = $region53
    $region52: #{tpu_custom_call.1} parent=1 // pred_region
      %97 = dma.done [#allocation10], 4096
    $region53: #{tpu_custom_call.1} parent=1 // pred_fallthru
      _
    %v98 = vld [vmem:[#allocation8] sm:$0xff]
    %v99 = vld [vmem:[#allocation8 + $0x8] sm:$0xff]
    %v100 = vld [vmem:[#allocation8 + $0x10] sm:$0xff]
    %v101 = vld [vmem:[#allocation8 + $0x18] sm:$0xff]
    %v102 = vld [vmem:[#allocation8 + $0x20] sm:$0xff]
    %v103 = vld [vmem:[#allocation8 + $0x28] sm:$0xff]
    %v104 = vld [vmem:[#allocation8 + $0x30] sm:$0xff]
    %v105 = vld [vmem:[#allocation8 + $0x38] sm:$0xff]
    %v106 = vld [vmem:[#allocation8 + $0x40] sm:$0xff]
    %v107 = vld [vmem:[#allocation8 + $0x48] sm:$0xff]
    %v108 = vld [vmem:[#allocation8 + $0x50] sm:$0xff]
    %v109 = vld [vmem:[#allocation8 + $0x58] sm:$0xff]
    %v110 = vld [vmem:[#allocation8 + $0x60] sm:$0xff]
    %v111 = vld [vmem:[#allocation8 + $0x68] sm:$0xff]
    %v112 = vld [vmem:[#allocation8 + $0x70] sm:$0xff]
    %v113 = vld [vmem:[#allocation8 + $0x78] sm:$0xff]
    %v114 = vld [vmem:[#allocation8 + $0x80] sm:$0xff]
    %v115 = vld [vmem:[#allocation8 + $0x88] sm:$0xff]
    %v116 = vld [vmem:[#allocation8 + $0x90] sm:$0xff]
    %v117 = vld [vmem:[#allocation8 + $0x98] sm:$0xff]
    %v118 = vld [vmem:[#allocation8 + $0xa0] sm:$0xff]
    %v119 = vld [vmem:[#allocation8 + $0xa8] sm:$0xff]
    %v120 = vld [vmem:[#allocation8 + $0xb0] sm:$0xff]
    %v121 = vld [vmem:[#allocation8 + $0xb8] sm:$0xff]
    %v122 = vld [vmem:[#allocation8 + $0xc0] sm:$0xff]
    %v123 = vld [vmem:[#allocation8 + $0xc8] sm:$0xff]
    %v124 = vld [vmem:[#allocation8 + $0xd0] sm:$0xff]
    %v125 = vld [vmem:[#allocation8 + $0xd8] sm:$0xff]
    %v126 = vld [vmem:[#allocation8 + $0xe0] sm:$0xff]
    %v127 = vld [vmem:[#allocation8 + $0xe8] sm:$0xff]
    %v128 = vld [vmem:[#allocation8 + $0xf0] sm:$0xff]
    %v129 = vld [vmem:[#allocation8 + $0xf8] sm:$0xff]
    %v130 = vld [vmem:[#allocation8 + $0x100] sm:$0xff]
    %v131 = vld [vmem:[#allocation8 + $0x108] sm:$0xff]
    %v132 = vld [vmem:[#allocation8 + $0x110] sm:$0xff]
    %v133 = vld [vmem:[#allocation8 + $0x118] sm:$0xff]
    %v134 = vld [vmem:[#allocation8 + $0x120] sm:$0xff]
    %v135 = vld [vmem:[#allocation8 + $0x128] sm:$0xff]
    %v136 = vld [vmem:[#allocation8 + $0x130] sm:$0xff]
    %v137 = vld [vmem:[#allocation8 + $0x138] sm:$0xff]
    %v138 = vld [vmem:[#allocation8 + $0x140] sm:$0xff]
    %v139 = vld [vmem:[#allocation8 + $0x148] sm:$0xff]
    %v140 = vld [vmem:[#allocation8 + $0x150] sm:$0xff]
    %v141 = vld [vmem:[#allocation8 + $0x158] sm:$0xff]
    %v142 = vld [vmem:[#allocation8 + $0x160] sm:$0xff]
    %v143 = vld [vmem:[#allocation8 + $0x168] sm:$0xff]
    %v144 = vld [vmem:[#allocation8 + $0x170] sm:$0xff]
    %v145 = vld [vmem:[#allocation8 + $0x178] sm:$0xff]
    %v146 = vld [vmem:[#allocation8 + $0x180] sm:$0xff]
    %v147 = vld [vmem:[#allocation8 + $0x188] sm:$0xff]
    %v148 = vld [vmem:[#allocation8 + $0x190] sm:$0xff]
    %v149 = vld [vmem:[#allocation8 + $0x198] sm:$0xff]
    %v150 = vld [vmem:[#allocation8 + $0x1a0] sm:$0xff]
    %v151 = vld [vmem:[#allocation8 + $0x1a8] sm:$0xff]
    %v152 = vld [vmem:[#allocation8 + $0x1b0] sm:$0xff]
    %v153 = vld [vmem:[#allocation8 + $0x1b8] sm:$0xff]
    %v154 = vld [vmem:[#allocation8 + $0x1c0] sm:$0xff]
    %v155 = vld [vmem:[#allocation8 + $0x1c8] sm:$0xff]
    %v156 = vld [vmem:[#allocation8 + $0x1d0] sm:$0xff]
    %v157 = vld [vmem:[#allocation8 + $0x1d8] sm:$0xff]
    %v158 = vld [vmem:[#allocation8 + $0x1e0] sm:$0xff]
    %v159 = vld [vmem:[#allocation8 + $0x1e8] sm:$0xff]
    %v160 = vld [vmem:[#allocation8 + $0x1f0] sm:$0xff]
    %v161 = vld [vmem:[#allocation8 + $0x1f8] sm:$0xff]
    %v162 = vld [vmem:[#allocation9] sm:$0xff]
    %v163 = vld [vmem:[#allocation9 + $0x8] sm:$0xff]
    %v164 = vld [vmem:[#allocation9 + $0x10] sm:$0xff]
    %v165 = vld [vmem:[#allocation9 + $0x18] sm:$0xff]
    %v166 = vld [vmem:[#allocation9 + $0x20] sm:$0xff]
    %v167 = vld [vmem:[#allocation9 + $0x28] sm:$0xff]
    %v168 = vld [vmem:[#allocation9 + $0x30] sm:$0xff]
    %v169 = vld [vmem:[#allocation9 + $0x38] sm:$0xff]
    %v170 = vld [vmem:[#allocation9 + $0x40] sm:$0xff]
    %v171 = vld [vmem:[#allocation9 + $0x48] sm:$0xff]
    %v172 = vld [vmem:[#allocation9 + $0x50] sm:$0xff]
    %v173 = vld [vmem:[#allocation9 + $0x58] sm:$0xff]
    %v174 = vld [vmem:[#allocation9 + $0x60] sm:$0xff]
    %v175 = vld [vmem:[#allocation9 + $0x68] sm:$0xff]
    %v176 = vld [vmem:[#allocation9 + $0x70] sm:$0xff]
    %v177 = vld [vmem:[#allocation9 + $0x78] sm:$0xff]
    %v178 = vld [vmem:[#allocation9 + $0x80] sm:$0xff]
    %v179 = vld [vmem:[#allocation9 + $0x88] sm:$0xff]
    %v180 = vld [vmem:[#allocation9 + $0x90] sm:$0xff]
    %v181 = vld [vmem:[#allocation9 + $0x98] sm:$0xff]
    %v182 = vld [vmem:[#allocation9 + $0xa0] sm:$0xff]
    %v183 = vld [vmem:[#allocation9 + $0xa8] sm:$0xff]
    %v184 = vld [vmem:[#allocation9 + $0xb0] sm:$0xff]
    %v185 = vld [vmem:[#allocation9 + $0xb8] sm:$0xff]
    %v186 = vld [vmem:[#allocation9 + $0xc0] sm:$0xff]
    %v187 = vld [vmem:[#allocation9 + $0xc8] sm:$0xff]
    %v188 = vld [vmem:[#allocation9 + $0xd0] sm:$0xff]
    %v189 = vld [vmem:[#allocation9 + $0xd8] sm:$0xff]
    %v190 = vld [vmem:[#allocation9 + $0xe0] sm:$0xff]
    %v191 = vld [vmem:[#allocation9 + $0xe8] sm:$0xff]
    %v192 = vld [vmem:[#allocation9 + $0xf0] sm:$0xff]
    %v193 = vld [vmem:[#allocation9 + $0xf8] sm:$0xff]
    %v194 = vld [vmem:[#allocation9 + $0x100] sm:$0xff]
    %v195 = vld [vmem:[#allocation9 + $0x108] sm:$0xff]
    %v196 = vld [vmem:[#allocation9 + $0x110] sm:$0xff]
    %v197 = vld [vmem:[#allocation9 + $0x118] sm:$0xff]
    %v198 = vld [vmem:[#allocation9 + $0x120] sm:$0xff]
    %v199 = vld [vmem:[#allocation9 + $0x128] sm:$0xff]
    %v200 = vld [vmem:[#allocation9 + $0x130] sm:$0xff]
    %v201 = vld [vmem:[#allocation9 + $0x138] sm:$0xff]
    %v202 = vld [vmem:[#allocation9 + $0x140] sm:$0xff]
    %v203 = vld [vmem:[#allocation9 + $0x148] sm:$0xff]
    %v204 = vld [vmem:[#allocation9 + $0x150] sm:$0xff]
    %v205 = vld [vmem:[#allocation9 + $0x158] sm:$0xff]
    %v206 = vld [vmem:[#allocation9 + $0x160] sm:$0xff]
    %v207 = vld [vmem:[#allocation9 + $0x168] sm:$0xff]
    %v208 = vld [vmem:[#allocation9 + $0x170] sm:$0xff]
    %v209 = vld [vmem:[#allocation9 + $0x178] sm:$0xff]
    %v210 = vld [vmem:[#allocation9 + $0x180] sm:$0xff]
    %v211 = vld [vmem:[#allocation9 + $0x188] sm:$0xff]
    %v212 = vld [vmem:[#allocation9 + $0x190] sm:$0xff]
    %v213 = vld [vmem:[#allocation9 + $0x198] sm:$0xff]
    %v214 = vld [vmem:[#allocation9 + $0x1a0] sm:$0xff]
    %v215 = vld [vmem:[#allocation9 + $0x1a8] sm:$0xff]
    %v216 = vld [vmem:[#allocation9 + $0x1b0] sm:$0xff]
    %v217 = vld [vmem:[#allocation9 + $0x1b8] sm:$0xff]
    %v218 = vld [vmem:[#allocation9 + $0x1c0] sm:$0xff]
    %v219 = vld [vmem:[#allocation9 + $0x1c8] sm:$0xff]
    %v220 = vld [vmem:[#allocation9 + $0x1d0] sm:$0xff]
    %v221 = vld [vmem:[#allocation9 + $0x1d8] sm:$0xff]
    %v222 = vld [vmem:[#allocation9 + $0x1e0] sm:$0xff]
    %v223 = vld [vmem:[#allocation9 + $0x1e8] sm:$0xff]
    %v224 = vld [vmem:[#allocation9 + $0x1f0] sm:$0xff]
    %v225 = vld [vmem:[#allocation9 + $0x1f8] sm:$0xff]
    %v226 = vld [vmem:[%s1] sm:$0xff]
    %v227 = vld [vmem:[#allocation3] sm:$0xff]
    %v228 = vld [vmem:[#allocation3 + $0x8] sm:$0xff]
    %v229 = vld [vmem:[#allocation3 + $0x10] sm:$0xff]
    %v230 = vld [vmem:[#allocation3 + $0x18] sm:$0xff]
    %v231 = vld [vmem:[#allocation3 + $0x20] sm:$0xff]
    %v232 = vld [vmem:[#allocation3 + $0x28] sm:$0xff]
    %v233 = vld [vmem:[#allocation6] sm:$0xff]
    %v234 = vld [vmem:[#allocation6 + $0x8] sm:$0xff]
    %v235 = vld [vmem:[#allocation6 + $0x10] sm:$0xff]
    %v236 = vld [vmem:[#allocation6 + $0x18] sm:$0xff]
    %v237 = vld [vmem:[#allocation6 + $0x20] sm:$0xff]
    %v238 = vld [vmem:[#allocation6 + $0x28] sm:$0xff]
    %v239 = vld [vmem:[#allocation6 + $0x30] sm:$0xff]
    %v240 = vld [vmem:[#allocation6 + $0x38] sm:$0xff]
    %v241 = vld [vmem:[#allocation6 + $0x40] sm:$0xff]
    %v242 = vld [vmem:[#allocation6 + $0x48] sm:$0xff]
    %v243 = vld [vmem:[#allocation6 + $0x50] sm:$0xff]
    %v244 = vld [vmem:[#allocation6 + $0x58] sm:$0xff]
    %v245 = vld [vmem:[#allocation6 + $0x60] sm:$0xff]
    %v246 = vld [vmem:[#allocation6 + $0x68] sm:$0xff]
    %v247 = vld [vmem:[#allocation6 + $0x70] sm:$0xff]
    %v248 = vld [vmem:[#allocation6 + $0x78] sm:$0xff]
    %v249 = vld [vmem:[#allocation6 + $0x80] sm:$0xff]
    %v250 = vld [vmem:[#allocation6 + $0x88] sm:$0xff]
    %v251 = vld [vmem:[#allocation6 + $0x90] sm:$0xff]
    %v252 = vld [vmem:[#allocation6 + $0x98] sm:$0xff]
    %v253 = vld [vmem:[#allocation6 + $0xa0] sm:$0xff]
    %v254 = vld [vmem:[#allocation6 + $0xa8] sm:$0xff]
    %v255 = vld [vmem:[#allocation6 + $0xb0] sm:$0xff]
    %v256 = vld [vmem:[#allocation6 + $0xb8] sm:$0xff]
    %v257 = vld [vmem:[#allocation6 + $0xc0] sm:$0xff]
    %v258 = vld [vmem:[#allocation6 + $0xc8] sm:$0xff]
    %v259 = vld [vmem:[#allocation6 + $0xd0] sm:$0xff]
    %v260 = vld [vmem:[#allocation6 + $0xd8] sm:$0xff]
    %v261 = vld [vmem:[#allocation6 + $0xe0] sm:$0xff]
    %v262 = vld [vmem:[#allocation6 + $0xe8] sm:$0xff]
    %v263 = vld [vmem:[#allocation6 + $0xf0] sm:$0xff]
    %v264 = vld [vmem:[#allocation6 + $0xf8] sm:$0xff]
    %v265 = vld [vmem:[#allocation6 + $0x100] sm:$0xff]
    %v266 = vld [vmem:[#allocation6 + $0x108] sm:$0xff]
    %v267 = vld [vmem:[#allocation6 + $0x110] sm:$0xff]
    %v268 = vld [vmem:[#allocation6 + $0x118] sm:$0xff]
    %v269 = vld [vmem:[#allocation6 + $0x120] sm:$0xff]
    %v270 = vld [vmem:[#allocation6 + $0x128] sm:$0xff]
    %v271 = vld [vmem:[#allocation6 + $0x130] sm:$0xff]
    %v272 = vld [vmem:[#allocation6 + $0x138] sm:$0xff]
    %v273 = vld [vmem:[#allocation6 + $0x140] sm:$0xff]
    %v274 = vld [vmem:[#allocation6 + $0x148] sm:$0xff]
    %v275 = vld [vmem:[#allocation6 + $0x150] sm:$0xff]
    %v276 = vld [vmem:[#allocation6 + $0x158] sm:$0xff]
    %v277 = vld [vmem:[#allocation6 + $0x160] sm:$0xff]
    %v278 = vld [vmem:[#allocation6 + $0x168] sm:$0xff]
    %v279 = vld [vmem:[#allocation6 + $0x170] sm:$0xff]
    %v280 = vld [vmem:[#allocation6 + $0x178] sm:$0xff]
    %v281 = vld [vmem:[#allocation6 + $0x180] sm:$0xff]
    %v282 = vld [vmem:[#allocation6 + $0x188] sm:$0xff]
    %v283 = vld [vmem:[#allocation6 + $0x190] sm:$0xff]
    %v284 = vld [vmem:[#allocation6 + $0x198] sm:$0xff]
    %v285 = vld [vmem:[#allocation6 + $0x1a0] sm:$0xff]
    %v286 = vld [vmem:[#allocation6 + $0x1a8] sm:$0xff]
    %v287 = vld [vmem:[#allocation6 + $0x1b0] sm:$0xff]
    %v288 = vld [vmem:[#allocation6 + $0x1b8] sm:$0xff]
    %v289 = vld [vmem:[#allocation6 + $0x1c0] sm:$0xff]
    %v290 = vld [vmem:[#allocation6 + $0x1c8] sm:$0xff]
    %v291 = vld [vmem:[#allocation6 + $0x1d0] sm:$0xff]
    %v292 = vld [vmem:[#allocation6 + $0x1d8] sm:$0xff]
    %v293 = vld [vmem:[#allocation6 + $0x1e0] sm:$0xff]
    %v294 = vld [vmem:[#allocation6 + $0x1e8] sm:$0xff]
    %v295 = vld [vmem:[#allocation6 + $0x1f0] sm:$0xff]
    %v296 = vld [vmem:[#allocation6 + $0x1f8] sm:$0xff]
    %v297 = vld [vmem:[#allocation6 + $0x200] sm:$0xff]
    %v298 = vld [vmem:[#allocation6 + $0x208] sm:$0xff]
    %v299 = vld [vmem:[#allocation6 + $0x210] sm:$0xff]
    %v300 = vld [vmem:[#allocation6 + $0x218] sm:$0xff]
    %v301 = vld [vmem:[#allocation6 + $0x220] sm:$0xff]
    %v302 = vld [vmem:[#allocation6 + $0x228] sm:$0xff]
    %v303 = vld [vmem:[#allocation6 + $0x230] sm:$0xff]
    %v304 = vld [vmem:[#allocation6 + $0x238] sm:$0xff]
    %v305 = vld [vmem:[#allocation6 + $0x240] sm:$0xff]
    %v306 = vld [vmem:[#allocation6 + $0x248] sm:$0xff]
    %v307 = vld [vmem:[#allocation6 + $0x250] sm:$0xff]
    %v308 = vld [vmem:[#allocation6 + $0x258] sm:$0xff]
    %v309 = vld [vmem:[#allocation6 + $0x260] sm:$0xff]
    %v310 = vld [vmem:[#allocation6 + $0x268] sm:$0xff]
    %v311 = vld [vmem:[#allocation6 + $0x270] sm:$0xff]
    %v312 = vld [vmem:[#allocation6 + $0x278] sm:$0xff]
    %v313 = vld [vmem:[#allocation6 + $0x280] sm:$0xff]
    %v314 = vld [vmem:[#allocation6 + $0x288] sm:$0xff]
    %v315 = vld [vmem:[#allocation6 + $0x290] sm:$0xff]
    %v316 = vld [vmem:[#allocation6 + $0x298] sm:$0xff]
    %v317 = vld [vmem:[#allocation6 + $0x2a0] sm:$0xff]
    %v318 = vld [vmem:[#allocation6 + $0x2a8] sm:$0xff]
    %v319 = vld [vmem:[#allocation6 + $0x2b0] sm:$0xff]
    %v320 = vld [vmem:[#allocation6 + $0x2b8] sm:$0xff]
    %v321 = vld [vmem:[#allocation6 + $0x2c0] sm:$0xff]
    %v322 = vld [vmem:[#allocation6 + $0x2c8] sm:$0xff]
    %v323 = vld [vmem:[#allocation6 + $0x2d0] sm:$0xff]
    %v324 = vld [vmem:[#allocation6 + $0x2d8] sm:$0xff]
    %v325 = vld [vmem:[#allocation6 + $0x2e0] sm:$0xff]
    %v326 = vld [vmem:[#allocation6 + $0x2e8] sm:$0xff]
    %v327 = vld [vmem:[#allocation6 + $0x2f0] sm:$0xff]
    %v328 = vld [vmem:[#allocation6 + $0x2f8] sm:$0xff]
    %v329 = vld [vmem:[#allocation6 + $0x300] sm:$0xff]
    %v330 = vld [vmem:[#allocation6 + $0x308] sm:$0xff]
    %v331 = vld [vmem:[#allocation6 + $0x310] sm:$0xff]
    %v332 = vld [vmem:[#allocation6 + $0x318] sm:$0xff]
    %v333 = vld [vmem:[#allocation6 + $0x320] sm:$0xff]
    %v334 = vld [vmem:[#allocation6 + $0x328] sm:$0xff]
    %v335 = vld [vmem:[#allocation6 + $0x330] sm:$0xff]
    %v336 = vld [vmem:[#allocation6 + $0x338] sm:$0xff]
    %v337 = vld [vmem:[#allocation6 + $0x340] sm:$0xff]
    %v338 = vld [vmem:[#allocation6 + $0x348] sm:$0xff]
    %v339 = vld [vmem:[#allocation6 + $0x350] sm:$0xff]
    %v340 = vld [vmem:[#allocation6 + $0x358] sm:$0xff]
    %v341 = vld [vmem:[#allocation6 + $0x360] sm:$0xff]
    %v342 = vld [vmem:[#allocation6 + $0x368] sm:$0xff]
    %v343 = vld [vmem:[#allocation6 + $0x370] sm:$0xff]
    %v344 = vld [vmem:[#allocation6 + $0x378] sm:$0xff]
    %v345 = vld [vmem:[#allocation6 + $0x380] sm:$0xff]
    %v346 = vld [vmem:[#allocation6 + $0x388] sm:$0xff]
    %v347 = vld [vmem:[#allocation6 + $0x390] sm:$0xff]
    %v348 = vld [vmem:[#allocation6 + $0x398] sm:$0xff]
    %v349 = vld [vmem:[#allocation6 + $0x3a0] sm:$0xff]
    %v350 = vld [vmem:[#allocation6 + $0x3a8] sm:$0xff]
    %v351 = vld [vmem:[#allocation6 + $0x3b0] sm:$0xff]
    %v352 = vld [vmem:[#allocation6 + $0x3b8] sm:$0xff]
    %v353 = vld [vmem:[#allocation6 + $0x3c0] sm:$0xff]
    %v354 = vld [vmem:[#allocation6 + $0x3c8] sm:$0xff]
    %v355 = vld [vmem:[#allocation6 + $0x3d0] sm:$0xff]
    %v356 = vld [vmem:[#allocation6 + $0x3d8] sm:$0xff]
    %v357 = vld [vmem:[#allocation6 + $0x3e0] sm:$0xff]
    %v358 = vld [vmem:[#allocation6 + $0x3e8] sm:$0xff]
    %v359 = vld [vmem:[#allocation6 + $0x3f0] sm:$0xff]
    %v360 = vld [vmem:[#allocation6 + $0x3f8] sm:$0xff]
    %v361 = vld [vmem:[%s5] sm:$0xff]
    %v363 = vlaneseq
    %v364 = vshrl.u32 %v363, 7
    %v365 = vsub.s32 0, %v364
    %v366 = vrot.slane %v361, %v365
    %v367 = vlaneseq
    %v368 = vshrl.u32 %v367, 7
    %v369 = vsub.s32 1, %v368
    %v370 = vrot.slane %v361, %v369
    %v371 = vlaneseq
    %v372 = vshrl.u32 %v371, 7
    %v373 = vsub.s32 2, %v372
    %v374 = vrot.slane %v361, %v373
    %v375 = vlaneseq
    %v376 = vshrl.u32 %v375, 7
    %v377 = vsub.s32 3, %v376
    %v378 = vrot.slane %v361, %v377
    %v379 = vlaneseq
    %v380 = vshrl.u32 %v379, 7
    %v381 = vsub.s32 4, %v380
    %v382 = vrot.slane %v361, %v381
    %v383 = vlaneseq
    %v384 = vshrl.u32 %v383, 7
    %v385 = vsub.s32 5, %v384
    %v386 = vrot.slane %v361, %v385
    %v387 = vlaneseq
    %v388 = vshrl.u32 %v387, 7
    %v389 = vsub.s32 6, %v388
    %v390 = vrot.slane %v361, %v389
    %v391 = vlaneseq
    %v392 = vshrl.u32 %v391, 7
    %v393 = vsub.s32 7, %v392
    %v394 = vrot.slane %v361, %v393
    %403 = vmatprep.subr.mxu0 %v354
    %404 = vmatpush1.msra.mxu0 %v353
    %405 = vmatprep.subr.mxu0 %v346
    %406 = vmatpush1.msra.mxu0 %v345
    %407 = vmatprep.subr.mxu0 %v338
    %408 = vmatpush1.msra.mxu0 %v337
    %409 = vmatprep.subr.mxu0 %v330
    %410 = vmatpush1.msra.mxu0 %v329
    %411 = vmatprep.subr.mxu0 %v322
    %412 = vmatpush1.msra.mxu0 %v321
    %413 = vmatprep.subr.mxu0 %v314
    %414 = vmatpush1.msra.mxu0 %v313
    %415 = vmatprep.subr.mxu0 %v306
    %416 = vmatpush1.msra.mxu0 %v305
    %417 = vmatprep.subr.mxu0 %v298
    %418 = vmatpush1.msra.mxu0 %v297
    %419 = vmatprep.subr.mxu0 %v290
    %420 = vmatpush1.msra.mxu0 %v289
    %421 = vmatprep.subr.mxu0 %v282
    %422 = vmatpush1.msra.mxu0 %v281
    %423 = vmatprep.subr.mxu0 %v274
    %424 = vmatpush1.msra.mxu0 %v273
    %425 = vmatprep.subr.mxu0 %v266
    %426 = vmatpush1.msra.mxu0 %v265
    %427 = vmatprep.subr.mxu0 %v258
    %428 = vmatpush1.msra.mxu0 %v257
    %429 = vmatprep.subr.mxu0 %v250
    %430 = vmatpush1.msra.mxu0 %v249
    %431 = vmatprep.subr.mxu0 %v242
    %432 = vmatpush1.msra.mxu0 %v241
    %433 = vmatprep.subr.mxu0 %v234
    %434 = vmatpush1.msra.mxu0 %v233
    %435 = vmatprep.subr.mxu0 0.0
    %436 = vmatpush2.msra.mxu0 0.0
    %437 = vmatprep.subr.mxu0 0.0
    %438 = vmatpush2.msra.mxu0 0.0
    %439 = vmatprep.subr.mxu0 0.0
    %440 = vmatpush2.msra.mxu0 0.0
    %441 = vmatprep.subr.mxu0 0.0
    %442 = vmatpush2.msra.mxu0 0.0
    %443 = vmatprep.subr.mxu0 0.0
    %444 = vmatpush2.msra.mxu0 0.0
    %445 = vmatprep.subr.mxu0 0.0
    %446 = vmatpush2.msra.mxu0 0.0
    %447 = vmatprep.subr.mxu0 0.0
    %448 = vmatpush2.msra.mxu0 0.0
    %449 = vmatprep.subr.mxu0 0.0
    %450 = vmatpush2.msra.mxu0 0.0
    %451 = vmatprep.subr.mxu0 0.0
    %452 = vmatpush2.msra.mxu0 0.0
    %453 = vmatprep.subr.mxu0 0.0
    %454 = vmatpush2.msra.mxu0 0.0
    %455 = vmatprep.subr.mxu0 0.0
    %456 = vmatpush2.msra.mxu0 0.0
    %457 = vmatprep.subr.mxu0 0.0
    %458 = vmatpush2.msra.mxu0 0.0
    %459 = vmatprep.subr.mxu0 0.0
    %460 = vmatpush2.msra.mxu0 0.0
    %461 = vmatprep.subr.mxu0 0.0
    %462 = vmatpush2.msra.mxu0 0.0
    %463 = vmatprep.subr.mxu0 0.0
    %464 = vmatpush2.msra.mxu0 0.0
    %465 = vmatprep.subr.mxu0 0.0
    %466 = vmatpush2.msra.mxu0 0.0
    %467 = vmatprep.mubr.f32.mxu0 0.0
    %468 = vmatmul.mubr.f32.gmra.mxu0 %v227
    %v469 = vpop.f32.mrf.mxu0
    %v470 = vadd.f32 %v366, %v469
    %v471 = vpop.f32.mrf.mxu0
    %v472 = vadd.f32 %v370, %v471
    %473 = vmatprep.mubr.f32.mxu0 0.0
    %474 = vmatmul.mubr.f32.gmra.mxu0 %v228
    %v475 = vpop.f32.mrf.mxu0
    %v476 = vadd.f32 %v366, %v475
    %v477 = vpop.f32.mrf.mxu0
    %v478 = vadd.f32 %v370, %v477
    %479 = vmatprep.mubr.f32.mxu0 0.0
    %480 = vmatmul.mubr.f32.gmra.mxu0 %v229
    %v481 = vpop.f32.mrf.mxu0
    %v482 = vadd.f32 %v366, %v481
    %v483 = vpop.f32.mrf.mxu0
    %v484 = vadd.f32 %v370, %v483
    %485 = vmatprep.mubr.f32.mxu0 0.0
    %486 = vmatmul.mubr.f32.gmra.mxu0 %v230
    %v487 = vpop.f32.mrf.mxu0
    %v488 = vadd.f32 %v366, %v487
    %v489 = vpop.f32.mrf.mxu0
    %v490 = vadd.f32 %v370, %v489
    %491 = vmatprep.mubr.f32.mxu0 0.0
    %492 = vmatmul.mubr.f32.gmra.mxu0 %v231
    %v493 = vpop.f32.mrf.mxu0
    %v494 = vadd.f32 %v366, %v493
    %v495 = vpop.f32.mrf.mxu0
    %v496 = vadd.f32 %v370, %v495
    %497 = vmatprep.mubr.f32.mxu0 0.0
    %498 = vmatmul.mubr.f32.gmra.mxu0 %v232
    %v499 = vpop.f32.mrf.mxu0
    %v500 = vadd.f32 %v366, %v499
    %v501 = vpop.f32.mrf.mxu0
    %v502 = vadd.f32 %v370, %v501
    %503 = vdwg.mxu0
    %504 = vmatprep.subr.mxu0 %v356
    %505 = vmatpush1.msra.mxu0 %v355
    %506 = vmatprep.subr.mxu0 %v348
    %507 = vmatpush1.msra.mxu0 %v347
    %508 = vmatprep.subr.mxu0 %v340
    %509 = vmatpush1.msra.mxu0 %v339
    %510 = vmatprep.subr.mxu0 %v332
    %511 = vmatpush1.msra.mxu0 %v331
    %512 = vmatprep.subr.mxu0 %v324
    %513 = vmatpush1.msra.mxu0 %v323
    %514 = vmatprep.subr.mxu0 %v316
    %515 = vmatpush1.msra.mxu0 %v315
    %516 = vmatprep.subr.mxu0 %v308
    %517 = vmatpush1.msra.mxu0 %v307
    %518 = vmatprep.subr.mxu0 %v300
    %519 = vmatpush1.msra.mxu0 %v299
    %520 = vmatprep.subr.mxu0 %v292
    %521 = vmatpush1.msra.mxu0 %v291
    %522 = vmatprep.subr.mxu0 %v284
    %523 = vmatpush1.msra.mxu0 %v283
    %524 = vmatprep.subr.mxu0 %v276
    %525 = vmatpush1.msra.mxu0 %v275
    %526 = vmatprep.subr.mxu0 %v268
    %527 = vmatpush1.msra.mxu0 %v267
    %528 = vmatprep.subr.mxu0 %v260
    %529 = vmatpush1.msra.mxu0 %v259
    %530 = vmatprep.subr.mxu0 %v252
    %531 = vmatpush1.msra.mxu0 %v251
    %532 = vmatprep.subr.mxu0 %v244
    %533 = vmatpush1.msra.mxu0 %v243
    %534 = vmatprep.subr.mxu0 %v236
    %535 = vmatpush1.msra.mxu0 %v235
    %536 = vmatprep.subr.mxu0 0.0
    %537 = vmatpush2.msra.mxu0 0.0
    %538 = vmatprep.subr.mxu0 0.0
    %539 = vmatpush2.msra.mxu0 0.0
    %540 = vmatprep.subr.mxu0 0.0
    %541 = vmatpush2.msra.mxu0 0.0
    %542 = vmatprep.subr.mxu0 0.0
    %543 = vmatpush2.msra.mxu0 0.0
    %544 = vmatprep.subr.mxu0 0.0
    %545 = vmatpush2.msra.mxu0 0.0
    %546 = vmatprep.subr.mxu0 0.0
    %547 = vmatpush2.msra.mxu0 0.0
    %548 = vmatprep.subr.mxu0 0.0
    %549 = vmatpush2.msra.mxu0 0.0
    %550 = vmatprep.subr.mxu0 0.0
    %551 = vmatpush2.msra.mxu0 0.0
    %552 = vmatprep.subr.mxu0 0.0
    %553 = vmatpush2.msra.mxu0 0.0
    %554 = vmatprep.subr.mxu0 0.0
    %555 = vmatpush2.msra.mxu0 0.0
    %556 = vmatprep.subr.mxu0 0.0
    %557 = vmatpush2.msra.mxu0 0.0
    %558 = vmatprep.subr.mxu0 0.0
    %559 = vmatpush2.msra.mxu0 0.0
    %560 = vmatprep.subr.mxu0 0.0
    %561 = vmatpush2.msra.mxu0 0.0
    %562 = vmatprep.subr.mxu0 0.0
    %563 = vmatpush2.msra.mxu0 0.0
    %564 = vmatprep.subr.mxu0 0.0
    %565 = vmatpush2.msra.mxu0 0.0
    %566 = vmatprep.subr.mxu0 0.0
    %567 = vmatpush2.msra.mxu0 0.0
    %568 = vmatprep.mubr.f32.mxu0 0.0
    %569 = vmatmul.mubr.f32.gmra.mxu0 %v227
    %v570 = vpop.f32.mrf.mxu0
    %v571 = vadd.f32 %v374, %v570
    %v572 = vpop.f32.mrf.mxu0
    %v573 = vadd.f32 %v378, %v572
    %574 = vmatprep.mubr.f32.mxu0 0.0
    %575 = vmatmul.mubr.f32.gmra.mxu0 %v228
    %v576 = vpop.f32.mrf.mxu0
    %v577 = vadd.f32 %v374, %v576
    %v578 = vpop.f32.mrf.mxu0
    %v579 = vadd.f32 %v378, %v578
    %580 = vmatprep.mubr.f32.mxu0 0.0
    %581 = vmatmul.mubr.f32.gmra.mxu0 %v229
    %v582 = vpop.f32.mrf.mxu0
    %v583 = vadd.f32 %v374, %v582
    %v584 = vpop.f32.mrf.mxu0
    %v585 = vadd.f32 %v378, %v584
    %586 = vmatprep.mubr.f32.mxu0 0.0
    %587 = vmatmul.mubr.f32.gmra.mxu0 %v230
    %v588 = vpop.f32.mrf.mxu0
    %v589 = vadd.f32 %v374, %v588
    %v590 = vpop.f32.mrf.mxu0
    %v591 = vadd.f32 %v378, %v590
    %592 = vmatprep.mubr.f32.mxu0 0.0
    %593 = vmatmul.mubr.f32.gmra.mxu0 %v231
    %v594 = vpop.f32.mrf.mxu0
    %v595 = vadd.f32 %v374, %v594
    %v596 = vpop.f32.mrf.mxu0
    %v597 = vadd.f32 %v378, %v596
    %598 = vmatprep.mubr.f32.mxu0 0.0
    %599 = vmatmul.mubr.f32.gmra.mxu0 %v232
    %v600 = vpop.f32.mrf.mxu0
    %v601 = vadd.f32 %v374, %v600
    %v602 = vpop.f32.mrf.mxu0
    %v603 = vadd.f32 %v378, %v602
    %604 = vdwg.mxu0
    %605 = vmatprep.subr.mxu0 %v358
    %606 = vmatpush1.msra.mxu0 %v357
    %607 = vmatprep.subr.mxu0 %v350
    %608 = vmatpush1.msra.mxu0 %v349
    %609 = vmatprep.subr.mxu0 %v342
    %610 = vmatpush1.msra.mxu0 %v341
    %611 = vmatprep.subr.mxu0 %v334
    %612 = vmatpush1.msra.mxu0 %v333
    %613 = vmatprep.subr.mxu0 %v326
    %614 = vmatpush1.msra.mxu0 %v325
    %615 = vmatprep.subr.mxu0 %v318
    %616 = vmatpush1.msra.mxu0 %v317
    %617 = vmatprep.subr.mxu0 %v310
    %618 = vmatpush1.msra.mxu0 %v309
    %619 = vmatprep.subr.mxu0 %v302
    %620 = vmatpush1.msra.mxu0 %v301
    %621 = vmatprep.subr.mxu0 %v294
    %622 = vmatpush1.msra.mxu0 %v293
    %623 = vmatprep.subr.mxu0 %v286
    %624 = vmatpush1.msra.mxu0 %v285
    %625 = vmatprep.subr.mxu0 %v278
    %626 = vmatpush1.msra.mxu0 %v277
    %627 = vmatprep.subr.mxu0 %v270
    %628 = vmatpush1.msra.mxu0 %v269
    %629 = vmatprep.subr.mxu0 %v262
    %630 = vmatpush1.msra.mxu0 %v261
    %631 = vmatprep.subr.mxu0 %v254
    %632 = vmatpush1.msra.mxu0 %v253
    %633 = vmatprep.subr.mxu0 %v246
    %634 = vmatpush1.msra.mxu0 %v245
    %635 = vmatprep.subr.mxu0 %v238
    %636 = vmatpush1.msra.mxu0 %v237
    %637 = vmatprep.subr.mxu0 0.0
    %638 = vmatpush2.msra.mxu0 0.0
    %639 = vmatprep.subr.mxu0 0.0
    %640 = vmatpush2.msra.mxu0 0.0
    %641 = vmatprep.subr.mxu0 0.0
    %642 = vmatpush2.msra.mxu0 0.0
    %643 = vmatprep.subr.mxu0 0.0
    %644 = vmatpush2.msra.mxu0 0.0
    %645 = vmatprep.subr.mxu0 0.0
    %646 = vmatpush2.msra.mxu0 0.0
    %647 = vmatprep.subr.mxu0 0.0
    %648 = vmatpush2.msra.mxu0 0.0
    %649 = vmatprep.subr.mxu0 0.0
    %650 = vmatpush2.msra.mxu0 0.0
    %651 = vmatprep.subr.mxu0 0.0
    %652 = vmatpush2.msra.mxu0 0.0
    %653 = vmatprep.subr.mxu0 0.0
    %654 = vmatpush2.msra.mxu0 0.0
    %655 = vmatprep.subr.mxu0 0.0
    %656 = vmatpush2.msra.mxu0 0.0
    %657 = vmatprep.subr.mxu0 0.0
    %658 = vmatpush2.msra.mxu0 0.0
    %659 = vmatprep.subr.mxu0 0.0
    %660 = vmatpush2.msra.mxu0 0.0
    %661 = vmatprep.subr.mxu0 0.0
    %662 = vmatpush2.msra.mxu0 0.0
    %663 = vmatprep.subr.mxu0 0.0
    %664 = vmatpush2.msra.mxu0 0.0
    %665 = vmatprep.subr.mxu0 0.0
    %666 = vmatpush2.msra.mxu0 0.0
    %667 = vmatprep.subr.mxu0 0.0
    %668 = vmatpush2.msra.mxu0 0.0
    %669 = vmatprep.mubr.f32.mxu0 0.0
    %670 = vmatmul.mubr.f32.gmra.mxu0 %v227
    %v671 = vpop.f32.mrf.mxu0
    %v672 = vadd.f32 %v382, %v671
    %v673 = vpop.f32.mrf.mxu0
    %v674 = vadd.f32 %v386, %v673
    %675 = vmatprep.mubr.f32.mxu0 0.0
    %676 = vmatmul.mubr.f32.gmra.mxu0 %v228
    %v677 = vpop.f32.mrf.mxu0
    %v678 = vadd.f32 %v382, %v677
    %v679 = vpop.f32.mrf.mxu0
    %v680 = vadd.f32 %v386, %v679
    %681 = vmatprep.mubr.f32.mxu0 0.0
    %682 = vmatmul.mubr.f32.gmra.mxu0 %v229
    %v683 = vpop.f32.mrf.mxu0
    %v684 = vadd.f32 %v382, %v683
    %v685 = vpop.f32.mrf.mxu0
    %v686 = vadd.f32 %v386, %v685
    %687 = vmatprep.mubr.f32.mxu0 0.0
    %688 = vmatmul.mubr.f32.gmra.mxu0 %v230
    %v689 = vpop.f32.mrf.mxu0
    %v690 = vadd.f32 %v382, %v689
    %v691 = vpop.f32.mrf.mxu0
    %v692 = vadd.f32 %v386, %v691
    %693 = vmatprep.mubr.f32.mxu0 0.0
    %694 = vmatmul.mubr.f32.gmra.mxu0 %v231
    %v695 = vpop.f32.mrf.mxu0
    %v696 = vadd.f32 %v382, %v695
    %v697 = vpop.f32.mrf.mxu0
    %v698 = vadd.f32 %v386, %v697
    %699 = vmatprep.mubr.f32.mxu0 0.0
    %700 = vmatmul.mubr.f32.gmra.mxu0 %v232
    %v701 = vpop.f32.mrf.mxu0
    %v702 = vadd.f32 %v382, %v701
    %v703 = vpop.f32.mrf.mxu0
    %v704 = vadd.f32 %v386, %v703
    %705 = vdwg.mxu0
    %706 = vmatprep.subr.mxu0 %v360
    %707 = vmatpush1.msra.mxu0 %v359
    %708 = vmatprep.subr.mxu0 %v352
    %709 = vmatpush1.msra.mxu0 %v351
    %710 = vmatprep.subr.mxu0 %v344
    %711 = vmatpush1.msra.mxu0 %v343
    %712 = vmatprep.subr.mxu0 %v336
    %713 = vmatpush1.msra.mxu0 %v335
    %714 = vmatprep.subr.mxu0 %v328
    %715 = vmatpush1.msra.mxu0 %v327
    %716 = vmatprep.subr.mxu0 %v320
    %717 = vmatpush1.msra.mxu0 %v319
    %718 = vmatprep.subr.mxu0 %v312
    %719 = vmatpush1.msra.mxu0 %v311
    %720 = vmatprep.subr.mxu0 %v304
    %721 = vmatpush1.msra.mxu0 %v303
    %722 = vmatprep.subr.mxu0 %v296
    %723 = vmatpush1.msra.mxu0 %v295
    %724 = vmatprep.subr.mxu0 %v288
    %725 = vmatpush1.msra.mxu0 %v287
    %726 = vmatprep.subr.mxu0 %v280
    %727 = vmatpush1.msra.mxu0 %v279
    %728 = vmatprep.subr.mxu0 %v272
    %729 = vmatpush1.msra.mxu0 %v271
    %730 = vmatprep.subr.mxu0 %v264
    %731 = vmatpush1.msra.mxu0 %v263
    %732 = vmatprep.subr.mxu0 %v256
    %733 = vmatpush1.msra.mxu0 %v255
    %734 = vmatprep.subr.mxu0 %v248
    %735 = vmatpush1.msra.mxu0 %v247
    %736 = vmatprep.subr.mxu0 %v240
    %737 = vmatpush1.msra.mxu0 %v239
    %738 = vmatprep.subr.mxu0 0.0
    %739 = vmatpush2.msra.mxu0 0.0
    %740 = vmatprep.subr.mxu0 0.0
    %741 = vmatpush2.msra.mxu0 0.0
    %742 = vmatprep.subr.mxu0 0.0
    %743 = vmatpush2.msra.mxu0 0.0
    %744 = vmatprep.subr.mxu0 0.0
    %745 = vmatpush2.msra.mxu0 0.0
    %746 = vmatprep.subr.mxu0 0.0
    %747 = vmatpush2.msra.mxu0 0.0
    %748 = vmatprep.subr.mxu0 0.0
    %749 = vmatpush2.msra.mxu0 0.0
    %750 = vmatprep.subr.mxu0 0.0
    %751 = vmatpush2.msra.mxu0 0.0
    %752 = vmatprep.subr.mxu0 0.0
    %753 = vmatpush2.msra.mxu0 0.0
    %754 = vmatprep.subr.mxu0 0.0
    %755 = vmatpush2.msra.mxu0 0.0
    %756 = vmatprep.subr.mxu0 0.0
    %757 = vmatpush2.msra.mxu0 0.0
    %758 = vmatprep.subr.mxu0 0.0
    %759 = vmatpush2.msra.mxu0 0.0
    %760 = vmatprep.subr.mxu0 0.0
    %761 = vmatpush2.msra.mxu0 0.0
    %762 = vmatprep.subr.mxu0 0.0
    %763 = vmatpush2.msra.mxu0 0.0
    %764 = vmatprep.subr.mxu0 0.0
    %765 = vmatpush2.msra.mxu0 0.0
    %766 = vmatprep.subr.mxu0 0.0
    %767 = vmatpush2.msra.mxu0 0.0
    %768 = vmatprep.subr.mxu0 0.0
    %769 = vmatpush2.msra.mxu0 0.0
    %770 = vmatprep.mubr.f32.mxu0 0.0
    %771 = vmatmul.mubr.f32.gmra.mxu0 %v227
    %v772 = vpop.f32.mrf.mxu0
    %v773 = vadd.f32 %v390, %v772
    %v774 = vpop.f32.mrf.mxu0
    %v775 = vadd.f32 %v394, %v774
    %776 = vmatprep.mubr.f32.mxu0 0.0
    %777 = vmatmul.mubr.f32.gmra.mxu0 %v228
    %v778 = vpop.f32.mrf.mxu0
    %v779 = vadd.f32 %v390, %v778
    %v780 = vpop.f32.mrf.mxu0
    %v781 = vadd.f32 %v394, %v780
    %782 = vmatprep.mubr.f32.mxu0 0.0
    %783 = vmatmul.mubr.f32.gmra.mxu0 %v229
    %v784 = vpop.f32.mrf.mxu0
    %v785 = vadd.f32 %v390, %v784
    %v786 = vpop.f32.mrf.mxu0
    %v787 = vadd.f32 %v394, %v786
    %788 = vmatprep.mubr.f32.mxu0 0.0
    %789 = vmatmul.mubr.f32.gmra.mxu0 %v230
    %v790 = vpop.f32.mrf.mxu0
    %v791 = vadd.f32 %v390, %v790
    %v792 = vpop.f32.mrf.mxu0
    %v793 = vadd.f32 %v394, %v792
    %794 = vmatprep.mubr.f32.mxu0 0.0
    %795 = vmatmul.mubr.f32.gmra.mxu0 %v231
    %v796 = vpop.f32.mrf.mxu0
    %v797 = vadd.f32 %v390, %v796
    %v798 = vpop.f32.mrf.mxu0
    %v799 = vadd.f32 %v394, %v798
    %800 = vmatprep.mubr.f32.mxu0 0.0
    %801 = vmatmul.mubr.f32.gmra.mxu0 %v232
    %v802 = vpop.f32.mrf.mxu0
    %v803 = vadd.f32 %v390, %v802
    %v804 = vpop.f32.mrf.mxu0
    %v805 = vadd.f32 %v394, %v804
    %806 = vdwg.mxu0
    %807 = vst [vmem:[#allocation2] sm:$0xff] %v470
    %808 = vst [vmem:[#allocation2 + $0x8] sm:$0xff] %v472
    %809 = vst [vmem:[#allocation2 + $0x10] sm:$0xff] %v571
    %810 = vst [vmem:[#allocation2 + $0x18] sm:$0xff] %v573
    %811 = vst [vmem:[#allocation2 + $0x20] sm:$0xff] %v672
    %812 = vst [vmem:[#allocation2 + $0x28] sm:$0xff] %v674
    %813 = vst [vmem:[#allocation2 + $0x30] sm:$0xff] %v773
    %814 = vst [vmem:[#allocation2 + $0x38] sm:$0xff] %v775
    %815 = vst [vmem:[#allocation2 + $0x40] sm:$0xff] %v476
    %816 = vst [vmem:[#allocation2 + $0x48] sm:$0xff] %v478
    %817 = vst [vmem:[#allocation2 + $0x50] sm:$0xff] %v577
    %818 = vst [vmem:[#allocation2 + $0x58] sm:$0xff] %v579
    %819 = vst [vmem:[#allocation2 + $0x60] sm:$0xff] %v678
    %820 = vst [vmem:[#allocation2 + $0x68] sm:$0xff] %v680
    %821 = vst [vmem:[#allocation2 + $0x70] sm:$0xff] %v779
    %822 = vst [vmem:[#allocation2 + $0x78] sm:$0xff] %v781
    %823 = vst [vmem:[#allocation2 + $0x80] sm:$0xff] %v482
    %824 = vst [vmem:[#allocation2 + $0x88] sm:$0xff] %v484
    %825 = vst [vmem:[#allocation2 + $0x90] sm:$0xff] %v583
    %826 = vst [vmem:[#allocation2 + $0x98] sm:$0xff] %v585
    %827 = vst [vmem:[#allocation2 + $0xa0] sm:$0xff] %v684
    %828 = vst [vmem:[#allocation2 + $0xa8] sm:$0xff] %v686
    %829 = vst [vmem:[#allocation2 + $0xb0] sm:$0xff] %v785
    %830 = vst [vmem:[#allocation2 + $0xb8] sm:$0xff] %v787
    %831 = vst [vmem:[#allocation2 + $0xc0] sm:$0xff] %v488
    %832 = vst [vmem:[#allocation2 + $0xc8] sm:$0xff] %v490
    %833 = vst [vmem:[#allocation2 + $0xd0] sm:$0xff] %v589
    %834 = vst [vmem:[#allocation2 + $0xd8] sm:$0xff] %v591
    %835 = vst [vmem:[#allocation2 + $0xe0] sm:$0xff] %v690
    %836 = vst [vmem:[#allocation2 + $0xe8] sm:$0xff] %v692
    %837 = vst [vmem:[#allocation2 + $0xf0] sm:$0xff] %v791
    %838 = vst [vmem:[#allocation2 + $0xf8] sm:$0xff] %v793
    %839 = vst [vmem:[#allocation2 + $0x100] sm:$0xff] %v494
    %840 = vst [vmem:[#allocation2 + $0x108] sm:$0xff] %v496
    %841 = vst [vmem:[#allocation2 + $0x110] sm:$0xff] %v595
    %842 = vst [vmem:[#allocation2 + $0x118] sm:$0xff] %v597
    %843 = vst [vmem:[#allocation2 + $0x120] sm:$0xff] %v696
    %844 = vst [vmem:[#allocation2 + $0x128] sm:$0xff] %v698
    %845 = vst [vmem:[#allocation2 + $0x130] sm:$0xff] %v797
    %846 = vst [vmem:[#allocation2 + $0x138] sm:$0xff] %v799
    %847 = vst [vmem:[#allocation2 + $0x140] sm:$0xff] %v500
    %848 = vst [vmem:[#allocation2 + $0x148] sm:$0xff] %v502
    %849 = vst [vmem:[#allocation2 + $0x150] sm:$0xff] %v601
    %850 = vst [vmem:[#allocation2 + $0x158] sm:$0xff] %v603
    %851 = vst [vmem:[#allocation2 + $0x160] sm:$0xff] %v702
    %852 = vst [vmem:[#allocation2 + $0x168] sm:$0xff] %v704
    %853 = vst [vmem:[#allocation2 + $0x170] sm:$0xff] %v803
    %854 = vst [vmem:[#allocation2 + $0x178] sm:$0xff] %v805
    %v855 = vld [vmem:[#allocation2] sm:$0xff]
    %v856 = vld [vmem:[#allocation2 + $0x8] sm:$0xff]
    %v857 = vld [vmem:[#allocation2 + $0x10] sm:$0xff]
    %v858 = vld [vmem:[#allocation2 + $0x18] sm:$0xff]
    %v859 = vld [vmem:[#allocation2 + $0x20] sm:$0xff]
    %v860 = vld [vmem:[#allocation2 + $0x28] sm:$0xff]
    %v861 = vld [vmem:[#allocation2 + $0x30] sm:$0xff]
    %v862 = vld [vmem:[#allocation2 + $0x38] sm:$0xff]
    %s863 = scalar_lea.vmem [#allocation2], 320
    %v864 = vld [vmem:[%s863] sm:$0xff]
    %v865 = vld [vmem:[%s863 + $0x8] sm:$0xff]
    %v866 = vld [vmem:[%s863 + $0x10] sm:$0xff]
    %v867 = vld [vmem:[%s863 + $0x18] sm:$0xff]
    %v868 = vld [vmem:[%s863 + $0x20] sm:$0xff]
    %v869 = vld [vmem:[%s863 + $0x28] sm:$0xff]
    %v870 = vld [vmem:[%s863 + $0x30] sm:$0xff]
    %v871 = vld [vmem:[%s863 + $0x38] sm:$0xff]
    %vm872 = vcmp.gt.s32.totalorder %v226, 0
    %v873 = vsel %vm872, 1, 0
    %v874 = vcvt.s32.f32 %v873
    %vm875 = vcmp.gt.s32.totalorder %v226, 5
    %v876 = vsel %vm875, 1, 0
    %v877 = vcvt.s32.f32 %v876
    %878 = vmatprep.subr.mxu0 %v159
    %879 = vmatpush1.msra.mxu0 %v158
    %880 = vmatprep.subr.mxu0 %v155
    %881 = vmatpush1.msra.mxu0 %v154
    %882 = vmatprep.subr.mxu0 %v151
    %883 = vmatpush1.msra.mxu0 %v150
    %884 = vmatprep.subr.mxu0 %v147
    %885 = vmatpush1.msra.mxu0 %v146
    %886 = vmatprep.subr.mxu0 %v143
    %887 = vmatpush1.msra.mxu0 %v142
    %888 = vmatprep.subr.mxu0 %v139
    %889 = vmatpush1.msra.mxu0 %v138
    %890 = vmatprep.subr.mxu0 %v135
    %891 = vmatpush1.msra.mxu0 %v134
    %892 = vmatprep.subr.mxu0 %v131
    %893 = vmatpush1.msra.mxu0 %v130
    %894 = vmatprep.subr.mxu0 %v127
    %895 = vmatpush1.msra.mxu0 %v126
    %896 = vmatprep.subr.mxu0 %v123
    %897 = vmatpush1.msra.mxu0 %v122
    %898 = vmatprep.subr.mxu0 %v119
    %899 = vmatpush1.msra.mxu0 %v118
    %900 = vmatprep.subr.mxu0 %v115
    %901 = vmatpush1.msra.mxu0 %v114
    %902 = vmatprep.subr.mxu0 %v111
    %903 = vmatpush1.msra.mxu0 %v110
    %904 = vmatprep.subr.mxu0 %v107
    %905 = vmatpush1.msra.mxu0 %v106
    %906 = vmatprep.subr.mxu0 %v103
    %907 = vmatpush1.msra.mxu0 %v102
    %908 = vmatprep.subr.mxu0 %v99
    %909 = vmatpush1.msra.mxu0 %v98
    %910 = vmatprep.subr.mxu0 0.0
    %911 = vmatpush2.msra.mxu0 0.0
    %912 = vmatprep.subr.mxu0 0.0
    %913 = vmatpush2.msra.mxu0 0.0
    %914 = vmatprep.subr.mxu0 0.0
    %915 = vmatpush2.msra.mxu0 0.0
    %916 = vmatprep.subr.mxu0 0.0
    %917 = vmatpush2.msra.mxu0 0.0
    %918 = vmatprep.subr.mxu0 0.0
    %919 = vmatpush2.msra.mxu0 0.0
    %920 = vmatprep.subr.mxu0 0.0
    %921 = vmatpush2.msra.mxu0 0.0
    %922 = vmatprep.subr.mxu0 0.0
    %923 = vmatpush2.msra.mxu0 0.0
    %924 = vmatprep.subr.mxu0 0.0
    %925 = vmatpush2.msra.mxu0 0.0
    %926 = vmatprep.subr.mxu0 0.0
    %927 = vmatpush2.msra.mxu0 0.0
    %928 = vmatprep.subr.mxu0 0.0
    %929 = vmatpush2.msra.mxu0 0.0
    %930 = vmatprep.subr.mxu0 0.0
    %931 = vmatpush2.msra.mxu0 0.0
    %932 = vmatprep.subr.mxu0 0.0
    %933 = vmatpush2.msra.mxu0 0.0
    %934 = vmatprep.subr.mxu0 0.0
    %935 = vmatpush2.msra.mxu0 0.0
    %936 = vmatprep.subr.mxu0 0.0
    %937 = vmatpush2.msra.mxu0 0.0
    %938 = vmatprep.subr.mxu0 0.0
    %939 = vmatpush2.msra.mxu0 0.0
    %940 = vmatprep.subr.mxu0 0.0
    %941 = vmatpush2.msra.mxu0 0.0
    %942 = vmatprep.mubr.f32.mxu0 0.0
    %943 = vmatmul.mubr.f32.gmra.mxu0 0.0
    %v944 = vpop.f32.mrf.mxu0
    %v945 = vadd.f32 0.0, %v944
    %v946 = vpop.f32.mrf.mxu0
    %v947 = vadd.f32 0.0, %v946
    %948 = vdwg.mxu0
    %949 = vmatprep.subr.mxu0 %v161
    %950 = vmatpush1.msra.mxu0 %v160
    %951 = vmatprep.subr.mxu0 %v157
    %952 = vmatpush1.msra.mxu0 %v156
    %953 = vmatprep.subr.mxu0 %v153
    %954 = vmatpush1.msra.mxu0 %v152
    %955 = vmatprep.subr.mxu0 %v149
    %956 = vmatpush1.msra.mxu0 %v148
    %957 = vmatprep.subr.mxu0 %v145
    %958 = vmatpush1.msra.mxu0 %v144
    %959 = vmatprep.subr.mxu0 %v141
    %960 = vmatpush1.msra.mxu0 %v140
    %961 = vmatprep.subr.mxu0 %v137
    %962 = vmatpush1.msra.mxu0 %v136
    %963 = vmatprep.subr.mxu0 %v133
    %964 = vmatpush1.msra.mxu0 %v132
    %965 = vmatprep.subr.mxu0 %v129
    %966 = vmatpush1.msra.mxu0 %v128
    %967 = vmatprep.subr.mxu0 %v125
    %968 = vmatpush1.msra.mxu0 %v124
    %969 = vmatprep.subr.mxu0 %v121
    %970 = vmatpush1.msra.mxu0 %v120
    %971 = vmatprep.subr.mxu0 %v117
    %972 = vmatpush1.msra.mxu0 %v116
    %973 = vmatprep.subr.mxu0 %v113
    %974 = vmatpush1.msra.mxu0 %v112
    %975 = vmatprep.subr.mxu0 %v109
    %976 = vmatpush1.msra.mxu0 %v108
    %977 = vmatprep.subr.mxu0 %v105
    %978 = vmatpush1.msra.mxu0 %v104
    %979 = vmatprep.subr.mxu0 %v101
    %980 = vmatpush1.msra.mxu0 %v100
    %981 = vmatprep.subr.mxu0 0.0
    %982 = vmatpush2.msra.mxu0 0.0
    %983 = vmatprep.subr.mxu0 0.0
    %984 = vmatpush2.msra.mxu0 0.0
    %985 = vmatprep.subr.mxu0 0.0
    %986 = vmatpush2.msra.mxu0 0.0
    %987 = vmatprep.subr.mxu0 0.0
    %988 = vmatpush2.msra.mxu0 0.0
    %989 = vmatprep.subr.mxu0 0.0
    %990 = vmatpush2.msra.mxu0 0.0
    %991 = vmatprep.subr.mxu0 0.0
    %992 = vmatpush2.msra.mxu0 0.0
    %993 = vmatprep.subr.mxu0 0.0
    %994 = vmatpush2.msra.mxu0 0.0
    %995 = vmatprep.subr.mxu0 0.0
    %996 = vmatpush2.msra.mxu0 0.0
    %997 = vmatprep.subr.mxu0 0.0
    %998 = vmatpush2.msra.mxu0 0.0
    %999 = vmatprep.subr.mxu0 0.0
    %1000 = vmatpush2.msra.mxu0 0.0
    %1001 = vmatprep.subr.mxu0 0.0
    %1002 = vmatpush2.msra.mxu0 0.0
    %1003 = vmatprep.subr.mxu0 0.0
    %1004 = vmatpush2.msra.mxu0 0.0
    %1005 = vmatprep.subr.mxu0 0.0
    %1006 = vmatpush2.msra.mxu0 0.0
    %1007 = vmatprep.subr.mxu0 0.0
    %1008 = vmatpush2.msra.mxu0 0.0
    %1009 = vmatprep.subr.mxu0 0.0
    %1010 = vmatpush2.msra.mxu0 0.0
    %1011 = vmatprep.subr.mxu0 0.0
    %1012 = vmatpush2.msra.mxu0 0.0
    %1013 = vmatprep.mubr.f32.mxu0 0.0
    %1014 = vmatmul.mubr.f32.gmra.mxu0 0.0
    %v1015 = vpop.f32.mrf.mxu0
    %v1016 = vadd.f32 0.0, %v1015
    %v1017 = vpop.f32.mrf.mxu0
    %v1018 = vadd.f32 0.0, %v1017
    %1019 = vdwg.mxu0
    %v1020 = vadd.f32 %v855, %v945
    %v1021 = vadd.f32 %v856, %v947
    %v1022 = vadd.f32 %v857, %v1016
    %v1023 = vadd.f32 %v858, %v1018
    %1024 = vmatprep.subr.mxu0 %v223
    %1025 = vmatpush1.msra.mxu0 %v222
    %1026 = vmatprep.subr.mxu0 %v219
    %1027 = vmatpush1.msra.mxu0 %v218
    %1028 = vmatprep.subr.mxu0 %v215
    %1029 = vmatpush1.msra.mxu0 %v214
    %1030 = vmatprep.subr.mxu0 %v211
    %1031 = vmatpush1.msra.mxu0 %v210
    %1032 = vmatprep.subr.mxu0 %v207
    %1033 = vmatpush1.msra.mxu0 %v206
    %1034 = vmatprep.subr.mxu0 %v203
    %1035 = vmatpush1.msra.mxu0 %v202
    %1036 = vmatprep.subr.mxu0 %v199
    %1037 = vmatpush1.msra.mxu0 %v198
    %1038 = vmatprep.subr.mxu0 %v195
    %1039 = vmatpush1.msra.mxu0 %v194
    %1040 = vmatprep.subr.mxu0 %v191
    %1041 = vmatpush1.msra.mxu0 %v190
    %1042 = vmatprep.subr.mxu0 %v187
    %1043 = vmatpush1.msra.mxu0 %v186
    %1044 = vmatprep.subr.mxu0 %v183
    %1045 = vmatpush1.msra.mxu0 %v182
    %1046 = vmatprep.subr.mxu0 %v179
    %1047 = vmatpush1.msra.mxu0 %v178
    %1048 = vmatprep.subr.mxu0 %v175
    %1049 = vmatpush1.msra.mxu0 %v174
    %1050 = vmatprep.subr.mxu0 %v171
    %1051 = vmatpush1.msra.mxu0 %v170
    %1052 = vmatprep.subr.mxu0 %v167
    %1053 = vmatpush1.msra.mxu0 %v166
    %1054 = vmatprep.subr.mxu0 %v163
    %1055 = vmatpush1.msra.mxu0 %v162
    %1056 = vmatprep.subr.mxu0 0.0
    %1057 = vmatpush2.msra.mxu0 0.0
    %1058 = vmatprep.subr.mxu0 0.0
    %1059 = vmatpush2.msra.mxu0 0.0
    %1060 = vmatprep.subr.mxu0 0.0
    %1061 = vmatpush2.msra.mxu0 0.0
    %1062 = vmatprep.subr.mxu0 0.0
    %1063 = vmatpush2.msra.mxu0 0.0
    %1064 = vmatprep.subr.mxu0 0.0
    %1065 = vmatpush2.msra.mxu0 0.0
    %1066 = vmatprep.subr.mxu0 0.0
    %1067 = vmatpush2.msra.mxu0 0.0
    %1068 = vmatprep.subr.mxu0 0.0
    %1069 = vmatpush2.msra.mxu0 0.0
    %1070 = vmatprep.subr.mxu0 0.0
    %1071 = vmatpush2.msra.mxu0 0.0
    %1072 = vmatprep.subr.mxu0 0.0
    %1073 = vmatpush2.msra.mxu0 0.0
    %1074 = vmatprep.subr.mxu0 0.0
    %1075 = vmatpush2.msra.mxu0 0.0
    %1076 = vmatprep.subr.mxu0 0.0
    %1077 = vmatpush2.msra.mxu0 0.0
    %1078 = vmatprep.subr.mxu0 0.0
    %1079 = vmatpush2.msra.mxu0 0.0
    %1080 = vmatprep.subr.mxu0 0.0
    %1081 = vmatpush2.msra.mxu0 0.0
    %1082 = vmatprep.subr.mxu0 0.0
    %1083 = vmatpush2.msra.mxu0 0.0
    %1084 = vmatprep.subr.mxu0 0.0
    %1085 = vmatpush2.msra.mxu0 0.0
    %1086 = vmatprep.subr.mxu0 0.0
    %1087 = vmatpush2.msra.mxu0 0.0
    %1088 = vmatprep.mubr.f32.mxu0 0.0
    %1089 = vmatmul.mubr.f32.gmra.mxu0 0.0
    %v1090 = vpop.f32.mrf.mxu0
    %v1091 = vadd.f32 0.0, %v1090
    %v1092 = vpop.f32.mrf.mxu0
    %v1093 = vadd.f32 0.0, %v1092
    %1094 = vdwg.mxu0
    %1095 = vmatprep.subr.mxu0 %v225
    %1096 = vmatpush1.msra.mxu0 %v224
    %1097 = vmatprep.subr.mxu0 %v221
    %1098 = vmatpush1.msra.mxu0 %v220
    %1099 = vmatprep.subr.mxu0 %v217
    %1100 = vmatpush1.msra.mxu0 %v216
    %1101 = vmatprep.subr.mxu0 %v213
    %1102 = vmatpush1.msra.mxu0 %v212
    %1103 = vmatprep.subr.mxu0 %v209
    %1104 = vmatpush1.msra.mxu0 %v208
    %1105 = vmatprep.subr.mxu0 %v205
    %1106 = vmatpush1.msra.mxu0 %v204
    %1107 = vmatprep.subr.mxu0 %v201
    %1108 = vmatpush1.msra.mxu0 %v200
    %1109 = vmatprep.subr.mxu0 %v197
    %1110 = vmatpush1.msra.mxu0 %v196
    %1111 = vmatprep.subr.mxu0 %v193
    %1112 = vmatpush1.msra.mxu0 %v192
    %1113 = vmatprep.subr.mxu0 %v189
    %1114 = vmatpush1.msra.mxu0 %v188
    %1115 = vmatprep.subr.mxu0 %v185
    %1116 = vmatpush1.msra.mxu0 %v184
    %1117 = vmatprep.subr.mxu0 %v181
    %1118 = vmatpush1.msra.mxu0 %v180
    %1119 = vmatprep.subr.mxu0 %v177
    %1120 = vmatpush1.msra.mxu0 %v176
    %1121 = vmatprep.subr.mxu0 %v173
    %1122 = vmatpush1.msra.mxu0 %v172
    %1123 = vmatprep.subr.mxu0 %v169
    %1124 = vmatpush1.msra.mxu0 %v168
    %1125 = vmatprep.subr.mxu0 %v165
    %1126 = vmatpush1.msra.mxu0 %v164
    %1127 = vmatprep.subr.mxu0 0.0
    %1128 = vmatpush2.msra.mxu0 0.0
    %1129 = vmatprep.subr.mxu0 0.0
    %1130 = vmatpush2.msra.mxu0 0.0
    %1131 = vmatprep.subr.mxu0 0.0
    %1132 = vmatpush2.msra.mxu0 0.0
    %1133 = vmatprep.subr.mxu0 0.0
    %1134 = vmatpush2.msra.mxu0 0.0
    %1135 = vmatprep.subr.mxu0 0.0
    %1136 = vmatpush2.msra.mxu0 0.0
    %1137 = vmatprep.subr.mxu0 0.0
    %1138 = vmatpush2.msra.mxu0 0.0
    %1139 = vmatprep.subr.mxu0 0.0
    %1140 = vmatpush2.msra.mxu0 0.0
    %1141 = vmatprep.subr.mxu0 0.0
    %1142 = vmatpush2.msra.mxu0 0.0
    %1143 = vmatprep.subr.mxu0 0.0
    %1144 = vmatpush2.msra.mxu0 0.0
    %1145 = vmatprep.subr.mxu0 0.0
    %1146 = vmatpush2.msra.mxu0 0.0
    %1147 = vmatprep.subr.mxu0 0.0
    %1148 = vmatpush2.msra.mxu0 0.0
    %1149 = vmatprep.subr.mxu0 0.0
    %1150 = vmatpush2.msra.mxu0 0.0
    %1151 = vmatprep.subr.mxu0 0.0
    %1152 = vmatpush2.msra.mxu0 0.0
    %1153 = vmatprep.subr.mxu0 0.0
    %1154 = vmatpush2.msra.mxu0 0.0
    %1155 = vmatprep.subr.mxu0 0.0
    %1156 = vmatpush2.msra.mxu0 0.0
    %1157 = vmatprep.subr.mxu0 0.0
    %1158 = vmatpush2.msra.mxu0 0.0
    %1159 = vmatprep.mubr.f32.mxu0 0.0
    %1160 = vmatmul.mubr.f32.gmra.mxu0 0.0
    %v1161 = vpop.f32.mrf.mxu0
    %v1162 = vadd.f32 0.0, %v1161
    %v1163 = vpop.f32.mrf.mxu0
    %v1164 = vadd.f32 0.0, %v1163
    %1165 = vdwg.mxu0
    %v1166 = vadd.f32 %v868, %v1091
    %v1167 = vadd.f32 %v869, %v1093
    %v1168 = vadd.f32 %v870, %v1162
    %v1169 = vadd.f32 %v871, %v1164
    %v1170 = vxor.u32 %v1020, 2147483648
    %v1171 = vmul.f32 %v1170, 1.442695
    %v1172 = vpow.pop %v1171
    %v1173 = vadd.f32 %v1172, 1.0
    %v1174 = vrcp.pop %v1173
    %v1175 = vmul.f32 1.0, %v1174
    %v1176 = vxor.u32 %v1021, 2147483648
    %v1177 = vmul.f32 %v1176, 1.442695
    %v1178 = vpow.pop %v1177
    %v1179 = vadd.f32 %v1178, 1.0
    %v1180 = vrcp.pop %v1179
    %v1181 = vmul.f32 1.0, %v1180
    %v1182 = vtanh.pop %v1022
    %v1183 = vxor.u32 %v1023, 2147483648
    %v1184 = vmul.f32 %v1183, 1.442695
    %v1185 = vpow.pop %v1184
    %v1186 = vadd.f32 %v1185, 1.0
    %v1187 = vrcp.pop %v1186
    %v1188 = vmul.f32 1.0, %v1187
    %v1189 = vmul.f32 %v1181, 0.0
    %v1190 = vmul.f32 %v1175, %v1182
    %v1191 = vadd.f32 %v1189, %v1190
    %v1192 = vtanh.pop %v1191
    %v1193 = vmul.f32 %v1188, %v1192
    %1195 = vset.pattern.permute.xlu0 0
    %1196 = vperm.xlu0 %1195, %v874
    %v1197 = vpop.permute.xlu0 %1196
    %v1199 = vmul.f32 %v1197, %v1193
    %v1200 = vsub.f32 1.0, %v874
    %1202 = vset.pattern.permute.xlu0 0
    %1203 = vperm.xlu0 %1202, %v1200
    %v1204 = vpop.permute.xlu0 %1203
    %v1206 = vmul.f32 %v1204, 0.0
    %v1207 = vadd.f32 %v1199, %v1206
    %v1208 = vmul.f32 %v1197, %v1191
    %v1209 = vadd.f32 %v1208, %v1206
    %v1210 = vxor.u32 %v1166, 2147483648
    %v1211 = vmul.f32 %v1210, 1.442695
    %v1212 = vpow.pop %v1211
    %v1213 = vadd.f32 %v1212, 1.0
    %v1214 = vrcp.pop %v1213
    %v1215 = vmul.f32 1.0, %v1214
    %v1216 = vxor.u32 %v1167, 2147483648
    %v1217 = vmul.f32 %v1216, 1.442695
    %v1218 = vpow.pop %v1217
    %v1219 = vadd.f32 %v1218, 1.0
    %v1220 = vrcp.pop %v1219
    %v1221 = vmul.f32 1.0, %v1220
    %v1222 = vtanh.pop %v1168
    %v1223 = vxor.u32 %v1169, 2147483648
    %v1224 = vmul.f32 %v1223, 1.442695
    %v1225 = vpow.pop %v1224
    %v1226 = vadd.f32 %v1225, 1.0
    %v1227 = vrcp.pop %v1226
    %v1228 = vmul.f32 1.0, %v1227
    %v1229 = vmul.f32 %v1221, 0.0
    %v1230 = vmul.f32 %v1215, %v1222
    %v1231 = vadd.f32 %v1229, %v1230
    %v1232 = vtanh.pop %v1231
    %v1233 = vmul.f32 %v1228, %v1232
    %1235 = vset.pattern.permute.xlu0 0
    %1236 = vperm.xlu0 %1235, %v877
    %v1237 = vpop.permute.xlu0 %1236
    %v1239 = vmul.f32 %v1237, %v1233
    %v1240 = vsub.f32 1.0, %v877
    %1242 = vset.pattern.permute.xlu0 0
    %1243 = vperm.xlu0 %1242, %v1240
    %v1244 = vpop.permute.xlu0 %1243
    %v1246 = vmul.f32 %v1244, 0.0
    %v1247 = vadd.f32 %v1239, %v1246
    %v1248 = vmul.f32 %v1237, %v1231
    %v1249 = vadd.f32 %v1248, %v1246
    %s1250 = scalar_lea.vmem [#allocation2], 64
    %v1251 = vld [vmem:[%s1250] sm:$0xff]
    %v1252 = vld [vmem:[%s1250 + $0x8] sm:$0xff]
    %v1253 = vld [vmem:[%s1250 + $0x10] sm:$0xff]
    %v1254 = vld [vmem:[%s1250 + $0x18] sm:$0xff]
    %v1255 = vld [vmem:[%s1250 + $0x20] sm:$0xff]
    %v1256 = vld [vmem:[%s1250 + $0x28] sm:$0xff]
    %v1257 = vld [vmem:[%s1250 + $0x30] sm:$0xff]
    %v1258 = vld [vmem:[%s1250 + $0x38] sm:$0xff]
    %s1259 = scalar_lea.vmem [#allocation2], 256
    %v1260 = vld [vmem:[%s1259] sm:$0xff]
    %v1261 = vld [vmem:[%s1259 + $0x8] sm:$0xff]
    %v1262 = vld [vmem:[%s1259 + $0x10] sm:$0xff]
    %v1263 = vld [vmem:[%s1259 + $0x18] sm:$0xff]
    %v1264 = vld [vmem:[%s1259 + $0x20] sm:$0xff]
    %v1265 = vld [vmem:[%s1259 + $0x28] sm:$0xff]
    %v1266 = vld [vmem:[%s1259 + $0x30] sm:$0xff]
    %v1267 = vld [vmem:[%s1259 + $0x38] sm:$0xff]
    %vm1268 = vcmp.gt.s32.totalorder %v226, 1
    %v1269 = vsel %vm1268, 1, 0
    %v1270 = vcvt.s32.f32 %v1269
    %vm1271 = vcmp.gt.s32.totalorder %v226, 4
    %v1272 = vsel %vm1271, 1, 0
    %v1273 = vcvt.s32.f32 %v1272
    %1274 = vmatprep.subr.mxu0 %v159
    %1275 = vmatpush1.msra.mxu0 %v158
    %1276 = vmatprep.subr.mxu0 %v155
    %1277 = vmatpush1.msra.mxu0 %v154
    %1278 = vmatprep.subr.mxu0 %v151
    %1279 = vmatpush1.msra.mxu0 %v150
    %1280 = vmatprep.subr.mxu0 %v147
    %1281 = vmatpush1.msra.mxu0 %v146
    %1282 = vmatprep.subr.mxu0 %v143
    %1283 = vmatpush1.msra.mxu0 %v142
    %1284 = vmatprep.subr.mxu0 %v139
    %1285 = vmatpush1.msra.mxu0 %v138
    %1286 = vmatprep.subr.mxu0 %v135
    %1287 = vmatpush1.msra.mxu0 %v134
    %1288 = vmatprep.subr.mxu0 %v131
    %1289 = vmatpush1.msra.mxu0 %v130
    %1290 = vmatprep.subr.mxu0 %v127
    %1291 = vmatpush1.msra.mxu0 %v126
    %1292 = vmatprep.subr.mxu0 %v123
    %1293 = vmatpush1.msra.mxu0 %v122
    %1294 = vmatprep.subr.mxu0 %v119
    %1295 = vmatpush1.msra.mxu0 %v118
    %1296 = vmatprep.subr.mxu0 %v115
    %1297 = vmatpush1.msra.mxu0 %v114
    %1298 = vmatprep.subr.mxu0 %v111
    %1299 = vmatpush1.msra.mxu0 %v110
    %1300 = vmatprep.subr.mxu0 %v107
    %1301 = vmatpush1.msra.mxu0 %v106
    %1302 = vmatprep.subr.mxu0 %v103
    %1303 = vmatpush1.msra.mxu0 %v102
    %1304 = vmatprep.subr.mxu0 %v99
    %1305 = vmatpush1.msra.mxu0 %v98
    %1306 = vmatprep.subr.mxu0 0.0
    %1307 = vmatpush2.msra.mxu0 0.0
    %1308 = vmatprep.subr.mxu0 0.0
    %1309 = vmatpush2.msra.mxu0 0.0
    %1310 = vmatprep.subr.mxu0 0.0
    %1311 = vmatpush2.msra.mxu0 0.0
    %1312 = vmatprep.subr.mxu0 0.0
    %1313 = vmatpush2.msra.mxu0 0.0
    %1314 = vmatprep.subr.mxu0 0.0
    %1315 = vmatpush2.msra.mxu0 0.0
    %1316 = vmatprep.subr.mxu0 0.0
    %1317 = vmatpush2.msra.mxu0 0.0
    %1318 = vmatprep.subr.mxu0 0.0
    %1319 = vmatpush2.msra.mxu0 0.0
    %1320 = vmatprep.subr.mxu0 0.0
    %1321 = vmatpush2.msra.mxu0 0.0
    %1322 = vmatprep.subr.mxu0 0.0
    %1323 = vmatpush2.msra.mxu0 0.0
    %1324 = vmatprep.subr.mxu0 0.0
    %1325 = vmatpush2.msra.mxu0 0.0
    %1326 = vmatprep.subr.mxu0 0.0
    %1327 = vmatpush2.msra.mxu0 0.0
    %1328 = vmatprep.subr.mxu0 0.0
    %1329 = vmatpush2.msra.mxu0 0.0
    %1330 = vmatprep.subr.mxu0 0.0
    %1331 = vmatpush2.msra.mxu0 0.0
    %1332 = vmatprep.subr.mxu0 0.0
    %1333 = vmatpush2.msra.mxu0 0.0
    %1334 = vmatprep.subr.mxu0 0.0
    %1335 = vmatpush2.msra.mxu0 0.0
    %1336 = vmatprep.subr.mxu0 0.0
    %1337 = vmatpush2.msra.mxu0 0.0
    %1338 = vmatprep.mubr.f32.mxu0 0.0
    %1339 = vmatmul.mubr.f32.gmra.mxu0 %v1207
    %v1340 = vpop.f32.mrf.mxu0
    %v1341 = vadd.f32 0.0, %v1340
    %v1342 = vpop.f32.mrf.mxu0
    %v1343 = vadd.f32 0.0, %v1342
    %1344 = vdwg.mxu0
    %1345 = vmatprep.subr.mxu0 %v161
    %1346 = vmatpush1.msra.mxu0 %v160
    %1347 = vmatprep.subr.mxu0 %v157
    %1348 = vmatpush1.msra.mxu0 %v156
    %1349 = vmatprep.subr.mxu0 %v153
    %1350 = vmatpush1.msra.mxu0 %v152
    %1351 = vmatprep.subr.mxu0 %v149
    %1352 = vmatpush1.msra.mxu0 %v148
    %1353 = vmatprep.subr.mxu0 %v145
    %1354 = vmatpush1.msra.mxu0 %v144
    %1355 = vmatprep.subr.mxu0 %v141
    %1356 = vmatpush1.msra.mxu0 %v140
    %1357 = vmatprep.subr.mxu0 %v137
    %1358 = vmatpush1.msra.mxu0 %v136
    %1359 = vmatprep.subr.mxu0 %v133
    %1360 = vmatpush1.msra.mxu0 %v132
    %1361 = vmatprep.subr.mxu0 %v129
    %1362 = vmatpush1.msra.mxu0 %v128
    %1363 = vmatprep.subr.mxu0 %v125
    %1364 = vmatpush1.msra.mxu0 %v124
    %1365 = vmatprep.subr.mxu0 %v121
    %1366 = vmatpush1.msra.mxu0 %v120
    %1367 = vmatprep.subr.mxu0 %v117
    %1368 = vmatpush1.msra.mxu0 %v116
    %1369 = vmatprep.subr.mxu0 %v113
    %1370 = vmatpush1.msra.mxu0 %v112
    %1371 = vmatprep.subr.mxu0 %v109
    %1372 = vmatpush1.msra.mxu0 %v108
    %1373 = vmatprep.subr.mxu0 %v105
    %1374 = vmatpush1.msra.mxu0 %v104
    %1375 = vmatprep.subr.mxu0 %v101
    %1376 = vmatpush1.msra.mxu0 %v100
    %1377 = vmatprep.subr.mxu0 0.0
    %1378 = vmatpush2.msra.mxu0 0.0
    %1379 = vmatprep.subr.mxu0 0.0
    %1380 = vmatpush2.msra.mxu0 0.0
    %1381 = vmatprep.subr.mxu0 0.0
    %1382 = vmatpush2.msra.mxu0 0.0
    %1383 = vmatprep.subr.mxu0 0.0
    %1384 = vmatpush2.msra.mxu0 0.0
    %1385 = vmatprep.subr.mxu0 0.0
    %1386 = vmatpush2.msra.mxu0 0.0
    %1387 = vmatprep.subr.mxu0 0.0
    %1388 = vmatpush2.msra.mxu0 0.0
    %1389 = vmatprep.subr.mxu0 0.0
    %1390 = vmatpush2.msra.mxu0 0.0
    %1391 = vmatprep.subr.mxu0 0.0
    %1392 = vmatpush2.msra.mxu0 0.0
    %1393 = vmatprep.subr.mxu0 0.0
    %1394 = vmatpush2.msra.mxu0 0.0
    %1395 = vmatprep.subr.mxu0 0.0
    %1396 = vmatpush2.msra.mxu0 0.0
    %1397 = vmatprep.subr.mxu0 0.0
    %1398 = vmatpush2.msra.mxu0 0.0
    %1399 = vmatprep.subr.mxu0 0.0
    %1400 = vmatpush2.msra.mxu0 0.0
    %1401 = vmatprep.subr.mxu0 0.0
    %1402 = vmatpush2.msra.mxu0 0.0
    %1403 = vmatprep.subr.mxu0 0.0
    %1404 = vmatpush2.msra.mxu0 0.0
    %1405 = vmatprep.subr.mxu0 0.0
    %1406 = vmatpush2.msra.mxu0 0.0
    %1407 = vmatprep.subr.mxu0 0.0
    %1408 = vmatpush2.msra.mxu0 0.0
    %1409 = vmatprep.mubr.f32.mxu0 0.0
    %1410 = vmatmul.mubr.f32.gmra.mxu0 %v1207
    %v1411 = vpop.f32.mrf.mxu0
    %v1412 = vadd.f32 0.0, %v1411
    %v1413 = vpop.f32.mrf.mxu0
    %v1414 = vadd.f32 0.0, %v1413
    %1415 = vdwg.mxu0
    %v1416 = vadd.f32 %v1251, %v1341
    %v1417 = vadd.f32 %v1252, %v1343
    %v1418 = vadd.f32 %v1253, %v1412
    %v1419 = vadd.f32 %v1254, %v1414
    %1420 = vmatprep.subr.mxu0 %v223
    %1421 = vmatpush1.msra.mxu0 %v222
    %1422 = vmatprep.subr.mxu0 %v219
    %1423 = vmatpush1.msra.mxu0 %v218
    %1424 = vmatprep.subr.mxu0 %v215
    %1425 = vmatpush1.msra.mxu0 %v214
    %1426 = vmatprep.subr.mxu0 %v211
    %1427 = vmatpush1.msra.mxu0 %v210
    %1428 = vmatprep.subr.mxu0 %v207
    %1429 = vmatpush1.msra.mxu0 %v206
    %1430 = vmatprep.subr.mxu0 %v203
    %1431 = vmatpush1.msra.mxu0 %v202
    %1432 = vmatprep.subr.mxu0 %v199
    %1433 = vmatpush1.msra.mxu0 %v198
    %1434 = vmatprep.subr.mxu0 %v195
    %1435 = vmatpush1.msra.mxu0 %v194
    %1436 = vmatprep.subr.mxu0 %v191
    %1437 = vmatpush1.msra.mxu0 %v190
    %1438 = vmatprep.subr.mxu0 %v187
    %1439 = vmatpush1.msra.mxu0 %v186
    %1440 = vmatprep.subr.mxu0 %v183
    %1441 = vmatpush1.msra.mxu0 %v182
    %1442 = vmatprep.subr.mxu0 %v179
    %1443 = vmatpush1.msra.mxu0 %v178
    %1444 = vmatprep.subr.mxu0 %v175
    %1445 = vmatpush1.msra.mxu0 %v174
    %1446 = vmatprep.subr.mxu0 %v171
    %1447 = vmatpush1.msra.mxu0 %v170
    %1448 = vmatprep.subr.mxu0 %v167
    %1449 = vmatpush1.msra.mxu0 %v166
    %1450 = vmatprep.subr.mxu0 %v163
    %1451 = vmatpush1.msra.mxu0 %v162
    %1452 = vmatprep.subr.mxu0 0.0
    %1453 = vmatpush2.msra.mxu0 0.0
    %1454 = vmatprep.subr.mxu0 0.0
    %1455 = vmatpush2.msra.mxu0 0.0
    %1456 = vmatprep.subr.mxu0 0.0
    %1457 = vmatpush2.msra.mxu0 0.0
    %1458 = vmatprep.subr.mxu0 0.0
    %1459 = vmatpush2.msra.mxu0 0.0
    %1460 = vmatprep.subr.mxu0 0.0
    %1461 = vmatpush2.msra.mxu0 0.0
    %1462 = vmatprep.subr.mxu0 0.0
    %1463 = vmatpush2.msra.mxu0 0.0
    %1464 = vmatprep.subr.mxu0 0.0
    %1465 = vmatpush2.msra.mxu0 0.0
    %1466 = vmatprep.subr.mxu0 0.0
    %1467 = vmatpush2.msra.mxu0 0.0
    %1468 = vmatprep.subr.mxu0 0.0
    %1469 = vmatpush2.msra.mxu0 0.0
    %1470 = vmatprep.subr.mxu0 0.0
    %1471 = vmatpush2.msra.mxu0 0.0
    %1472 = vmatprep.subr.mxu0 0.0
    %1473 = vmatpush2.msra.mxu0 0.0
    %1474 = vmatprep.subr.mxu0 0.0
    %1475 = vmatpush2.msra.mxu0 0.0
    %1476 = vmatprep.subr.mxu0 0.0
    %1477 = vmatpush2.msra.mxu0 0.0
    %1478 = vmatprep.subr.mxu0 0.0
    %1479 = vmatpush2.msra.mxu0 0.0
    %1480 = vmatprep.subr.mxu0 0.0
    %1481 = vmatpush2.msra.mxu0 0.0
    %1482 = vmatprep.subr.mxu0 0.0
    %1483 = vmatpush2.msra.mxu0 0.0
    %1484 = vmatprep.mubr.f32.mxu0 0.0
    %1485 = vmatmul.mubr.f32.gmra.mxu0 %v1247
    %v1486 = vpop.f32.mrf.mxu0
    %v1487 = vadd.f32 0.0, %v1486
    %v1488 = vpop.f32.mrf.mxu0
    %v1489 = vadd.f32 0.0, %v1488
    %1490 = vdwg.mxu0
    %1491 = vmatprep.subr.mxu0 %v225
    %1492 = vmatpush1.msra.mxu0 %v224
    %1493 = vmatprep.subr.mxu0 %v221
    %1494 = vmatpush1.msra.mxu0 %v220
    %1495 = vmatprep.subr.mxu0 %v217
    %1496 = vmatpush1.msra.mxu0 %v216
    %1497 = vmatprep.subr.mxu0 %v213
    %1498 = vmatpush1.msra.mxu0 %v212
    %1499 = vmatprep.subr.mxu0 %v209
    %1500 = vmatpush1.msra.mxu0 %v208
    %1501 = vmatprep.subr.mxu0 %v205
    %1502 = vmatpush1.msra.mxu0 %v204
    %1503 = vmatprep.subr.mxu0 %v201
    %1504 = vmatpush1.msra.mxu0 %v200
    %1505 = vmatprep.subr.mxu0 %v197
    %1506 = vmatpush1.msra.mxu0 %v196
    %1507 = vmatprep.subr.mxu0 %v193
    %1508 = vmatpush1.msra.mxu0 %v192
    %1509 = vmatprep.subr.mxu0 %v189
    %1510 = vmatpush1.msra.mxu0 %v188
    %1511 = vmatprep.subr.mxu0 %v185
    %1512 = vmatpush1.msra.mxu0 %v184
    %1513 = vmatprep.subr.mxu0 %v181
    %1514 = vmatpush1.msra.mxu0 %v180
    %1515 = vmatprep.subr.mxu0 %v177
    %1516 = vmatpush1.msra.mxu0 %v176
    %1517 = vmatprep.subr.mxu0 %v173
    %1518 = vmatpush1.msra.mxu0 %v172
    %1519 = vmatprep.subr.mxu0 %v169
    %1520 = vmatpush1.msra.mxu0 %v168
    %1521 = vmatprep.subr.mxu0 %v165
    %1522 = vmatpush1.msra.mxu0 %v164
    %1523 = vmatprep.subr.mxu0 0.0
    %1524 = vmatpush2.msra.mxu0 0.0
    %1525 = vmatprep.subr.mxu0 0.0
    %1526 = vmatpush2.msra.mxu0 0.0
    %1527 = vmatprep.subr.mxu0 0.0
    %1528 = vmatpush2.msra.mxu0 0.0
    %1529 = vmatprep.subr.mxu0 0.0
    %1530 = vmatpush2.msra.mxu0 0.0
    %1531 = vmatprep.subr.mxu0 0.0
    %1532 = vmatpush2.msra.mxu0 0.0
    %1533 = vmatprep.subr.mxu0 0.0
    %1534 = vmatpush2.msra.mxu0 0.0
    %1535 = vmatprep.subr.mxu0 0.0
    %1536 = vmatpush2.msra.mxu0 0.0
    %1537 = vmatprep.subr.mxu0 0.0
    %1538 = vmatpush2.msra.mxu0 0.0
    %1539 = vmatprep.subr.mxu0 0.0
    %1540 = vmatpush2.msra.mxu0 0.0
    %1541 = vmatprep.subr.mxu0 0.0
    %1542 = vmatpush2.msra.mxu0 0.0
    %1543 = vmatprep.subr.mxu0 0.0
    %1544 = vmatpush2.msra.mxu0 0.0
    %1545 = vmatprep.subr.mxu0 0.0
    %1546 = vmatpush2.msra.mxu0 0.0
    %1547 = vmatprep.subr.mxu0 0.0
    %1548 = vmatpush2.msra.mxu0 0.0
    %1549 = vmatprep.subr.mxu0 0.0
    %1550 = vmatpush2.msra.mxu0 0.0
    %1551 = vmatprep.subr.mxu0 0.0
    %1552 = vmatpush2.msra.mxu0 0.0
    %1553 = vmatprep.subr.mxu0 0.0
    %1554 = vmatpush2.msra.mxu0 0.0
    %1555 = vmatprep.mubr.f32.mxu0 0.0
    %1556 = vmatmul.mubr.f32.gmra.mxu0 %v1247
    %v1557 = vpop.f32.mrf.mxu0
    %v1558 = vadd.f32 0.0, %v1557
    %v1559 = vpop.f32.mrf.mxu0
    %v1560 = vadd.f32 0.0, %v1559
    %1561 = vdwg.mxu0
    %v1562 = vadd.f32 %v1264, %v1487
    %v1563 = vadd.f32 %v1265, %v1489
    %v1564 = vadd.f32 %v1266, %v1558
    %v1565 = vadd.f32 %v1267, %v1560
    %v1566 = vxor.u32 %v1416, 2147483648
    %v1567 = vmul.f32 %v1566, 1.442695
    %v1568 = vpow.pop %v1567
    %v1569 = vadd.f32 %v1568, 1.0
    %v1570 = vrcp.pop %v1569
    %v1571 = vmul.f32 1.0, %v1570
    %v1572 = vxor.u32 %v1417, 2147483648
    %v1573 = vmul.f32 %v1572, 1.442695
    %v1574 = vpow.pop %v1573
    %v1575 = vadd.f32 %v1574, 1.0
    %v1576 = vrcp.pop %v1575
    %v1577 = vmul.f32 1.0, %v1576
    %v1578 = vtanh.pop %v1418
    %v1579 = vxor.u32 %v1419, 2147483648
    %v1580 = vmul.f32 %v1579, 1.442695
    %v1581 = vpow.pop %v1580
    %v1582 = vadd.f32 %v1581, 1.0
    %v1583 = vrcp.pop %v1582
    %v1584 = vmul.f32 1.0, %v1583
    %v1585 = vmul.f32 %v1577, %v1209
    %v1586 = vmul.f32 %v1571, %v1578
    %v1587 = vadd.f32 %v1585, %v1586
    %v1588 = vtanh.pop %v1587
    %v1589 = vmul.f32 %v1584, %v1588
    %1591 = vset.pattern.permute.xlu0 0
    %1592 = vperm.xlu0 %1591, %v1270
    %v1593 = vpop.permute.xlu0 %1592
    %v1595 = vmul.f32 %v1593, %v1589
    %v1596 = vsub.f32 1.0, %v1270
    %1598 = vset.pattern.permute.xlu0 0
    %1599 = vperm.xlu0 %1598, %v1596
    %v1600 = vpop.permute.xlu0 %1599
    %v1602 = vmul.f32 %v1600, %v1207
    %v1603 = vadd.f32 %v1595, %v1602
    %v1604 = vmul.f32 %v1593, %v1587
    %v1605 = vmul.f32 %v1600, %v1209
    %v1606 = vadd.f32 %v1604, %v1605
    %v1607 = vxor.u32 %v1562, 2147483648
    %v1608 = vmul.f32 %v1607, 1.442695
    %v1609 = vpow.pop %v1608
    %v1610 = vadd.f32 %v1609, 1.0
    %v1611 = vrcp.pop %v1610
    %v1612 = vmul.f32 1.0, %v1611
    %v1613 = vxor.u32 %v1563, 2147483648
    %v1614 = vmul.f32 %v1613, 1.442695
    %v1615 = vpow.pop %v1614
    %v1616 = vadd.f32 %v1615, 1.0
    %v1617 = vrcp.pop %v1616
    %v1618 = vmul.f32 1.0, %v1617
    %v1619 = vtanh.pop %v1564
    %v1620 = vxor.u32 %v1565, 2147483648
    %v1621 = vmul.f32 %v1620, 1.442695
    %v1622 = vpow.pop %v1621
    %v1623 = vadd.f32 %v1622, 1.0
    %v1624 = vrcp.pop %v1623
    %v1625 = vmul.f32 1.0, %v1624
    %v1626 = vmul.f32 %v1618, %v1249
    %v1627 = vmul.f32 %v1612, %v1619
    %v1628 = vadd.f32 %v1626, %v1627
    %v1629 = vtanh.pop %v1628
    %v1630 = vmul.f32 %v1625, %v1629
    %1632 = vset.pattern.permute.xlu0 0
    %1633 = vperm.xlu0 %1632, %v1273
    %v1634 = vpop.permute.xlu0 %1633
    %v1636 = vmul.f32 %v1634, %v1630
    %v1637 = vsub.f32 1.0, %v1273
    %1639 = vset.pattern.permute.xlu0 0
    %1640 = vperm.xlu0 %1639, %v1637
    %v1641 = vpop.permute.xlu0 %1640
    %v1643 = vmul.f32 %v1641, %v1247
    %v1644 = vadd.f32 %v1636, %v1643
    %v1645 = vmul.f32 %v1634, %v1628
    %v1646 = vmul.f32 %v1641, %v1249
    %v1647 = vadd.f32 %v1645, %v1646
    %s1648 = scalar_lea.vmem [#allocation2], 128
    %v1649 = vld [vmem:[%s1648] sm:$0xff]
    %v1650 = vld [vmem:[%s1648 + $0x8] sm:$0xff]
    %v1651 = vld [vmem:[%s1648 + $0x10] sm:$0xff]
    %v1652 = vld [vmem:[%s1648 + $0x18] sm:$0xff]
    %v1653 = vld [vmem:[%s1648 + $0x20] sm:$0xff]
    %v1654 = vld [vmem:[%s1648 + $0x28] sm:$0xff]
    %v1655 = vld [vmem:[%s1648 + $0x30] sm:$0xff]
    %v1656 = vld [vmem:[%s1648 + $0x38] sm:$0xff]
    %s1657 = scalar_lea.vmem [#allocation2], 192
    %v1658 = vld [vmem:[%s1657] sm:$0xff]
    %v1659 = vld [vmem:[%s1657 + $0x8] sm:$0xff]
    %v1660 = vld [vmem:[%s1657 + $0x10] sm:$0xff]
    %v1661 = vld [vmem:[%s1657 + $0x18] sm:$0xff]
    %v1662 = vld [vmem:[%s1657 + $0x20] sm:$0xff]
    %v1663 = vld [vmem:[%s1657 + $0x28] sm:$0xff]
    %v1664 = vld [vmem:[%s1657 + $0x30] sm:$0xff]
    %v1665 = vld [vmem:[%s1657 + $0x38] sm:$0xff]
    %vm1666 = vcmp.gt.s32.totalorder %v226, 2
    %v1667 = vsel %vm1666, 1, 0
    %v1668 = vcvt.s32.f32 %v1667
    %vm1669 = vcmp.gt.s32.totalorder %v226, 3
    %v1670 = vsel %vm1669, 1, 0
    %v1671 = vcvt.s32.f32 %v1670
    %1672 = vmatprep.subr.mxu0 %v159
    %1673 = vmatpush1.msra.mxu0 %v158
    %1674 = vmatprep.subr.mxu0 %v155
    %1675 = vmatpush1.msra.mxu0 %v154
    %1676 = vmatprep.subr.mxu0 %v151
    %1677 = vmatpush1.msra.mxu0 %v150
    %1678 = vmatprep.subr.mxu0 %v147
    %1679 = vmatpush1.msra.mxu0 %v146
    %1680 = vmatprep.subr.mxu0 %v143
    %1681 = vmatpush1.msra.mxu0 %v142
    %1682 = vmatprep.subr.mxu0 %v139
    %1683 = vmatpush1.msra.mxu0 %v138
    %1684 = vmatprep.subr.mxu0 %v135
    %1685 = vmatpush1.msra.mxu0 %v134
    %1686 = vmatprep.subr.mxu0 %v131
    %1687 = vmatpush1.msra.mxu0 %v130
    %1688 = vmatprep.subr.mxu0 %v127
    %1689 = vmatpush1.msra.mxu0 %v126
    %1690 = vmatprep.subr.mxu0 %v123
    %1691 = vmatpush1.msra.mxu0 %v122
    %1692 = vmatprep.subr.mxu0 %v119
    %1693 = vmatpush1.msra.mxu0 %v118
    %1694 = vmatprep.subr.mxu0 %v115
    %1695 = vmatpush1.msra.mxu0 %v114
    %1696 = vmatprep.subr.mxu0 %v111
    %1697 = vmatpush1.msra.mxu0 %v110
    %1698 = vmatprep.subr.mxu0 %v107
    %1699 = vmatpush1.msra.mxu0 %v106
    %1700 = vmatprep.subr.mxu0 %v103
    %1701 = vmatpush1.msra.mxu0 %v102
    %1702 = vmatprep.subr.mxu0 %v99
    %1703 = vmatpush1.msra.mxu0 %v98
    %1704 = vmatprep.subr.mxu0 0.0
    %1705 = vmatpush2.msra.mxu0 0.0
    %1706 = vmatprep.subr.mxu0 0.0
    %1707 = vmatpush2.msra.mxu0 0.0
    %1708 = vmatprep.subr.mxu0 0.0
    %1709 = vmatpush2.msra.mxu0 0.0
    %1710 = vmatprep.subr.mxu0 0.0
    %1711 = vmatpush2.msra.mxu0 0.0
    %1712 = vmatprep.subr.mxu0 0.0
    %1713 = vmatpush2.msra.mxu0 0.0
    %1714 = vmatprep.subr.mxu0 0.0
    %1715 = vmatpush2.msra.mxu0 0.0
    %1716 = vmatprep.subr.mxu0 0.0
    %1717 = vmatpush2.msra.mxu0 0.0
    %1718 = vmatprep.subr.mxu0 0.0
    %1719 = vmatpush2.msra.mxu0 0.0
    %1720 = vmatprep.subr.mxu0 0.0
    %1721 = vmatpush2.msra.mxu0 0.0
    %1722 = vmatprep.subr.mxu0 0.0
    %1723 = vmatpush2.msra.mxu0 0.0
    %1724 = vmatprep.subr.mxu0 0.0
    %1725 = vmatpush2.msra.mxu0 0.0
    %1726 = vmatprep.subr.mxu0 0.0
    %1727 = vmatpush2.msra.mxu0 0.0
    %1728 = vmatprep.subr.mxu0 0.0
    %1729 = vmatpush2.msra.mxu0 0.0
    %1730 = vmatprep.subr.mxu0 0.0
    %1731 = vmatpush2.msra.mxu0 0.0
    %1732 = vmatprep.subr.mxu0 0.0
    %1733 = vmatpush2.msra.mxu0 0.0
    %1734 = vmatprep.subr.mxu0 0.0
    %1735 = vmatpush2.msra.mxu0 0.0
    %1736 = vmatprep.mubr.f32.mxu0 0.0
    %1737 = vmatmul.mubr.f32.gmra.mxu0 %v1603
    %v1738 = vpop.f32.mrf.mxu0
    %v1739 = vadd.f32 0.0, %v1738
    %v1740 = vpop.f32.mrf.mxu0
    %v1741 = vadd.f32 0.0, %v1740
    %1742 = vdwg.mxu0
    %1743 = vmatprep.subr.mxu0 %v161
    %1744 = vmatpush1.msra.mxu0 %v160
    %1745 = vmatprep.subr.mxu0 %v157
    %1746 = vmatpush1.msra.mxu0 %v156
    %1747 = vmatprep.subr.mxu0 %v153
    %1748 = vmatpush1.msra.mxu0 %v152
    %1749 = vmatprep.subr.mxu0 %v149
    %1750 = vmatpush1.msra.mxu0 %v148
    %1751 = vmatprep.subr.mxu0 %v145
    %1752 = vmatpush1.msra.mxu0 %v144
    %1753 = vmatprep.subr.mxu0 %v141
    %1754 = vmatpush1.msra.mxu0 %v140
    %1755 = vmatprep.subr.mxu0 %v137
    %1756 = vmatpush1.msra.mxu0 %v136
    %1757 = vmatprep.subr.mxu0 %v133
    %1758 = vmatpush1.msra.mxu0 %v132
    %1759 = vmatprep.subr.mxu0 %v129
    %1760 = vmatpush1.msra.mxu0 %v128
    %1761 = vmatprep.subr.mxu0 %v125
    %1762 = vmatpush1.msra.mxu0 %v124
    %1763 = vmatprep.subr.mxu0 %v121
    %1764 = vmatpush1.msra.mxu0 %v120
    %1765 = vmatprep.subr.mxu0 %v117
    %1766 = vmatpush1.msra.mxu0 %v116
    %1767 = vmatprep.subr.mxu0 %v113
    %1768 = vmatpush1.msra.mxu0 %v112
    %1769 = vmatprep.subr.mxu0 %v109
    %1770 = vmatpush1.msra.mxu0 %v108
    %1771 = vmatprep.subr.mxu0 %v105
    %1772 = vmatpush1.msra.mxu0 %v104
    %1773 = vmatprep.subr.mxu0 %v101
    %1774 = vmatpush1.msra.mxu0 %v100
    %1775 = vmatprep.subr.mxu0 0.0
    %1776 = vmatpush2.msra.mxu0 0.0
    %1777 = vmatprep.subr.mxu0 0.0
    %1778 = vmatpush2.msra.mxu0 0.0
    %1779 = vmatprep.subr.mxu0 0.0
    %1780 = vmatpush2.msra.mxu0 0.0
    %1781 = vmatprep.subr.mxu0 0.0
    %1782 = vmatpush2.msra.mxu0 0.0
    %1783 = vmatprep.subr.mxu0 0.0
    %1784 = vmatpush2.msra.mxu0 0.0
    %1785 = vmatprep.subr.mxu0 0.0
    %1786 = vmatpush2.msra.mxu0 0.0
    %1787 = vmatprep.subr.mxu0 0.0
    %1788 = vmatpush2.msra.mxu0 0.0
    %1789 = vmatprep.subr.mxu0 0.0
    %1790 = vmatpush2.msra.mxu0 0.0
    %1791 = vmatprep.subr.mxu0 0.0
    %1792 = vmatpush2.msra.mxu0 0.0
    %1793 = vmatprep.subr.mxu0 0.0
    %1794 = vmatpush2.msra.mxu0 0.0
    %1795 = vmatprep.subr.mxu0 0.0
    %1796 = vmatpush2.msra.mxu0 0.0
    %1797 = vmatprep.subr.mxu0 0.0
    %1798 = vmatpush2.msra.mxu0 0.0
    %1799 = vmatprep.subr.mxu0 0.0
    %1800 = vmatpush2.msra.mxu0 0.0
    %1801 = vmatprep.subr.mxu0 0.0
    %1802 = vmatpush2.msra.mxu0 0.0
    %1803 = vmatprep.subr.mxu0 0.0
    %1804 = vmatpush2.msra.mxu0 0.0
    %1805 = vmatprep.subr.mxu0 0.0
    %1806 = vmatpush2.msra.mxu0 0.0
    %1807 = vmatprep.mubr.f32.mxu0 0.0
    %1808 = vmatmul.mubr.f32.gmra.mxu0 %v1603
    %v1809 = vpop.f32.mrf.mxu0
    %v1810 = vadd.f32 0.0, %v1809
    %v1811 = vpop.f32.mrf.mxu0
    %v1812 = vadd.f32 0.0, %v1811
    %1813 = vdwg.mxu0
    %v1814 = vadd.f32 %v1649, %v1739
    %v1815 = vadd.f32 %v1650, %v1741
    %v1816 = vadd.f32 %v1651, %v1810
    %v1817 = vadd.f32 %v1652, %v1812
    %1818 = vmatprep.subr.mxu0 %v223
    %1819 = vmatpush1.msra.mxu0 %v222
    %1820 = vmatprep.subr.mxu0 %v219
    %1821 = vmatpush1.msra.mxu0 %v218
    %1822 = vmatprep.subr.mxu0 %v215
    %1823 = vmatpush1.msra.mxu0 %v214
    %1824 = vmatprep.subr.mxu0 %v211
    %1825 = vmatpush1.msra.mxu0 %v210
    %1826 = vmatprep.subr.mxu0 %v207
    %1827 = vmatpush1.msra.mxu0 %v206
    %1828 = vmatprep.subr.mxu0 %v203
    %1829 = vmatpush1.msra.mxu0 %v202
    %1830 = vmatprep.subr.mxu0 %v199
    %1831 = vmatpush1.msra.mxu0 %v198
    %1832 = vmatprep.subr.mxu0 %v195
    %1833 = vmatpush1.msra.mxu0 %v194
    %1834 = vmatprep.subr.mxu0 %v191
    %1835 = vmatpush1.msra.mxu0 %v190
    %1836 = vmatprep.subr.mxu0 %v187
    %1837 = vmatpush1.msra.mxu0 %v186
    %1838 = vmatprep.subr.mxu0 %v183
    %1839 = vmatpush1.msra.mxu0 %v182
    %1840 = vmatprep.subr.mxu0 %v179
    %1841 = vmatpush1.msra.mxu0 %v178
    %1842 = vmatprep.subr.mxu0 %v175
    %1843 = vmatpush1.msra.mxu0 %v174
    %1844 = vmatprep.subr.mxu0 %v171
    %1845 = vmatpush1.msra.mxu0 %v170
    %1846 = vmatprep.subr.mxu0 %v167
    %1847 = vmatpush1.msra.mxu0 %v166
    %1848 = vmatprep.subr.mxu0 %v163
    %1849 = vmatpush1.msra.mxu0 %v162
    %1850 = vmatprep.subr.mxu0 0.0
    %1851 = vmatpush2.msra.mxu0 0.0
    %1852 = vmatprep.subr.mxu0 0.0
    %1853 = vmatpush2.msra.mxu0 0.0
    %1854 = vmatprep.subr.mxu0 0.0
    %1855 = vmatpush2.msra.mxu0 0.0
    %1856 = vmatprep.subr.mxu0 0.0
    %1857 = vmatpush2.msra.mxu0 0.0
    %1858 = vmatprep.subr.mxu0 0.0
    %1859 = vmatpush2.msra.mxu0 0.0
    %1860 = vmatprep.subr.mxu0 0.0
    %1861 = vmatpush2.msra.mxu0 0.0
    %1862 = vmatprep.subr.mxu0 0.0
    %1863 = vmatpush2.msra.mxu0 0.0
    %1864 = vmatprep.subr.mxu0 0.0
    %1865 = vmatpush2.msra.mxu0 0.0
    %1866 = vmatprep.subr.mxu0 0.0
    %1867 = vmatpush2.msra.mxu0 0.0
    %1868 = vmatprep.subr.mxu0 0.0
    %1869 = vmatpush2.msra.mxu0 0.0
    %1870 = vmatprep.subr.mxu0 0.0
    %1871 = vmatpush2.msra.mxu0 0.0
    %1872 = vmatprep.subr.mxu0 0.0
    %1873 = vmatpush2.msra.mxu0 0.0
    %1874 = vmatprep.subr.mxu0 0.0
    %1875 = vmatpush2.msra.mxu0 0.0
    %1876 = vmatprep.subr.mxu0 0.0
    %1877 = vmatpush2.msra.mxu0 0.0
    %1878 = vmatprep.subr.mxu0 0.0
    %1879 = vmatpush2.msra.mxu0 0.0
    %1880 = vmatprep.subr.mxu0 0.0
    %1881 = vmatpush2.msra.mxu0 0.0
    %1882 = vmatprep.mubr.f32.mxu0 0.0
    %1883 = vmatmul.mubr.f32.gmra.mxu0 %v1644
    %v1884 = vpop.f32.mrf.mxu0
    %v1885 = vadd.f32 0.0, %v1884
    %v1886 = vpop.f32.mrf.mxu0
    %v1887 = vadd.f32 0.0, %v1886
    %1888 = vdwg.mxu0
    %1889 = vmatprep.subr.mxu0 %v225
    %1890 = vmatpush1.msra.mxu0 %v224
    %1891 = vmatprep.subr.mxu0 %v221
    %1892 = vmatpush1.msra.mxu0 %v220
    %1893 = vmatprep.subr.mxu0 %v217
    %1894 = vmatpush1.msra.mxu0 %v216
    %1895 = vmatprep.subr.mxu0 %v213
    %1896 = vmatpush1.msra.mxu0 %v212
    %1897 = vmatprep.subr.mxu0 %v209
    %1898 = vmatpush1.msra.mxu0 %v208
    %1899 = vmatprep.subr.mxu0 %v205
    %1900 = vmatpush1.msra.mxu0 %v204
    %1901 = vmatprep.subr.mxu0 %v201
    %1902 = vmatpush1.msra.mxu0 %v200
    %1903 = vmatprep.subr.mxu0 %v197
    %1904 = vmatpush1.msra.mxu0 %v196
    %1905 = vmatprep.subr.mxu0 %v193
    %1906 = vmatpush1.msra.mxu0 %v192
    %1907 = vmatprep.subr.mxu0 %v189
    %1908 = vmatpush1.msra.mxu0 %v188
    %1909 = vmatprep.subr.mxu0 %v185
    %1910 = vmatpush1.msra.mxu0 %v184
    %1911 = vmatprep.subr.mxu0 %v181
    %1912 = vmatpush1.msra.mxu0 %v180
    %1913 = vmatprep.subr.mxu0 %v177
    %1914 = vmatpush1.msra.mxu0 %v176
    %1915 = vmatprep.subr.mxu0 %v173
    %1916 = vmatpush1.msra.mxu0 %v172
    %1917 = vmatprep.subr.mxu0 %v169
    %1918 = vmatpush1.msra.mxu0 %v168
    %1919 = vmatprep.subr.mxu0 %v165
    %1920 = vmatpush1.msra.mxu0 %v164
    %1921 = vmatprep.subr.mxu0 0.0
    %1922 = vmatpush2.msra.mxu0 0.0
    %1923 = vmatprep.subr.mxu0 0.0
    %1924 = vmatpush2.msra.mxu0 0.0
    %1925 = vmatprep.subr.mxu0 0.0
    %1926 = vmatpush2.msra.mxu0 0.0
    %1927 = vmatprep.subr.mxu0 0.0
    %1928 = vmatpush2.msra.mxu0 0.0
    %1929 = vmatprep.subr.mxu0 0.0
    %1930 = vmatpush2.msra.mxu0 0.0
    %1931 = vmatprep.subr.mxu0 0.0
    %1932 = vmatpush2.msra.mxu0 0.0
    %1933 = vmatprep.subr.mxu0 0.0
    %1934 = vmatpush2.msra.mxu0 0.0
    %1935 = vmatprep.subr.mxu0 0.0
    %1936 = vmatpush2.msra.mxu0 0.0
    %1937 = vmatprep.subr.mxu0 0.0
    %1938 = vmatpush2.msra.mxu0 0.0
    %1939 = vmatprep.subr.mxu0 0.0
    %1940 = vmatpush2.msra.mxu0 0.0
    %1941 = vmatprep.subr.mxu0 0.0
    %1942 = vmatpush2.msra.mxu0 0.0
    %1943 = vmatprep.subr.mxu0 0.0
    %1944 = vmatpush2.msra.mxu0 0.0
    %1945 = vmatprep.subr.mxu0 0.0
    %1946 = vmatpush2.msra.mxu0 0.0
    %1947 = vmatprep.subr.mxu0 0.0
    %1948 = vmatpush2.msra.mxu0 0.0
    %1949 = vmatprep.subr.mxu0 0.0
    %1950 = vmatpush2.msra.mxu0 0.0
    %1951 = vmatprep.subr.mxu0 0.0
    %1952 = vmatpush2.msra.mxu0 0.0
    %1953 = vmatprep.mubr.f32.mxu0 0.0
    %1954 = vmatmul.mubr.f32.gmra.mxu0 %v1644
    %v1955 = vpop.f32.mrf.mxu0
    %v1956 = vadd.f32 0.0, %v1955
    %v1957 = vpop.f32.mrf.mxu0
    %v1958 = vadd.f32 0.0, %v1957
    %1959 = vdwg.mxu0
    %v1960 = vadd.f32 %v1662, %v1885
    %v1961 = vadd.f32 %v1663, %v1887
    %v1962 = vadd.f32 %v1664, %v1956
    %v1963 = vadd.f32 %v1665, %v1958
    %v1964 = vxor.u32 %v1814, 2147483648
    %v1965 = vmul.f32 %v1964, 1.442695
    %v1966 = vpow.pop %v1965
    %v1967 = vadd.f32 %v1966, 1.0
    %v1968 = vrcp.pop %v1967
    %v1969 = vmul.f32 1.0, %v1968
    %v1970 = vxor.u32 %v1815, 2147483648
    %v1971 = vmul.f32 %v1970, 1.442695
    %v1972 = vpow.pop %v1971
    %v1973 = vadd.f32 %v1972, 1.0
    %v1974 = vrcp.pop %v1973
    %v1975 = vmul.f32 1.0, %v1974
    %v1976 = vtanh.pop %v1816
    %v1977 = vxor.u32 %v1817, 2147483648
    %v1978 = vmul.f32 %v1977, 1.442695
    %v1979 = vpow.pop %v1978
    %v1980 = vadd.f32 %v1979, 1.0
    %v1981 = vrcp.pop %v1980
    %v1982 = vmul.f32 1.0, %v1981
    %v1983 = vmul.f32 %v1975, %v1606
    %v1984 = vmul.f32 %v1969, %v1976
    %v1985 = vadd.f32 %v1983, %v1984
    %v1986 = vtanh.pop %v1985
    %v1987 = vmul.f32 %v1982, %v1986
    %1989 = vset.pattern.permute.xlu0 0
    %1990 = vperm.xlu0 %1989, %v1668
    %v1991 = vpop.permute.xlu0 %1990
    %v1993 = vmul.f32 %v1991, %v1987
    %v1994 = vsub.f32 1.0, %v1668
    %1996 = vset.pattern.permute.xlu0 0
    %1997 = vperm.xlu0 %1996, %v1994
    %v1998 = vpop.permute.xlu0 %1997
    %v2000 = vmul.f32 %v1998, %v1603
    %v2001 = vadd.f32 %v1993, %v2000
    %v2002 = vmul.f32 %v1991, %v1985
    %v2003 = vmul.f32 %v1998, %v1606
    %v2004 = vadd.f32 %v2002, %v2003
    %v2005 = vxor.u32 %v1960, 2147483648
    %v2006 = vmul.f32 %v2005, 1.442695
    %v2007 = vpow.pop %v2006
    %v2008 = vadd.f32 %v2007, 1.0
    %v2009 = vrcp.pop %v2008
    %v2010 = vmul.f32 1.0, %v2009
    %v2011 = vxor.u32 %v1961, 2147483648
    %v2012 = vmul.f32 %v2011, 1.442695
    %v2013 = vpow.pop %v2012
    %v2014 = vadd.f32 %v2013, 1.0
    %v2015 = vrcp.pop %v2014
    %v2016 = vmul.f32 1.0, %v2015
    %v2017 = vtanh.pop %v1962
    %v2018 = vxor.u32 %v1963, 2147483648
    %v2019 = vmul.f32 %v2018, 1.442695
    %v2020 = vpow.pop %v2019
    %v2021 = vadd.f32 %v2020, 1.0
    %v2022 = vrcp.pop %v2021
    %v2023 = vmul.f32 1.0, %v2022
    %v2024 = vmul.f32 %v2016, %v1647
    %v2025 = vmul.f32 %v2010, %v2017
    %v2026 = vadd.f32 %v2024, %v2025
    %v2027 = vtanh.pop %v2026
    %v2028 = vmul.f32 %v2023, %v2027
    %2030 = vset.pattern.permute.xlu0 0
    %2031 = vperm.xlu0 %2030, %v1671
    %v2032 = vpop.permute.xlu0 %2031
    %v2034 = vmul.f32 %v2032, %v2028
    %v2035 = vsub.f32 1.0, %v1671
    %2037 = vset.pattern.permute.xlu0 0
    %2038 = vperm.xlu0 %2037, %v2035
    %v2039 = vpop.permute.xlu0 %2038
    %v2041 = vmul.f32 %v2039, %v1644
    %v2042 = vadd.f32 %v2034, %v2041
    %v2043 = vmul.f32 %v2032, %v2026
    %v2044 = vmul.f32 %v2039, %v1647
    %v2045 = vadd.f32 %v2043, %v2044
    %2046 = vmatprep.subr.mxu0 %v159
    %2047 = vmatpush1.msra.mxu0 %v158
    %2048 = vmatprep.subr.mxu0 %v155
    %2049 = vmatpush1.msra.mxu0 %v154
    %2050 = vmatprep.subr.mxu0 %v151
    %2051 = vmatpush1.msra.mxu0 %v150
    %2052 = vmatprep.subr.mxu0 %v147
    %2053 = vmatpush1.msra.mxu0 %v146
    %2054 = vmatprep.subr.mxu0 %v143
    %2055 = vmatpush1.msra.mxu0 %v142
    %2056 = vmatprep.subr.mxu0 %v139
    %2057 = vmatpush1.msra.mxu0 %v138
    %2058 = vmatprep.subr.mxu0 %v135
    %2059 = vmatpush1.msra.mxu0 %v134
    %2060 = vmatprep.subr.mxu0 %v131
    %2061 = vmatpush1.msra.mxu0 %v130
    %2062 = vmatprep.subr.mxu0 %v127
    %2063 = vmatpush1.msra.mxu0 %v126
    %2064 = vmatprep.subr.mxu0 %v123
    %2065 = vmatpush1.msra.mxu0 %v122
    %2066 = vmatprep.subr.mxu0 %v119
    %2067 = vmatpush1.msra.mxu0 %v118
    %2068 = vmatprep.subr.mxu0 %v115
    %2069 = vmatpush1.msra.mxu0 %v114
    %2070 = vmatprep.subr.mxu0 %v111
    %2071 = vmatpush1.msra.mxu0 %v110
    %2072 = vmatprep.subr.mxu0 %v107
    %2073 = vmatpush1.msra.mxu0 %v106
    %2074 = vmatprep.subr.mxu0 %v103
    %2075 = vmatpush1.msra.mxu0 %v102
    %2076 = vmatprep.subr.mxu0 %v99
    %2077 = vmatpush1.msra.mxu0 %v98
    %2078 = vmatprep.subr.mxu0 0.0
    %2079 = vmatpush2.msra.mxu0 0.0
    %2080 = vmatprep.subr.mxu0 0.0
    %2081 = vmatpush2.msra.mxu0 0.0
    %2082 = vmatprep.subr.mxu0 0.0
    %2083 = vmatpush2.msra.mxu0 0.0
    %2084 = vmatprep.subr.mxu0 0.0
    %2085 = vmatpush2.msra.mxu0 0.0
    %2086 = vmatprep.subr.mxu0 0.0
    %2087 = vmatpush2.msra.mxu0 0.0
    %2088 = vmatprep.subr.mxu0 0.0
    %2089 = vmatpush2.msra.mxu0 0.0
    %2090 = vmatprep.subr.mxu0 0.0
    %2091 = vmatpush2.msra.mxu0 0.0
    %2092 = vmatprep.subr.mxu0 0.0
    %2093 = vmatpush2.msra.mxu0 0.0
    %2094 = vmatprep.subr.mxu0 0.0
    %2095 = vmatpush2.msra.mxu0 0.0
    %2096 = vmatprep.subr.mxu0 0.0
    %2097 = vmatpush2.msra.mxu0 0.0
    %2098 = vmatprep.subr.mxu0 0.0
    %2099 = vmatpush2.msra.mxu0 0.0
    %2100 = vmatprep.subr.mxu0 0.0
    %2101 = vmatpush2.msra.mxu0 0.0
    %2102 = vmatprep.subr.mxu0 0.0
    %2103 = vmatpush2.msra.mxu0 0.0
    %2104 = vmatprep.subr.mxu0 0.0
    %2105 = vmatpush2.msra.mxu0 0.0
    %2106 = vmatprep.subr.mxu0 0.0
    %2107 = vmatpush2.msra.mxu0 0.0
    %2108 = vmatprep.subr.mxu0 0.0
    %2109 = vmatpush2.msra.mxu0 0.0
    %2110 = vmatprep.mubr.f32.mxu0 0.0
    %2111 = vmatmul.mubr.f32.gmra.mxu0 %v2001
    %v2112 = vpop.f32.mrf.mxu0
    %v2113 = vadd.f32 0.0, %v2112
    %v2114 = vpop.f32.mrf.mxu0
    %v2115 = vadd.f32 0.0, %v2114
    %2116 = vdwg.mxu0
    %2117 = vmatprep.subr.mxu0 %v161
    %2118 = vmatpush1.msra.mxu0 %v160
    %2119 = vmatprep.subr.mxu0 %v157
    %2120 = vmatpush1.msra.mxu0 %v156
    %2121 = vmatprep.subr.mxu0 %v153
    %2122 = vmatpush1.msra.mxu0 %v152
    %2123 = vmatprep.subr.mxu0 %v149
    %2124 = vmatpush1.msra.mxu0 %v148
    %2125 = vmatprep.subr.mxu0 %v145
    %2126 = vmatpush1.msra.mxu0 %v144
    %2127 = vmatprep.subr.mxu0 %v141
    %2128 = vmatpush1.msra.mxu0 %v140
    %2129 = vmatprep.subr.mxu0 %v137
    %2130 = vmatpush1.msra.mxu0 %v136
    %2131 = vmatprep.subr.mxu0 %v133
    %2132 = vmatpush1.msra.mxu0 %v132
    %2133 = vmatprep.subr.mxu0 %v129
    %2134 = vmatpush1.msra.mxu0 %v128
    %2135 = vmatprep.subr.mxu0 %v125
    %2136 = vmatpush1.msra.mxu0 %v124
    %2137 = vmatprep.subr.mxu0 %v121
    %2138 = vmatpush1.msra.mxu0 %v120
    %2139 = vmatprep.subr.mxu0 %v117
    %2140 = vmatpush1.msra.mxu0 %v116
    %2141 = vmatprep.subr.mxu0 %v113
    %2142 = vmatpush1.msra.mxu0 %v112
    %2143 = vmatprep.subr.mxu0 %v109
    %2144 = vmatpush1.msra.mxu0 %v108
    %2145 = vmatprep.subr.mxu0 %v105
    %2146 = vmatpush1.msra.mxu0 %v104
    %2147 = vmatprep.subr.mxu0 %v101
    %2148 = vmatpush1.msra.mxu0 %v100
    %2149 = vmatprep.subr.mxu0 0.0
    %2150 = vmatpush2.msra.mxu0 0.0
    %2151 = vmatprep.subr.mxu0 0.0
    %2152 = vmatpush2.msra.mxu0 0.0
    %2153 = vmatprep.subr.mxu0 0.0
    %2154 = vmatpush2.msra.mxu0 0.0
    %2155 = vmatprep.subr.mxu0 0.0
    %2156 = vmatpush2.msra.mxu0 0.0
    %2157 = vmatprep.subr.mxu0 0.0
    %2158 = vmatpush2.msra.mxu0 0.0
    %2159 = vmatprep.subr.mxu0 0.0
    %2160 = vmatpush2.msra.mxu0 0.0
    %2161 = vmatprep.subr.mxu0 0.0
    %2162 = vmatpush2.msra.mxu0 0.0
    %2163 = vmatprep.subr.mxu0 0.0
    %2164 = vmatpush2.msra.mxu0 0.0
    %2165 = vmatprep.subr.mxu0 0.0
    %2166 = vmatpush2.msra.mxu0 0.0
    %2167 = vmatprep.subr.mxu0 0.0
    %2168 = vmatpush2.msra.mxu0 0.0
    %2169 = vmatprep.subr.mxu0 0.0
    %2170 = vmatpush2.msra.mxu0 0.0
    %2171 = vmatprep.subr.mxu0 0.0
    %2172 = vmatpush2.msra.mxu0 0.0
    %2173 = vmatprep.subr.mxu0 0.0
    %2174 = vmatpush2.msra.mxu0 0.0
    %2175 = vmatprep.subr.mxu0 0.0
    %2176 = vmatpush2.msra.mxu0 0.0
    %2177 = vmatprep.subr.mxu0 0.0
    %2178 = vmatpush2.msra.mxu0 0.0
    %2179 = vmatprep.subr.mxu0 0.0
    %2180 = vmatpush2.msra.mxu0 0.0
    %2181 = vmatprep.mubr.f32.mxu0 0.0
    %2182 = vmatmul.mubr.f32.gmra.mxu0 %v2001
    %v2183 = vpop.f32.mrf.mxu0
    %v2184 = vadd.f32 0.0, %v2183
    %v2185 = vpop.f32.mrf.mxu0
    %v2186 = vadd.f32 0.0, %v2185
    %2187 = vdwg.mxu0
    %v2188 = vadd.f32 %v1658, %v2113
    %v2189 = vadd.f32 %v1659, %v2115
    %v2190 = vadd.f32 %v1660, %v2184
    %v2191 = vadd.f32 %v1661, %v2186
    %2192 = vmatprep.subr.mxu0 %v223
    %2193 = vmatpush1.msra.mxu0 %v222
    %2194 = vmatprep.subr.mxu0 %v219
    %2195 = vmatpush1.msra.mxu0 %v218
    %2196 = vmatprep.subr.mxu0 %v215
    %2197 = vmatpush1.msra.mxu0 %v214
    %2198 = vmatprep.subr.mxu0 %v211
    %2199 = vmatpush1.msra.mxu0 %v210
    %2200 = vmatprep.subr.mxu0 %v207
    %2201 = vmatpush1.msra.mxu0 %v206
    %2202 = vmatprep.subr.mxu0 %v203
    %2203 = vmatpush1.msra.mxu0 %v202
    %2204 = vmatprep.subr.mxu0 %v199
    %2205 = vmatpush1.msra.mxu0 %v198
    %2206 = vmatprep.subr.mxu0 %v195
    %2207 = vmatpush1.msra.mxu0 %v194
    %2208 = vmatprep.subr.mxu0 %v191
    %2209 = vmatpush1.msra.mxu0 %v190
    %2210 = vmatprep.subr.mxu0 %v187
    %2211 = vmatpush1.msra.mxu0 %v186
    %2212 = vmatprep.subr.mxu0 %v183
    %2213 = vmatpush1.msra.mxu0 %v182
    %2214 = vmatprep.subr.mxu0 %v179
    %2215 = vmatpush1.msra.mxu0 %v178
    %2216 = vmatprep.subr.mxu0 %v175
    %2217 = vmatpush1.msra.mxu0 %v174
    %2218 = vmatprep.subr.mxu0 %v171
    %2219 = vmatpush1.msra.mxu0 %v170
    %2220 = vmatprep.subr.mxu0 %v167
    %2221 = vmatpush1.msra.mxu0 %v166
    %2222 = vmatprep.subr.mxu0 %v163
    %2223 = vmatpush1.msra.mxu0 %v162
    %2224 = vmatprep.subr.mxu0 0.0
    %2225 = vmatpush2.msra.mxu0 0.0
    %2226 = vmatprep.subr.mxu0 0.0
    %2227 = vmatpush2.msra.mxu0 0.0
    %2228 = vmatprep.subr.mxu0 0.0
    %2229 = vmatpush2.msra.mxu0 0.0
    %2230 = vmatprep.subr.mxu0 0.0
    %2231 = vmatpush2.msra.mxu0 0.0
    %2232 = vmatprep.subr.mxu0 0.0
    %2233 = vmatpush2.msra.mxu0 0.0
    %2234 = vmatprep.subr.mxu0 0.0
    %2235 = vmatpush2.msra.mxu0 0.0
    %2236 = vmatprep.subr.mxu0 0.0
    %2237 = vmatpush2.msra.mxu0 0.0
    %2238 = vmatprep.subr.mxu0 0.0
    %2239 = vmatpush2.msra.mxu0 0.0
    %2240 = vmatprep.subr.mxu0 0.0
    %2241 = vmatpush2.msra.mxu0 0.0
    %2242 = vmatprep.subr.mxu0 0.0
    %2243 = vmatpush2.msra.mxu0 0.0
    %2244 = vmatprep.subr.mxu0 0.0
    %2245 = vmatpush2.msra.mxu0 0.0
    %2246 = vmatprep.subr.mxu0 0.0
    %2247 = vmatpush2.msra.mxu0 0.0
    %2248 = vmatprep.subr.mxu0 0.0
    %2249 = vmatpush2.msra.mxu0 0.0
    %2250 = vmatprep.subr.mxu0 0.0
    %2251 = vmatpush2.msra.mxu0 0.0
    %2252 = vmatprep.subr.mxu0 0.0
    %2253 = vmatpush2.msra.mxu0 0.0
    %2254 = vmatprep.subr.mxu0 0.0
    %2255 = vmatpush2.msra.mxu0 0.0
    %2256 = vmatprep.mubr.f32.mxu0 0.0
    %2257 = vmatmul.mubr.f32.gmra.mxu0 %v2042
    %v2258 = vpop.f32.mrf.mxu0
    %v2259 = vadd.f32 0.0, %v2258
    %v2260 = vpop.f32.mrf.mxu0
    %v2261 = vadd.f32 0.0, %v2260
    %2262 = vdwg.mxu0
    %2263 = vmatprep.subr.mxu0 %v225
    %2264 = vmatpush1.msra.mxu0 %v224
    %2265 = vmatprep.subr.mxu0 %v221
    %2266 = vmatpush1.msra.mxu0 %v220
    %2267 = vmatprep.subr.mxu0 %v217
    %2268 = vmatpush1.msra.mxu0 %v216
    %2269 = vmatprep.subr.mxu0 %v213
    %2270 = vmatpush1.msra.mxu0 %v212
    %2271 = vmatprep.subr.mxu0 %v209
    %2272 = vmatpush1.msra.mxu0 %v208
    %2273 = vmatprep.subr.mxu0 %v205
    %2274 = vmatpush1.msra.mxu0 %v204
    %2275 = vmatprep.subr.mxu0 %v201
    %2276 = vmatpush1.msra.mxu0 %v200
    %2277 = vmatprep.subr.mxu0 %v197
    %2278 = vmatpush1.msra.mxu0 %v196
    %2279 = vmatprep.subr.mxu0 %v193
    %2280 = vmatpush1.msra.mxu0 %v192
    %2281 = vmatprep.subr.mxu0 %v189
    %2282 = vmatpush1.msra.mxu0 %v188
    %2283 = vmatprep.subr.mxu0 %v185
    %2284 = vmatpush1.msra.mxu0 %v184
    %2285 = vmatprep.subr.mxu0 %v181
    %2286 = vmatpush1.msra.mxu0 %v180
    %2287 = vmatprep.subr.mxu0 %v177
    %2288 = vmatpush1.msra.mxu0 %v176
    %2289 = vmatprep.subr.mxu0 %v173
    %2290 = vmatpush1.msra.mxu0 %v172
    %2291 = vmatprep.subr.mxu0 %v169
    %2292 = vmatpush1.msra.mxu0 %v168
    %2293 = vmatprep.subr.mxu0 %v165
    %2294 = vmatpush1.msra.mxu0 %v164
    %2295 = vmatprep.subr.mxu0 0.0
    %2296 = vmatpush2.msra.mxu0 0.0
    %2297 = vmatprep.subr.mxu0 0.0
    %2298 = vmatpush2.msra.mxu0 0.0
    %2299 = vmatprep.subr.mxu0 0.0
    %2300 = vmatpush2.msra.mxu0 0.0
    %2301 = vmatprep.subr.mxu0 0.0
    %2302 = vmatpush2.msra.mxu0 0.0
    %2303 = vmatprep.subr.mxu0 0.0
    %2304 = vmatpush2.msra.mxu0 0.0
    %2305 = vmatprep.subr.mxu0 0.0
    %2306 = vmatpush2.msra.mxu0 0.0
    %2307 = vmatprep.subr.mxu0 0.0
    %2308 = vmatpush2.msra.mxu0 0.0
    %2309 = vmatprep.subr.mxu0 0.0
    %2310 = vmatpush2.msra.mxu0 0.0
    %2311 = vmatprep.subr.mxu0 0.0
    %2312 = vmatpush2.msra.mxu0 0.0
    %2313 = vmatprep.subr.mxu0 0.0
    %2314 = vmatpush2.msra.mxu0 0.0
    %2315 = vmatprep.subr.mxu0 0.0
    %2316 = vmatpush2.msra.mxu0 0.0
    %2317 = vmatprep.subr.mxu0 0.0
    %2318 = vmatpush2.msra.mxu0 0.0
    %2319 = vmatprep.subr.mxu0 0.0
    %2320 = vmatpush2.msra.mxu0 0.0
    %2321 = vmatprep.subr.mxu0 0.0
    %2322 = vmatpush2.msra.mxu0 0.0
    %2323 = vmatprep.subr.mxu0 0.0
    %2324 = vmatpush2.msra.mxu0 0.0
    %2325 = vmatprep.subr.mxu0 0.0
    %2326 = vmatpush2.msra.mxu0 0.0
    %2327 = vmatprep.mubr.f32.mxu0 0.0
    %2328 = vmatmul.mubr.f32.gmra.mxu0 %v2042
    %v2329 = vpop.f32.mrf.mxu0
    %v2330 = vadd.f32 0.0, %v2329
    %v2331 = vpop.f32.mrf.mxu0
    %v2332 = vadd.f32 0.0, %v2331
    %2333 = vdwg.mxu0
    %v2334 = vadd.f32 %v1653, %v2259
    %v2335 = vadd.f32 %v1654, %v2261
    %v2336 = vadd.f32 %v1655, %v2330
    %v2337 = vadd.f32 %v1656, %v2332
    %v2338 = vxor.u32 %v2188, 2147483648
    %v2339 = vmul.f32 %v2338, 1.442695
    %v2340 = vpow.pop %v2339
    %v2341 = vadd.f32 %v2340, 1.0
    %v2342 = vrcp.pop %v2341
    %v2343 = vmul.f32 1.0, %v2342
    %v2344 = vxor.u32 %v2189, 2147483648
    %v2345 = vmul.f32 %v2344, 1.442695
    %v2346 = vpow.pop %v2345
    %v2347 = vadd.f32 %v2346, 1.0
    %v2348 = vrcp.pop %v2347
    %v2349 = vmul.f32 1.0, %v2348
    %v2350 = vtanh.pop %v2190
    %v2351 = vxor.u32 %v2191, 2147483648
    %v2352 = vmul.f32 %v2351, 1.442695
    %v2353 = vpow.pop %v2352
    %v2354 = vadd.f32 %v2353, 1.0
    %v2355 = vrcp.pop %v2354
    %v2356 = vmul.f32 1.0, %v2355
    %v2357 = vmul.f32 %v2349, %v2004
    %v2358 = vmul.f32 %v2343, %v2350
    %v2359 = vadd.f32 %v2357, %v2358
    %v2360 = vtanh.pop %v2359
    %v2361 = vmul.f32 %v2356, %v2360
    %v2362 = vmul.f32 %v2032, %v2361
    %v2363 = vmul.f32 %v2039, %v2001
    %v2364 = vadd.f32 %v2362, %v2363
    %v2365 = vmul.f32 %v2032, %v2359
    %v2366 = vmul.f32 %v2039, %v2004
    %v2367 = vadd.f32 %v2365, %v2366
    %v2368 = vxor.u32 %v2334, 2147483648
    %v2369 = vmul.f32 %v2368, 1.442695
    %v2370 = vpow.pop %v2369
    %v2371 = vadd.f32 %v2370, 1.0
    %v2372 = vrcp.pop %v2371
    %v2373 = vmul.f32 1.0, %v2372
    %v2374 = vxor.u32 %v2335, 2147483648
    %v2375 = vmul.f32 %v2374, 1.442695
    %v2376 = vpow.pop %v2375
    %v2377 = vadd.f32 %v2376, 1.0
    %v2378 = vrcp.pop %v2377
    %v2379 = vmul.f32 1.0, %v2378
    %v2380 = vtanh.pop %v2336
    %v2381 = vxor.u32 %v2337, 2147483648
    %v2382 = vmul.f32 %v2381, 1.442695
    %v2383 = vpow.pop %v2382
    %v2384 = vadd.f32 %v2383, 1.0
    %v2385 = vrcp.pop %v2384
    %v2386 = vmul.f32 1.0, %v2385
    %v2387 = vmul.f32 %v2379, %v2045
    %v2388 = vmul.f32 %v2373, %v2380
    %v2389 = vadd.f32 %v2387, %v2388
    %v2390 = vtanh.pop %v2389
    %v2391 = vmul.f32 %v2386, %v2390
    %v2392 = vmul.f32 %v1991, %v2391
    %v2393 = vmul.f32 %v1998, %v2042
    %v2394 = vadd.f32 %v2392, %v2393
    %v2395 = vmul.f32 %v1991, %v2389
    %v2396 = vmul.f32 %v1998, %v2045
    %v2397 = vadd.f32 %v2395, %v2396
    %2398 = vmatprep.subr.mxu0 %v159
    %2399 = vmatpush1.msra.mxu0 %v158
    %2400 = vmatprep.subr.mxu0 %v155
    %2401 = vmatpush1.msra.mxu0 %v154
    %2402 = vmatprep.subr.mxu0 %v151
    %2403 = vmatpush1.msra.mxu0 %v150
    %2404 = vmatprep.subr.mxu0 %v147
    %2405 = vmatpush1.msra.mxu0 %v146
    %2406 = vmatprep.subr.mxu0 %v143
    %2407 = vmatpush1.msra.mxu0 %v142
    %2408 = vmatprep.subr.mxu0 %v139
    %2409 = vmatpush1.msra.mxu0 %v138
    %2410 = vmatprep.subr.mxu0 %v135
    %2411 = vmatpush1.msra.mxu0 %v134
    %2412 = vmatprep.subr.mxu0 %v131
    %2413 = vmatpush1.msra.mxu0 %v130
    %2414 = vmatprep.subr.mxu0 %v127
    %2415 = vmatpush1.msra.mxu0 %v126
    %2416 = vmatprep.subr.mxu0 %v123
    %2417 = vmatpush1.msra.mxu0 %v122
    %2418 = vmatprep.subr.mxu0 %v119
    %2419 = vmatpush1.msra.mxu0 %v118
    %2420 = vmatprep.subr.mxu0 %v115
    %2421 = vmatpush1.msra.mxu0 %v114
    %2422 = vmatprep.subr.mxu0 %v111
    %2423 = vmatpush1.msra.mxu0 %v110
    %2424 = vmatprep.subr.mxu0 %v107
    %2425 = vmatpush1.msra.mxu0 %v106
    %2426 = vmatprep.subr.mxu0 %v103
    %2427 = vmatpush1.msra.mxu0 %v102
    %2428 = vmatprep.subr.mxu0 %v99
    %2429 = vmatpush1.msra.mxu0 %v98
    %2430 = vmatprep.subr.mxu0 0.0
    %2431 = vmatpush2.msra.mxu0 0.0
    %2432 = vmatprep.subr.mxu0 0.0
    %2433 = vmatpush2.msra.mxu0 0.0
    %2434 = vmatprep.subr.mxu0 0.0
    %2435 = vmatpush2.msra.mxu0 0.0
    %2436 = vmatprep.subr.mxu0 0.0
    %2437 = vmatpush2.msra.mxu0 0.0
    %2438 = vmatprep.subr.mxu0 0.0
    %2439 = vmatpush2.msra.mxu0 0.0
    %2440 = vmatprep.subr.mxu0 0.0
    %2441 = vmatpush2.msra.mxu0 0.0
    %2442 = vmatprep.subr.mxu0 0.0
    %2443 = vmatpush2.msra.mxu0 0.0
    %2444 = vmatprep.subr.mxu0 0.0
    %2445 = vmatpush2.msra.mxu0 0.0
    %2446 = vmatprep.subr.mxu0 0.0
    %2447 = vmatpush2.msra.mxu0 0.0
    %2448 = vmatprep.subr.mxu0 0.0
    %2449 = vmatpush2.msra.mxu0 0.0
    %2450 = vmatprep.subr.mxu0 0.0
    %2451 = vmatpush2.msra.mxu0 0.0
    %2452 = vmatprep.subr.mxu0 0.0
    %2453 = vmatpush2.msra.mxu0 0.0
    %2454 = vmatprep.subr.mxu0 0.0
    %2455 = vmatpush2.msra.mxu0 0.0
    %2456 = vmatprep.subr.mxu0 0.0
    %2457 = vmatpush2.msra.mxu0 0.0
    %2458 = vmatprep.subr.mxu0 0.0
    %2459 = vmatpush2.msra.mxu0 0.0
    %2460 = vmatprep.subr.mxu0 0.0
    %2461 = vmatpush2.msra.mxu0 0.0
    %2462 = vmatprep.mubr.f32.mxu0 0.0
    %2463 = vmatmul.mubr.f32.gmra.mxu0 %v2364
    %v2464 = vpop.f32.mrf.mxu0
    %v2465 = vadd.f32 0.0, %v2464
    %v2466 = vpop.f32.mrf.mxu0
    %v2467 = vadd.f32 0.0, %v2466
    %2468 = vdwg.mxu0
    %2469 = vmatprep.subr.mxu0 %v161
    %2470 = vmatpush1.msra.mxu0 %v160
    %2471 = vmatprep.subr.mxu0 %v157
    %2472 = vmatpush1.msra.mxu0 %v156
    %2473 = vmatprep.subr.mxu0 %v153
    %2474 = vmatpush1.msra.mxu0 %v152
    %2475 = vmatprep.subr.mxu0 %v149
    %2476 = vmatpush1.msra.mxu0 %v148
    %2477 = vmatprep.subr.mxu0 %v145
    %2478 = vmatpush1.msra.mxu0 %v144
    %2479 = vmatprep.subr.mxu0 %v141
    %2480 = vmatpush1.msra.mxu0 %v140
    %2481 = vmatprep.subr.mxu0 %v137
    %2482 = vmatpush1.msra.mxu0 %v136
    %2483 = vmatprep.subr.mxu0 %v133
    %2484 = vmatpush1.msra.mxu0 %v132
    %2485 = vmatprep.subr.mxu0 %v129
    %2486 = vmatpush1.msra.mxu0 %v128
    %2487 = vmatprep.subr.mxu0 %v125
    %2488 = vmatpush1.msra.mxu0 %v124
    %2489 = vmatprep.subr.mxu0 %v121
    %2490 = vmatpush1.msra.mxu0 %v120
    %2491 = vmatprep.subr.mxu0 %v117
    %2492 = vmatpush1.msra.mxu0 %v116
    %2493 = vmatprep.subr.mxu0 %v113
    %2494 = vmatpush1.msra.mxu0 %v112
    %2495 = vmatprep.subr.mxu0 %v109
    %2496 = vmatpush1.msra.mxu0 %v108
    %2497 = vmatprep.subr.mxu0 %v105
    %2498 = vmatpush1.msra.mxu0 %v104
    %2499 = vmatprep.subr.mxu0 %v101
    %2500 = vmatpush1.msra.mxu0 %v100
    %2501 = vmatprep.subr.mxu0 0.0
    %2502 = vmatpush2.msra.mxu0 0.0
    %2503 = vmatprep.subr.mxu0 0.0
    %2504 = vmatpush2.msra.mxu0 0.0
    %2505 = vmatprep.subr.mxu0 0.0
    %2506 = vmatpush2.msra.mxu0 0.0
    %2507 = vmatprep.subr.mxu0 0.0
    %2508 = vmatpush2.msra.mxu0 0.0
    %2509 = vmatprep.subr.mxu0 0.0
    %2510 = vmatpush2.msra.mxu0 0.0
    %2511 = vmatprep.subr.mxu0 0.0
    %2512 = vmatpush2.msra.mxu0 0.0
    %2513 = vmatprep.subr.mxu0 0.0
    %2514 = vmatpush2.msra.mxu0 0.0
    %2515 = vmatprep.subr.mxu0 0.0
    %2516 = vmatpush2.msra.mxu0 0.0
    %2517 = vmatprep.subr.mxu0 0.0
    %2518 = vmatpush2.msra.mxu0 0.0
    %2519 = vmatprep.subr.mxu0 0.0
    %2520 = vmatpush2.msra.mxu0 0.0
    %2521 = vmatprep.subr.mxu0 0.0
    %2522 = vmatpush2.msra.mxu0 0.0
    %2523 = vmatprep.subr.mxu0 0.0
    %2524 = vmatpush2.msra.mxu0 0.0
    %2525 = vmatprep.subr.mxu0 0.0
    %2526 = vmatpush2.msra.mxu0 0.0
    %2527 = vmatprep.subr.mxu0 0.0
    %2528 = vmatpush2.msra.mxu0 0.0
    %2529 = vmatprep.subr.mxu0 0.0
    %2530 = vmatpush2.msra.mxu0 0.0
    %2531 = vmatprep.subr.mxu0 0.0
    %2532 = vmatpush2.msra.mxu0 0.0
    %2533 = vmatprep.mubr.f32.mxu0 0.0
    %2534 = vmatmul.mubr.f32.gmra.mxu0 %v2364
    %v2535 = vpop.f32.mrf.mxu0
    %v2536 = vadd.f32 0.0, %v2535
    %v2537 = vpop.f32.mrf.mxu0
    %v2538 = vadd.f32 0.0, %v2537
    %2539 = vdwg.mxu0
    %v2540 = vadd.f32 %v1260, %v2465
    %v2541 = vadd.f32 %v1261, %v2467
    %v2542 = vadd.f32 %v1262, %v2536
    %v2543 = vadd.f32 %v1263, %v2538
    %2544 = vmatprep.subr.mxu0 %v223
    %2545 = vmatpush1.msra.mxu0 %v222
    %2546 = vmatprep.subr.mxu0 %v219
    %2547 = vmatpush1.msra.mxu0 %v218
    %2548 = vmatprep.subr.mxu0 %v215
    %2549 = vmatpush1.msra.mxu0 %v214
    %2550 = vmatprep.subr.mxu0 %v211
    %2551 = vmatpush1.msra.mxu0 %v210
    %2552 = vmatprep.subr.mxu0 %v207
    %2553 = vmatpush1.msra.mxu0 %v206
    %2554 = vmatprep.subr.mxu0 %v203
    %2555 = vmatpush1.msra.mxu0 %v202
    %2556 = vmatprep.subr.mxu0 %v199
    %2557 = vmatpush1.msra.mxu0 %v198
    %2558 = vmatprep.subr.mxu0 %v195
    %2559 = vmatpush1.msra.mxu0 %v194
    %2560 = vmatprep.subr.mxu0 %v191
    %2561 = vmatpush1.msra.mxu0 %v190
    %2562 = vmatprep.subr.mxu0 %v187
    %2563 = vmatpush1.msra.mxu0 %v186
    %2564 = vmatprep.subr.mxu0 %v183
    %2565 = vmatpush1.msra.mxu0 %v182
    %2566 = vmatprep.subr.mxu0 %v179
    %2567 = vmatpush1.msra.mxu0 %v178
    %2568 = vmatprep.subr.mxu0 %v175
    %2569 = vmatpush1.msra.mxu0 %v174
    %2570 = vmatprep.subr.mxu0 %v171
    %2571 = vmatpush1.msra.mxu0 %v170
    %2572 = vmatprep.subr.mxu0 %v167
    %2573 = vmatpush1.msra.mxu0 %v166
    %2574 = vmatprep.subr.mxu0 %v163
    %2575 = vmatpush1.msra.mxu0 %v162
    %2576 = vmatprep.subr.mxu0 0.0
    %2577 = vmatpush2.msra.mxu0 0.0
    %2578 = vmatprep.subr.mxu0 0.0
    %2579 = vmatpush2.msra.mxu0 0.0
    %2580 = vmatprep.subr.mxu0 0.0
    %2581 = vmatpush2.msra.mxu0 0.0
    %2582 = vmatprep.subr.mxu0 0.0
    %2583 = vmatpush2.msra.mxu0 0.0
    %2584 = vmatprep.subr.mxu0 0.0
    %2585 = vmatpush2.msra.mxu0 0.0
    %2586 = vmatprep.subr.mxu0 0.0
    %2587 = vmatpush2.msra.mxu0 0.0
    %2588 = vmatprep.subr.mxu0 0.0
    %2589 = vmatpush2.msra.mxu0 0.0
    %2590 = vmatprep.subr.mxu0 0.0
    %2591 = vmatpush2.msra.mxu0 0.0
    %2592 = vmatprep.subr.mxu0 0.0
    %2593 = vmatpush2.msra.mxu0 0.0
    %2594 = vmatprep.subr.mxu0 0.0
    %2595 = vmatpush2.msra.mxu0 0.0
    %2596 = vmatprep.subr.mxu0 0.0
    %2597 = vmatpush2.msra.mxu0 0.0
    %2598 = vmatprep.subr.mxu0 0.0
    %2599 = vmatpush2.msra.mxu0 0.0
    %2600 = vmatprep.subr.mxu0 0.0
    %2601 = vmatpush2.msra.mxu0 0.0
    %2602 = vmatprep.subr.mxu0 0.0
    %2603 = vmatpush2.msra.mxu0 0.0
    %2604 = vmatprep.subr.mxu0 0.0
    %2605 = vmatpush2.msra.mxu0 0.0
    %2606 = vmatprep.subr.mxu0 0.0
    %2607 = vmatpush2.msra.mxu0 0.0
    %2608 = vmatprep.mubr.f32.mxu0 0.0
    %2609 = vmatmul.mubr.f32.gmra.mxu0 %v2394
    %v2610 = vpop.f32.mrf.mxu0
    %v2611 = vadd.f32 0.0, %v2610
    %v2612 = vpop.f32.mrf.mxu0
    %v2613 = vadd.f32 0.0, %v2612
    %2614 = vdwg.mxu0
    %2615 = vmatprep.subr.mxu0 %v225
    %2616 = vmatpush1.msra.mxu0 %v224
    %2617 = vmatprep.subr.mxu0 %v221
    %2618 = vmatpush1.msra.mxu0 %v220
    %2619 = vmatprep.subr.mxu0 %v217
    %2620 = vmatpush1.msra.mxu0 %v216
    %2621 = vmatprep.subr.mxu0 %v213
    %2622 = vmatpush1.msra.mxu0 %v212
    %2623 = vmatprep.subr.mxu0 %v209
    %2624 = vmatpush1.msra.mxu0 %v208
    %2625 = vmatprep.subr.mxu0 %v205
    %2626 = vmatpush1.msra.mxu0 %v204
    %2627 = vmatprep.subr.mxu0 %v201
    %2628 = vmatpush1.msra.mxu0 %v200
    %2629 = vmatprep.subr.mxu0 %v197
    %2630 = vmatpush1.msra.mxu0 %v196
    %2631 = vmatprep.subr.mxu0 %v193
    %2632 = vmatpush1.msra.mxu0 %v192
    %2633 = vmatprep.subr.mxu0 %v189
    %2634 = vmatpush1.msra.mxu0 %v188
    %2635 = vmatprep.subr.mxu0 %v185
    %2636 = vmatpush1.msra.mxu0 %v184
    %2637 = vmatprep.subr.mxu0 %v181
    %2638 = vmatpush1.msra.mxu0 %v180
    %2639 = vmatprep.subr.mxu0 %v177
    %2640 = vmatpush1.msra.mxu0 %v176
    %2641 = vmatprep.subr.mxu0 %v173
    %2642 = vmatpush1.msra.mxu0 %v172
    %2643 = vmatprep.subr.mxu0 %v169
    %2644 = vmatpush1.msra.mxu0 %v168
    %2645 = vmatprep.subr.mxu0 %v165
    %2646 = vmatpush1.msra.mxu0 %v164
    %2647 = vmatprep.subr.mxu0 0.0
    %2648 = vmatpush2.msra.mxu0 0.0
    %2649 = vmatprep.subr.mxu0 0.0
    %2650 = vmatpush2.msra.mxu0 0.0
    %2651 = vmatprep.subr.mxu0 0.0
    %2652 = vmatpush2.msra.mxu0 0.0
    %2653 = vmatprep.subr.mxu0 0.0
    %2654 = vmatpush2.msra.mxu0 0.0
    %2655 = vmatprep.subr.mxu0 0.0
    %2656 = vmatpush2.msra.mxu0 0.0
    %2657 = vmatprep.subr.mxu0 0.0
    %2658 = vmatpush2.msra.mxu0 0.0
    %2659 = vmatprep.subr.mxu0 0.0
    %2660 = vmatpush2.msra.mxu0 0.0
    %2661 = vmatprep.subr.mxu0 0.0
    %2662 = vmatpush2.msra.mxu0 0.0
    %2663 = vmatprep.subr.mxu0 0.0
    %2664 = vmatpush2.msra.mxu0 0.0
    %2665 = vmatprep.subr.mxu0 0.0
    %2666 = vmatpush2.msra.mxu0 0.0
    %2667 = vmatprep.subr.mxu0 0.0
    %2668 = vmatpush2.msra.mxu0 0.0
    %2669 = vmatprep.subr.mxu0 0.0
    %2670 = vmatpush2.msra.mxu0 0.0
    %2671 = vmatprep.subr.mxu0 0.0
    %2672 = vmatpush2.msra.mxu0 0.0
    %2673 = vmatprep.subr.mxu0 0.0
    %2674 = vmatpush2.msra.mxu0 0.0
    %2675 = vmatprep.subr.mxu0 0.0
    %2676 = vmatpush2.msra.mxu0 0.0
    %2677 = vmatprep.subr.mxu0 0.0
    %2678 = vmatpush2.msra.mxu0 0.0
    %2679 = vmatprep.mubr.f32.mxu0 0.0
    %2680 = vmatmul.mubr.f32.gmra.mxu0 %v2394
    %v2681 = vpop.f32.mrf.mxu0
    %v2682 = vadd.f32 0.0, %v2681
    %v2683 = vpop.f32.mrf.mxu0
    %v2684 = vadd.f32 0.0, %v2683
    %2685 = vdwg.mxu0
    %v2686 = vadd.f32 %v1255, %v2611
    %v2687 = vadd.f32 %v1256, %v2613
    %v2688 = vadd.f32 %v1257, %v2682
    %v2689 = vadd.f32 %v1258, %v2684
    %v2690 = vxor.u32 %v2540, 2147483648
    %v2691 = vmul.f32 %v2690, 1.442695
    %v2692 = vpow.pop %v2691
    %v2693 = vadd.f32 %v2692, 1.0
    %v2694 = vrcp.pop %v2693
    %v2695 = vmul.f32 1.0, %v2694
    %v2696 = vxor.u32 %v2541, 2147483648
    %v2697 = vmul.f32 %v2696, 1.442695
    %v2698 = vpow.pop %v2697
    %v2699 = vadd.f32 %v2698, 1.0
    %v2700 = vrcp.pop %v2699
    %v2701 = vmul.f32 1.0, %v2700
    %v2702 = vtanh.pop %v2542
    %v2703 = vxor.u32 %v2543, 2147483648
    %v2704 = vmul.f32 %v2703, 1.442695
    %v2705 = vpow.pop %v2704
    %v2706 = vadd.f32 %v2705, 1.0
    %v2707 = vrcp.pop %v2706
    %v2708 = vmul.f32 1.0, %v2707
    %v2709 = vmul.f32 %v2701, %v2367
    %v2710 = vmul.f32 %v2695, %v2702
    %v2711 = vadd.f32 %v2709, %v2710
    %v2712 = vtanh.pop %v2711
    %v2713 = vmul.f32 %v2708, %v2712
    %v2714 = vmul.f32 %v1634, %v2713
    %v2715 = vmul.f32 %v1641, %v2364
    %v2716 = vadd.f32 %v2714, %v2715
    %v2717 = vmul.f32 %v1634, %v2711
    %v2718 = vmul.f32 %v1641, %v2367
    %v2719 = vadd.f32 %v2717, %v2718
    %v2720 = vxor.u32 %v2686, 2147483648
    %v2721 = vmul.f32 %v2720, 1.442695
    %v2722 = vpow.pop %v2721
    %v2723 = vadd.f32 %v2722, 1.0
    %v2724 = vrcp.pop %v2723
    %v2725 = vmul.f32 1.0, %v2724
    %v2726 = vxor.u32 %v2687, 2147483648
    %v2727 = vmul.f32 %v2726, 1.442695
    %v2728 = vpow.pop %v2727
    %v2729 = vadd.f32 %v2728, 1.0
    %v2730 = vrcp.pop %v2729
    %v2731 = vmul.f32 1.0, %v2730
    %v2732 = vtanh.pop %v2688
    %v2733 = vxor.u32 %v2689, 2147483648
    %v2734 = vmul.f32 %v2733, 1.442695
    %v2735 = vpow.pop %v2734
    %v2736 = vadd.f32 %v2735, 1.0
    %v2737 = vrcp.pop %v2736
    %v2738 = vmul.f32 1.0, %v2737
    %v2739 = vmul.f32 %v2731, %v2397
    %v2740 = vmul.f32 %v2725, %v2732
    %v2741 = vadd.f32 %v2739, %v2740
    %v2742 = vtanh.pop %v2741
    %v2743 = vmul.f32 %v2738, %v2742
    %v2744 = vmul.f32 %v1593, %v2743
    %v2745 = vmul.f32 %v1600, %v2394
    %v2746 = vadd.f32 %v2744, %v2745
    %v2747 = vmul.f32 %v1593, %v2741
    %v2748 = vmul.f32 %v1600, %v2397
    %v2749 = vadd.f32 %v2747, %v2748
    %2750 = vmatprep.subr.mxu0 %v159
    %2751 = vmatpush1.msra.mxu0 %v158
    %2752 = vmatprep.subr.mxu0 %v155
    %2753 = vmatpush1.msra.mxu0 %v154
    %2754 = vmatprep.subr.mxu0 %v151
    %2755 = vmatpush1.msra.mxu0 %v150
    %2756 = vmatprep.subr.mxu0 %v147
    %2757 = vmatpush1.msra.mxu0 %v146
    %2758 = vmatprep.subr.mxu0 %v143
    %2759 = vmatpush1.msra.mxu0 %v142
    %2760 = vmatprep.subr.mxu0 %v139
    %2761 = vmatpush1.msra.mxu0 %v138
    %2762 = vmatprep.subr.mxu0 %v135
    %2763 = vmatpush1.msra.mxu0 %v134
    %2764 = vmatprep.subr.mxu0 %v131
    %2765 = vmatpush1.msra.mxu0 %v130
    %2766 = vmatprep.subr.mxu0 %v127
    %2767 = vmatpush1.msra.mxu0 %v126
    %2768 = vmatprep.subr.mxu0 %v123
    %2769 = vmatpush1.msra.mxu0 %v122
    %2770 = vmatprep.subr.mxu0 %v119
    %2771 = vmatpush1.msra.mxu0 %v118
    %2772 = vmatprep.subr.mxu0 %v115
    %2773 = vmatpush1.msra.mxu0 %v114
    %2774 = vmatprep.subr.mxu0 %v111
    %2775 = vmatpush1.msra.mxu0 %v110
    %2776 = vmatprep.subr.mxu0 %v107
    %2777 = vmatpush1.msra.mxu0 %v106
    %2778 = vmatprep.subr.mxu0 %v103
    %2779 = vmatpush1.msra.mxu0 %v102
    %2780 = vmatprep.subr.mxu0 %v99
    %2781 = vmatpush1.msra.mxu0 %v98
    %2782 = vmatprep.subr.mxu0 0.0
    %2783 = vmatpush2.msra.mxu0 0.0
    %2784 = vmatprep.subr.mxu0 0.0
    %2785 = vmatpush2.msra.mxu0 0.0
    %2786 = vmatprep.subr.mxu0 0.0
    %2787 = vmatpush2.msra.mxu0 0.0
    %2788 = vmatprep.subr.mxu0 0.0
    %2789 = vmatpush2.msra.mxu0 0.0
    %2790 = vmatprep.subr.mxu0 0.0
    %2791 = vmatpush2.msra.mxu0 0.0
    %2792 = vmatprep.subr.mxu0 0.0
    %2793 = vmatpush2.msra.mxu0 0.0
    %2794 = vmatprep.subr.mxu0 0.0
    %2795 = vmatpush2.msra.mxu0 0.0
    %2796 = vmatprep.subr.mxu0 0.0
    %2797 = vmatpush2.msra.mxu0 0.0
    %2798 = vmatprep.subr.mxu0 0.0
    %2799 = vmatpush2.msra.mxu0 0.0
    %2800 = vmatprep.subr.mxu0 0.0
    %2801 = vmatpush2.msra.mxu0 0.0
    %2802 = vmatprep.subr.mxu0 0.0
    %2803 = vmatpush2.msra.mxu0 0.0
    %2804 = vmatprep.subr.mxu0 0.0
    %2805 = vmatpush2.msra.mxu0 0.0
    %2806 = vmatprep.subr.mxu0 0.0
    %2807 = vmatpush2.msra.mxu0 0.0
    %2808 = vmatprep.subr.mxu0 0.0
    %2809 = vmatpush2.msra.mxu0 0.0
    %2810 = vmatprep.subr.mxu0 0.0
    %2811 = vmatpush2.msra.mxu0 0.0
    %2812 = vmatprep.subr.mxu0 0.0
    %2813 = vmatpush2.msra.mxu0 0.0
    %2814 = vmatprep.mubr.f32.mxu0 0.0
    %2815 = vmatmul.mubr.f32.gmra.mxu0 %v2716
    %v2816 = vpop.f32.mrf.mxu0
    %v2817 = vadd.f32 0.0, %v2816
    %v2818 = vpop.f32.mrf.mxu0
    %v2819 = vadd.f32 0.0, %v2818
    %2820 = vdwg.mxu0
    %2821 = vmatprep.subr.mxu0 %v161
    %2822 = vmatpush1.msra.mxu0 %v160
    %2823 = vmatprep.subr.mxu0 %v157
    %2824 = vmatpush1.msra.mxu0 %v156
    %2825 = vmatprep.subr.mxu0 %v153
    %2826 = vmatpush1.msra.mxu0 %v152
    %2827 = vmatprep.subr.mxu0 %v149
    %2828 = vmatpush1.msra.mxu0 %v148
    %2829 = vmatprep.subr.mxu0 %v145
    %2830 = vmatpush1.msra.mxu0 %v144
    %2831 = vmatprep.subr.mxu0 %v141
    %2832 = vmatpush1.msra.mxu0 %v140
    %2833 = vmatprep.subr.mxu0 %v137
    %2834 = vmatpush1.msra.mxu0 %v136
    %2835 = vmatprep.subr.mxu0 %v133
    %2836 = vmatpush1.msra.mxu0 %v132
    %2837 = vmatprep.subr.mxu0 %v129
    %2838 = vmatpush1.msra.mxu0 %v128
    %2839 = vmatprep.subr.mxu0 %v125
    %2840 = vmatpush1.msra.mxu0 %v124
    %2841 = vmatprep.subr.mxu0 %v121
    %2842 = vmatpush1.msra.mxu0 %v120
    %2843 = vmatprep.subr.mxu0 %v117
    %2844 = vmatpush1.msra.mxu0 %v116
    %2845 = vmatprep.subr.mxu0 %v113
    %2846 = vmatpush1.msra.mxu0 %v112
    %2847 = vmatprep.subr.mxu0 %v109
    %2848 = vmatpush1.msra.mxu0 %v108
    %2849 = vmatprep.subr.mxu0 %v105
    %2850 = vmatpush1.msra.mxu0 %v104
    %2851 = vmatprep.subr.mxu0 %v101
    %2852 = vmatpush1.msra.mxu0 %v100
    %2853 = vmatprep.subr.mxu0 0.0
    %2854 = vmatpush2.msra.mxu0 0.0
    %2855 = vmatprep.subr.mxu0 0.0
    %2856 = vmatpush2.msra.mxu0 0.0
    %2857 = vmatprep.subr.mxu0 0.0
    %2858 = vmatpush2.msra.mxu0 0.0
    %2859 = vmatprep.subr.mxu0 0.0
    %2860 = vmatpush2.msra.mxu0 0.0
    %2861 = vmatprep.subr.mxu0 0.0
    %2862 = vmatpush2.msra.mxu0 0.0
    %2863 = vmatprep.subr.mxu0 0.0
    %2864 = vmatpush2.msra.mxu0 0.0
    %2865 = vmatprep.subr.mxu0 0.0
    %2866 = vmatpush2.msra.mxu0 0.0
    %2867 = vmatprep.subr.mxu0 0.0
    %2868 = vmatpush2.msra.mxu0 0.0
    %2869 = vmatprep.subr.mxu0 0.0
    %2870 = vmatpush2.msra.mxu0 0.0
    %2871 = vmatprep.subr.mxu0 0.0
    %2872 = vmatpush2.msra.mxu0 0.0
    %2873 = vmatprep.subr.mxu0 0.0
    %2874 = vmatpush2.msra.mxu0 0.0
    %2875 = vmatprep.subr.mxu0 0.0
    %2876 = vmatpush2.msra.mxu0 0.0
    %2877 = vmatprep.subr.mxu0 0.0
    %2878 = vmatpush2.msra.mxu0 0.0
    %2879 = vmatprep.subr.mxu0 0.0
    %2880 = vmatpush2.msra.mxu0 0.0
    %2881 = vmatprep.subr.mxu0 0.0
    %2882 = vmatpush2.msra.mxu0 0.0
    %2883 = vmatprep.subr.mxu0 0.0
    %2884 = vmatpush2.msra.mxu0 0.0
    %2885 = vmatprep.mubr.f32.mxu0 0.0
    %2886 = vmatmul.mubr.f32.gmra.mxu0 %v2716
    %v2887 = vpop.f32.mrf.mxu0
    %v2888 = vadd.f32 0.0, %v2887
    %v2889 = vpop.f32.mrf.mxu0
    %v2890 = vadd.f32 0.0, %v2889
    %2891 = vdwg.mxu0
    %v2892 = vadd.f32 %v864, %v2817
    %v2893 = vadd.f32 %v865, %v2819
    %v2894 = vadd.f32 %v866, %v2888
    %v2895 = vadd.f32 %v867, %v2890
    %2896 = vmatprep.subr.mxu0 %v223
    %2897 = vmatpush1.msra.mxu0 %v222
    %2898 = vmatprep.subr.mxu0 %v219
    %2899 = vmatpush1.msra.mxu0 %v218
    %2900 = vmatprep.subr.mxu0 %v215
    %2901 = vmatpush1.msra.mxu0 %v214
    %2902 = vmatprep.subr.mxu0 %v211
    %2903 = vmatpush1.msra.mxu0 %v210
    %2904 = vmatprep.subr.mxu0 %v207
    %2905 = vmatpush1.msra.mxu0 %v206
    %2906 = vmatprep.subr.mxu0 %v203
    %2907 = vmatpush1.msra.mxu0 %v202
    %2908 = vmatprep.subr.mxu0 %v199
    %2909 = vmatpush1.msra.mxu0 %v198
    %2910 = vmatprep.subr.mxu0 %v195
    %2911 = vmatpush1.msra.mxu0 %v194
    %2912 = vmatprep.subr.mxu0 %v191
    %2913 = vmatpush1.msra.mxu0 %v190
    %2914 = vmatprep.subr.mxu0 %v187
    %2915 = vmatpush1.msra.mxu0 %v186
    %2916 = vmatprep.subr.mxu0 %v183
    %2917 = vmatpush1.msra.mxu0 %v182
    %2918 = vmatprep.subr.mxu0 %v179
    %2919 = vmatpush1.msra.mxu0 %v178
    %2920 = vmatprep.subr.mxu0 %v175
    %2921 = vmatpush1.msra.mxu0 %v174
    %2922 = vmatprep.subr.mxu0 %v171
    %2923 = vmatpush1.msra.mxu0 %v170
    %2924 = vmatprep.subr.mxu0 %v167
    %2925 = vmatpush1.msra.mxu0 %v166
    %2926 = vmatprep.subr.mxu0 %v163
    %2927 = vmatpush1.msra.mxu0 %v162
    %2928 = vmatprep.subr.mxu0 0.0
    %2929 = vmatpush2.msra.mxu0 0.0
    %2930 = vmatprep.subr.mxu0 0.0
    %2931 = vmatpush2.msra.mxu0 0.0
    %2932 = vmatprep.subr.mxu0 0.0
    %2933 = vmatpush2.msra.mxu0 0.0
    %2934 = vmatprep.subr.mxu0 0.0
    %2935 = vmatpush2.msra.mxu0 0.0
    %2936 = vmatprep.subr.mxu0 0.0
    %2937 = vmatpush2.msra.mxu0 0.0
    %2938 = vmatprep.subr.mxu0 0.0
    %2939 = vmatpush2.msra.mxu0 0.0
    %2940 = vmatprep.subr.mxu0 0.0
    %2941 = vmatpush2.msra.mxu0 0.0
    %2942 = vmatprep.subr.mxu0 0.0
    %2943 = vmatpush2.msra.mxu0 0.0
    %2944 = vmatprep.subr.mxu0 0.0
    %2945 = vmatpush2.msra.mxu0 0.0
    %2946 = vmatprep.subr.mxu0 0.0
    %2947 = vmatpush2.msra.mxu0 0.0
    %2948 = vmatprep.subr.mxu0 0.0
    %2949 = vmatpush2.msra.mxu0 0.0
    %2950 = vmatprep.subr.mxu0 0.0
    %2951 = vmatpush2.msra.mxu0 0.0
    %2952 = vmatprep.subr.mxu0 0.0
    %2953 = vmatpush2.msra.mxu0 0.0
    %2954 = vmatprep.subr.mxu0 0.0
    %2955 = vmatpush2.msra.mxu0 0.0
    %2956 = vmatprep.subr.mxu0 0.0
    %2957 = vmatpush2.msra.mxu0 0.0
    %2958 = vmatprep.subr.mxu0 0.0
    %2959 = vmatpush2.msra.mxu0 0.0
    %2960 = vmatprep.mubr.f32.mxu0 0.0
    %2961 = vmatmul.mubr.f32.gmra.mxu0 %v2746
    %v2962 = vpop.f32.mrf.mxu0
    %v2963 = vadd.f32 0.0, %v2962
    %v2964 = vpop.f32.mrf.mxu0
    %v2965 = vadd.f32 0.0, %v2964
    %2966 = vdwg.mxu0
    %2967 = vmatprep.subr.mxu0 %v225
    %2968 = vmatpush1.msra.mxu0 %v224
    %2969 = vmatprep.subr.mxu0 %v221
    %2970 = vmatpush1.msra.mxu0 %v220
    %2971 = vmatprep.subr.mxu0 %v217
    %2972 = vmatpush1.msra.mxu0 %v216
    %2973 = vmatprep.subr.mxu0 %v213
    %2974 = vmatpush1.msra.mxu0 %v212
    %2975 = vmatprep.subr.mxu0 %v209
    %2976 = vmatpush1.msra.mxu0 %v208
    %2977 = vmatprep.subr.mxu0 %v205
    %2978 = vmatpush1.msra.mxu0 %v204
    %2979 = vmatprep.subr.mxu0 %v201
    %2980 = vmatpush1.msra.mxu0 %v200
    %2981 = vmatprep.subr.mxu0 %v197
    %2982 = vmatpush1.msra.mxu0 %v196
    %2983 = vmatprep.subr.mxu0 %v193
    %2984 = vmatpush1.msra.mxu0 %v192
    %2985 = vmatprep.subr.mxu0 %v189
    %2986 = vmatpush1.msra.mxu0 %v188
    %2987 = vmatprep.subr.mxu0 %v185
    %2988 = vmatpush1.msra.mxu0 %v184
    %2989 = vmatprep.subr.mxu0 %v181
    %2990 = vmatpush1.msra.mxu0 %v180
    %2991 = vmatprep.subr.mxu0 %v177
    %2992 = vmatpush1.msra.mxu0 %v176
    %2993 = vmatprep.subr.mxu0 %v173
    %2994 = vmatpush1.msra.mxu0 %v172
    %2995 = vmatprep.subr.mxu0 %v169
    %2996 = vmatpush1.msra.mxu0 %v168
    %2997 = vmatprep.subr.mxu0 %v165
    %2998 = vmatpush1.msra.mxu0 %v164
    %2999 = vmatprep.subr.mxu0 0.0
    %3000 = vmatpush2.msra.mxu0 0.0
    %3001 = vmatprep.subr.mxu0 0.0
    %3002 = vmatpush2.msra.mxu0 0.0
    %3003 = vmatprep.subr.mxu0 0.0
    %3004 = vmatpush2.msra.mxu0 0.0
    %3005 = vmatprep.subr.mxu0 0.0
    %3006 = vmatpush2.msra.mxu0 0.0
    %3007 = vmatprep.subr.mxu0 0.0
    %3008 = vmatpush2.msra.mxu0 0.0
    %3009 = vmatprep.subr.mxu0 0.0
    %3010 = vmatpush2.msra.mxu0 0.0
    %3011 = vmatprep.subr.mxu0 0.0
    %3012 = vmatpush2.msra.mxu0 0.0
    %3013 = vmatprep.subr.mxu0 0.0
    %3014 = vmatpush2.msra.mxu0 0.0
    %3015 = vmatprep.subr.mxu0 0.0
    %3016 = vmatpush2.msra.mxu0 0.0
    %3017 = vmatprep.subr.mxu0 0.0
    %3018 = vmatpush2.msra.mxu0 0.0
    %3019 = vmatprep.subr.mxu0 0.0
    %3020 = vmatpush2.msra.mxu0 0.0
    %3021 = vmatprep.subr.mxu0 0.0
    %3022 = vmatpush2.msra.mxu0 0.0
    %3023 = vmatprep.subr.mxu0 0.0
    %3024 = vmatpush2.msra.mxu0 0.0
    %3025 = vmatprep.subr.mxu0 0.0
    %3026 = vmatpush2.msra.mxu0 0.0
    %3027 = vmatprep.subr.mxu0 0.0
    %3028 = vmatpush2.msra.mxu0 0.0
    %3029 = vmatprep.subr.mxu0 0.0
    %3030 = vmatpush2.msra.mxu0 0.0
    %3031 = vmatprep.mubr.f32.mxu0 0.0
    %3032 = vmatmul.mubr.f32.gmra.mxu0 %v2746
    %v3033 = vpop.f32.mrf.mxu0
    %v3034 = vadd.f32 0.0, %v3033
    %v3035 = vpop.f32.mrf.mxu0
    %v3036 = vadd.f32 0.0, %v3035
    %3037 = vdwg.mxu0
    %v3038 = vadd.f32 %v859, %v2963
    %v3039 = vadd.f32 %v860, %v2965
    %v3040 = vadd.f32 %v861, %v3034
    %v3041 = vadd.f32 %v862, %v3036
    %v3042 = vxor.u32 %v2892, 2147483648
    %v3043 = vmul.f32 %v3042, 1.442695
    %v3044 = vpow.pop %v3043
    %v3045 = vadd.f32 %v3044, 1.0
    %v3046 = vrcp.pop %v3045
    %v3047 = vmul.f32 1.0, %v3046
    %v3048 = vxor.u32 %v2893, 2147483648
    %v3049 = vmul.f32 %v3048, 1.442695
    %v3050 = vpow.pop %v3049
    %v3051 = vadd.f32 %v3050, 1.0
    %v3052 = vrcp.pop %v3051
    %v3053 = vmul.f32 1.0, %v3052
    %v3054 = vtanh.pop %v2894
    %v3055 = vxor.u32 %v2895, 2147483648
    %v3056 = vmul.f32 %v3055, 1.442695
    %v3057 = vpow.pop %v3056
    %v3058 = vadd.f32 %v3057, 1.0
    %v3059 = vrcp.pop %v3058
    %v3060 = vmul.f32 1.0, %v3059
    %v3061 = vmul.f32 %v3053, %v2719
    %v3062 = vmul.f32 %v3047, %v3054
    %v3063 = vadd.f32 %v3061, %v3062
    %v3064 = vtanh.pop %v3063
    %v3065 = vmul.f32 %v3060, %v3064
    %v3066 = vmul.f32 %v1237, %v3065
    %v3067 = vmul.f32 %v1244, %v2716
    %v3068 = vadd.f32 %v3066, %v3067
    %v3069 = vxor.u32 %v3038, 2147483648
    %v3070 = vmul.f32 %v3069, 1.442695
    %v3071 = vpow.pop %v3070
    %v3072 = vadd.f32 %v3071, 1.0
    %v3073 = vrcp.pop %v3072
    %v3074 = vmul.f32 1.0, %v3073
    %v3075 = vxor.u32 %v3039, 2147483648
    %v3076 = vmul.f32 %v3075, 1.442695
    %v3077 = vpow.pop %v3076
    %v3078 = vadd.f32 %v3077, 1.0
    %v3079 = vrcp.pop %v3078
    %v3080 = vmul.f32 1.0, %v3079
    %v3081 = vtanh.pop %v3040
    %v3082 = vxor.u32 %v3041, 2147483648
    %v3083 = vmul.f32 %v3082, 1.442695
    %v3084 = vpow.pop %v3083
    %v3085 = vadd.f32 %v3084, 1.0
    %v3086 = vrcp.pop %v3085
    %v3087 = vmul.f32 1.0, %v3086
    %v3088 = vmul.f32 %v3080, %v2749
    %v3089 = vmul.f32 %v3074, %v3081
    %v3090 = vadd.f32 %v3088, %v3089
    %v3091 = vtanh.pop %v3090
    %v3092 = vmul.f32 %v3087, %v3091
    %v3093 = vmul.f32 %v1197, %v3092
    %v3094 = vmul.f32 %v1204, %v2746
    %v3095 = vadd.f32 %v3093, %v3094
    %v3096 = vld [vmem:[#allocation11] sm:$0xff]
    %v3097 = vld [vmem:[#allocation11 + $0x8] sm:$0xff]
    %v3098 = vld [vmem:[#allocation11 + $0x10] sm:$0xff]
    %v3099 = vld [vmem:[#allocation11 + $0x18] sm:$0xff]
    %v3100 = vld [vmem:[#allocation11 + $0x20] sm:$0xff]
    %v3101 = vld [vmem:[#allocation11 + $0x28] sm:$0xff]
    %v3102 = vld [vmem:[#allocation11 + $0x30] sm:$0xff]
    %v3103 = vld [vmem:[#allocation11 + $0x38] sm:$0xff]
    %v3104 = vld [vmem:[#allocation11 + $0x40] sm:$0xff]
    %v3105 = vld [vmem:[#allocation11 + $0x48] sm:$0xff]
    %v3106 = vld [vmem:[#allocation11 + $0x50] sm:$0xff]
    %v3107 = vld [vmem:[#allocation11 + $0x58] sm:$0xff]
    %v3108 = vld [vmem:[#allocation11 + $0x60] sm:$0xff]
    %v3109 = vld [vmem:[#allocation11 + $0x68] sm:$0xff]
    %v3110 = vld [vmem:[#allocation11 + $0x70] sm:$0xff]
    %v3111 = vld [vmem:[#allocation11 + $0x78] sm:$0xff]
    %v3112 = vld [vmem:[#allocation11 + $0x80] sm:$0xff]
    %v3113 = vld [vmem:[#allocation11 + $0x88] sm:$0xff]
    %v3114 = vld [vmem:[#allocation11 + $0x90] sm:$0xff]
    %v3115 = vld [vmem:[#allocation11 + $0x98] sm:$0xff]
    %v3116 = vld [vmem:[#allocation11 + $0xa0] sm:$0xff]
    %v3117 = vld [vmem:[#allocation11 + $0xa8] sm:$0xff]
    %v3118 = vld [vmem:[#allocation11 + $0xb0] sm:$0xff]
    %v3119 = vld [vmem:[#allocation11 + $0xb8] sm:$0xff]
    %v3120 = vld [vmem:[#allocation11 + $0xc0] sm:$0xff]
    %v3121 = vld [vmem:[#allocation11 + $0xc8] sm:$0xff]
    %v3122 = vld [vmem:[#allocation11 + $0xd0] sm:$0xff]
    %v3123 = vld [vmem:[#allocation11 + $0xd8] sm:$0xff]
    %v3124 = vld [vmem:[#allocation11 + $0xe0] sm:$0xff]
    %v3125 = vld [vmem:[#allocation11 + $0xe8] sm:$0xff]
    %v3126 = vld [vmem:[#allocation11 + $0xf0] sm:$0xff]
    %v3127 = vld [vmem:[#allocation11 + $0xf8] sm:$0xff]
    %3128 = vmatprep.subr.mxu0 0.0
    %3129 = vmatpush1.msra.mxu0 %v3127
    %3130 = vmatprep.subr.mxu0 0.0
    %3131 = vmatpush1.msra.mxu0 %v3126
    %3132 = vmatprep.subr.mxu0 0.0
    %3133 = vmatpush1.msra.mxu0 %v3125
    %3134 = vmatprep.subr.mxu0 0.0
    %3135 = vmatpush1.msra.mxu0 %v3124
    %3136 = vmatprep.subr.mxu0 0.0
    %3137 = vmatpush1.msra.mxu0 %v3123
    %3138 = vmatprep.subr.mxu0 0.0
    %3139 = vmatpush1.msra.mxu0 %v3122
    %3140 = vmatprep.subr.mxu0 0.0
    %3141 = vmatpush1.msra.mxu0 %v3121
    %3142 = vmatprep.subr.mxu0 0.0
    %3143 = vmatpush1.msra.mxu0 %v3120
    %3144 = vmatprep.subr.mxu0 0.0
    %3145 = vmatpush1.msra.mxu0 %v3119
    %3146 = vmatprep.subr.mxu0 0.0
    %3147 = vmatpush1.msra.mxu0 %v3118
    %3148 = vmatprep.subr.mxu0 0.0
    %3149 = vmatpush1.msra.mxu0 %v3117
    %3150 = vmatprep.subr.mxu0 0.0
    %3151 = vmatpush1.msra.mxu0 %v3116
    %3152 = vmatprep.subr.mxu0 0.0
    %3153 = vmatpush1.msra.mxu0 %v3115
    %3154 = vmatprep.subr.mxu0 0.0
    %3155 = vmatpush1.msra.mxu0 %v3114
    %3156 = vmatprep.subr.mxu0 0.0
    %3157 = vmatpush1.msra.mxu0 %v3113
    %3158 = vmatprep.subr.mxu0 0.0
    %3159 = vmatpush1.msra.mxu0 %v3112
    %3160 = vmatprep.subr.mxu0 0.0
    %3161 = vmatpush2.msra.mxu0 0.0
    %3162 = vmatprep.subr.mxu0 0.0
    %3163 = vmatpush2.msra.mxu0 0.0
    %3164 = vmatprep.subr.mxu0 0.0
    %3165 = vmatpush2.msra.mxu0 0.0
    %3166 = vmatprep.subr.mxu0 0.0
    %3167 = vmatpush2.msra.mxu0 0.0
    %3168 = vmatprep.subr.mxu0 0.0
    %3169 = vmatpush2.msra.mxu0 0.0
    %3170 = vmatprep.subr.mxu0 0.0
    %3171 = vmatpush2.msra.mxu0 0.0
    %3172 = vmatprep.subr.mxu0 0.0
    %3173 = vmatpush2.msra.mxu0 0.0
    %3174 = vmatprep.subr.mxu0 0.0
    %3175 = vmatpush2.msra.mxu0 0.0
    %3176 = vmatprep.subr.mxu0 0.0
    %3177 = vmatpush2.msra.mxu0 0.0
    %3178 = vmatprep.subr.mxu0 0.0
    %3179 = vmatpush2.msra.mxu0 0.0
    %3180 = vmatprep.subr.mxu0 0.0
    %3181 = vmatpush2.msra.mxu0 0.0
    %3182 = vmatprep.subr.mxu0 0.0
    %3183 = vmatpush2.msra.mxu0 0.0
    %3184 = vmatprep.subr.mxu0 0.0
    %3185 = vmatpush2.msra.mxu0 0.0
    %3186 = vmatprep.subr.mxu0 0.0
    %3187 = vmatpush2.msra.mxu0 0.0
    %3188 = vmatprep.subr.mxu0 0.0
    %3189 = vmatpush2.msra.mxu0 0.0
    %3190 = vmatprep.subr.mxu0 0.0
    %3191 = vmatpush2.msra.mxu0 0.0
    %3192 = vmatprep.mubr.f32.mxu0 0.0
    %3193 = vmatmul.mubr.f32.gmra.mxu0 %v3095
    %v3194 = vpop.f32.mrf.mxu0
    %v3195 = vadd.f32 0.0, %v3194
    %v3196 = vpop.f32.mrf.mxu0
    %3197 = vdwg.mxu0
    %3198 = vmatprep.subr.mxu0 0.0
    %3199 = vmatpush1.msra.mxu0 %v3111
    %3200 = vmatprep.subr.mxu0 0.0
    %3201 = vmatpush1.msra.mxu0 %v3110
    %3202 = vmatprep.subr.mxu0 0.0
    %3203 = vmatpush1.msra.mxu0 %v3109
    %3204 = vmatprep.subr.mxu0 0.0
    %3205 = vmatpush1.msra.mxu0 %v3108
    %3206 = vmatprep.subr.mxu0 0.0
    %3207 = vmatpush1.msra.mxu0 %v3107
    %3208 = vmatprep.subr.mxu0 0.0
    %3209 = vmatpush1.msra.mxu0 %v3106
    %3210 = vmatprep.subr.mxu0 0.0
    %3211 = vmatpush1.msra.mxu0 %v3105
    %3212 = vmatprep.subr.mxu0 0.0
    %3213 = vmatpush1.msra.mxu0 %v3104
    %3214 = vmatprep.subr.mxu0 0.0
    %3215 = vmatpush1.msra.mxu0 %v3103
    %3216 = vmatprep.subr.mxu0 0.0
    %3217 = vmatpush1.msra.mxu0 %v3102
    %3218 = vmatprep.subr.mxu0 0.0
    %3219 = vmatpush1.msra.mxu0 %v3101
    %3220 = vmatprep.subr.mxu0 0.0
    %3221 = vmatpush1.msra.mxu0 %v3100
    %3222 = vmatprep.subr.mxu0 0.0
    %3223 = vmatpush1.msra.mxu0 %v3099
    %3224 = vmatprep.subr.mxu0 0.0
    %3225 = vmatpush1.msra.mxu0 %v3098
    %3226 = vmatprep.subr.mxu0 0.0
    %3227 = vmatpush1.msra.mxu0 %v3097
    %3228 = vmatprep.subr.mxu0 0.0
    %3229 = vmatpush1.msra.mxu0 %v3096
    %3230 = vmatprep.subr.mxu0 0.0
    %3231 = vmatpush2.msra.mxu0 0.0
    %3232 = vmatprep.subr.mxu0 0.0
    %3233 = vmatpush2.msra.mxu0 0.0
    %3234 = vmatprep.subr.mxu0 0.0
    %3235 = vmatpush2.msra.mxu0 0.0
    %3236 = vmatprep.subr.mxu0 0.0
    %3237 = vmatpush2.msra.mxu0 0.0
    %3238 = vmatprep.subr.mxu0 0.0
    %3239 = vmatpush2.msra.mxu0 0.0
    %3240 = vmatprep.subr.mxu0 0.0
    %3241 = vmatpush2.msra.mxu0 0.0
    %3242 = vmatprep.subr.mxu0 0.0
    %3243 = vmatpush2.msra.mxu0 0.0
    %3244 = vmatprep.subr.mxu0 0.0
    %3245 = vmatpush2.msra.mxu0 0.0
    %3246 = vmatprep.subr.mxu0 0.0
    %3247 = vmatpush2.msra.mxu0 0.0
    %3248 = vmatprep.subr.mxu0 0.0
    %3249 = vmatpush2.msra.mxu0 0.0
    %3250 = vmatprep.subr.mxu0 0.0
    %3251 = vmatpush2.msra.mxu0 0.0
    %3252 = vmatprep.subr.mxu0 0.0
    %3253 = vmatpush2.msra.mxu0 0.0
    %3254 = vmatprep.subr.mxu0 0.0
    %3255 = vmatpush2.msra.mxu0 0.0
    %3256 = vmatprep.subr.mxu0 0.0
    %3257 = vmatpush2.msra.mxu0 0.0
    %3258 = vmatprep.subr.mxu0 0.0
    %3259 = vmatpush2.msra.mxu0 0.0
    %3260 = vmatprep.subr.mxu0 0.0
    %3261 = vmatpush2.msra.mxu0 0.0
    %3262 = vmatprep.mubr.f32.mxu0 0.0
    %3263 = vmatmul.mubr.f32.gmra.mxu0 %v3068
    %v3264 = vpop.f32.mrf.mxu0
    %v3265 = vadd.f32 %v3195, %v3264
    %v3266 = vpop.f32.mrf.mxu0
    %3267 = vdwg.mxu0
    %v3268 = vld [vmem:[%s7] sm:$0x1]
    %v3270 = vlaneseq
    %v3271 = vshrl.u32 %v3270, 7
    %v3272 = vsub.s32 0, %v3271
    %v3273 = vrot.slane %v3268, %v3272
    %v3275 = vadd.f32 %v3265, %v3273
    %3276 = vst [vmem:[#allocation12] sm:$0xff] %v3275
    // Predicated region
    $region54: #{tpu_custom_call.1} parent=1 // pred_check
      _
    $region55: #{tpu_custom_call.1} parent=1 // pred_check_branch
      %3278 = sbr.rel (0) target = $region57
    $region56: #{tpu_custom_call.1} parent=1 // pred_region
      %s3280 = ssub.s32 128, 128
      %3281 = vsyncadd [#allocation5], %s3280
      %s3283 = sshll.u32 [#allocation12], 4
      %s3284 = int_to_ptr.vmem [resolvable:$true] %s3283
      %3286 = dma.vmem_to_hbm [thread:$0]  %s3284, 128, %s8, [#allocation5]
    $region57: #{tpu_custom_call.1} parent=1 // pred_fallthru
      _
    // Predicated region
    $region58: #{tpu_custom_call.1} parent=1 // pred_check
      _
    $region59: #{tpu_custom_call.1} parent=1 // pred_check_branch
      %3288 = sbr.rel (0) target = $region61
    $region60: #{tpu_custom_call.1} parent=1 // pred_region
      %3289 = dma.done [#allocation5], 128
    $region61: #{tpu_custom_call.1} parent=1 // pred_fallthru
      _
    %3290 = vsyncpa [#allocation4], 1
    %3291 = vsyncpa [#allocation7], 1
    %3292 = vsyncpa [#allocation10], 1
    %3293 = vsyncpa [#allocation5], 1

</llo_original>
